<compile_context>
chip_gen: v7x
topology: tpu7x:2x2x1
jax: 0.10.0
libtpu: 0.0.40
codegen_flags: <defaults>
</compile_context>

<pallas_src>
import functools

import numpy as np
import jax
import jax.numpy as jnp
from jax.experimental import pallas as pl
from jax.experimental.pallas import tpu as pltpu


# ------------------------------ fused kernel -------------------------------

def _mesh_gcn_packed_kernel(a_ref, x_ref, w_ref, b_ref, o_ref, *, num_layers):
    # a_ref: [1, Gn, Gn]   bf16  block-diagonal normalized adjacency (G graphs)
    # x_ref: [1, Gn, Cp]   f32   node features incl. precomputed sdf column
    # w_ref: [L, Cp, Cp]   bf16  zero-padded layer weights
    # b_ref: [L, 1, Cp]    f32   zero-padded biases
    # o_ref: [1, Gn, Cp]   f32
    a = a_ref[0]                                   # [Gn, Gn] bf16
    h = x_ref[0]                                   # [Gn, Cp] f32

    # GCN layers: h = A_hat @ (h @ W_l) + b_l, ReLU on all but the last layer.
    for l in range(num_layers):
        xw = jnp.dot(h.astype(jnp.bfloat16), w_ref[l],
                     preferred_element_type=jnp.float32)          # [Gn, Cp]
        h = jnp.dot(a, xw.astype(jnp.bfloat16),
                    preferred_element_type=jnp.float32) + b_ref[l]
        if l < num_layers - 1:
            h = jnp.maximum(h, 0.0)

    o_ref[0] = h.astype(o_ref.dtype)


def mesh_gcn_forward(a_bd, x_pad, w_stack, b_stack, out_channels):
    """a_bd: [B/G, Gn, Gn] bf16, x_pad: [B/G, Gn, Cp] f32,
    w_stack: [L, Cp, Cp] bf16, b_stack: [L, 1, Cp] f32."""
    num_groups, gn, _ = a_bd.shape
    L, c_pad, _ = w_stack.shape

    flops = num_groups * L * 2 * (gn * gn * c_pad + gn * c_pad * c_pad)
    bytes_accessed = (a_bd.size * 2 + x_pad.size * 4
                      + num_groups * gn * c_pad * 4
                      + w_stack.size * 2 + b_stack.size * 4)

    out = pl.pallas_call(
        functools.partial(_mesh_gcn_packed_kernel, num_layers=L),
        out_shape=jax.ShapeDtypeStruct((num_groups, gn, c_pad), jnp.float32),
        grid=(num_groups,),
        in_specs=[
            pl.BlockSpec((1, gn, gn), lambda g: (g, 0, 0)),        # A_hat group
            pl.BlockSpec((1, gn, c_pad), lambda g: (g, 0, 0)),     # padded x
            pl.BlockSpec((L, c_pad, c_pad), lambda g: (0, 0, 0)),  # weights
            pl.BlockSpec((L, 1, c_pad), lambda g: (0, 0, 0)),      # biases
        ],
        out_specs=pl.BlockSpec((1, gn, c_pad), lambda g: (g, 0, 0)),
        compiler_params=pltpu.CompilerParams(
            dimension_semantics=("parallel",),
            vmem_limit_bytes=32 * 1024 * 1024),
        cost_estimate=pl.CostEstimate(flops=flops, transcendentals=0,
                                      bytes_accessed=bytes_accessed),
    )(a_bd, x_pad, w_stack, b_stack)

    # lane-dense kernel store; slice the real channels in plain JAX
    return out.reshape(num_groups * gn, c_pad)[:, :out_channels]


# --------------------------------- driver ----------------------------------

if __name__ == "__main__":
    key = jax.random.PRNGKey(0)

    batch_size = 8           # graphs in the batch (same mesh replicated)
    graphs_per_step = 4      # packed per grid step -> 4*64 = 256 MXU rows
    n_nodes = 64             # nodes per graph
    in_channels = 4          # data.x width; first two columns are (x, y) pos
    hidden_channels = 32
    out_channels = 3
    num_layers = 6
    c_pad = 128              # lane-dense padded channel width
    gn = graphs_per_step * n_nodes
    num_groups = batch_size // graphs_per_step
    N = batch_size * n_nodes

    k_pos, k_feat, *k_w = jax.random.split(key, 2 + num_layers)

    pos0 = jax.random.uniform(k_pos, (n_nodes, 2), dtype=jnp.float32)
    extra0 = jax.random.normal(k_feat, (n_nodes, in_channels - 2),
                               dtype=jnp.float32)
    x0 = jnp.concatenate([pos0, extra0], axis=1)          # [n, in_channels]

    # fine_marker_dict['airfoil'] -> unique surface node indices (graph-0 local)
    marker_idx = np.arange(8)

    # ---- signed_dist_graph (wrapper glue, matches the module's cached sdf):
    # min Euclidean distance to marker nodes, exactly 0 on marker nodes ----
    marker_pos = pos0[np.asarray(marker_idx)]             # [M, 2]
    d2 = jnp.sum((pos0[:, None, :] - marker_pos[None, :, :]) ** 2, axis=-1)
    sdf0 = jnp.sqrt(jnp.min(d2, axis=1))
    sdf0 = sdf0.at[np.asarray(marker_idx)].set(0.0)       # [n]

    # x = cat([data.x, sdf.repeat(batch_size, 1)], dim=1), zero-padded to 128
    x_cat0 = jnp.concatenate([x0, sdf0[:, None]], axis=1)  # [n, in_channels+1]
    x_pad = jnp.zeros((batch_size, n_nodes, c_pad), jnp.float32)
    x_pad = x_pad.at[:, :, :in_channels + 1].set(
        jnp.tile(x_cat0[None], (batch_size, 1, 1)))
    x_pad = x_pad.reshape(num_groups, gn, c_pad)           # packed groups

    # edge_index (per-graph local): ring + skip-5 connections, both directions
    src, dst = [], []
    for i in range(n_nodes):
        for j in (i + 1, i + 5):
            u, v = i, j % n_nodes
            src += [u, v]
            dst += [v, u]

    # ---- dense GCN normalization (glue): A_hat = D^-1/2 (A + I) D^-1/2 ----
    # NOTE: assignment collapses duplicate edges; this edge list has none
    # (PyG's gcn_norm scatter-adds duplicate edge weights).
    A0 = np.zeros((n_nodes, n_nodes), np.float32)
    A0[np.asarray(dst), np.asarray(src)] = 1.0
    A0 = A0 + np.eye(n_nodes, dtype=np.float32)            # self loops
    deg = A0.sum(axis=1)
    dinv = np.where(deg > 0, 1.0 / np.sqrt(deg), 0.0)
    a_hat0 = dinv[:, None] * A0 * dinv[None, :]             # [n, n]

    # batched graphs are disconnected -> per grid step the adjacency is a
    # block-diagonal [G*n, G*n] matrix (bf16 for the MXU)
    a_bd_np = np.zeros((num_groups, gn, gn), np.float32)
    for g in range(graphs_per_step):
        a_bd_np[:, g * n_nodes:(g + 1) * n_nodes,
                g * n_nodes:(g + 1) * n_nodes] = a_hat0
    a_bd = jnp.asarray(a_bd_np, dtype=jnp.bfloat16)

    # parameters zero-padded to [c_pad, c_pad]; padding stays exactly zero
    # through the network.  bf16 weights for the MXU, zero biases as in PyG.
    channels = ([in_channels + 1] + [hidden_channels] * (num_layers - 1)
                + [out_channels])
    w_np = np.zeros((num_layers, c_pad, c_pad), np.float32)
    for i in range(num_layers):
        fan_in, fan_out = channels[i], channels[i + 1]
        w = (jax.random.normal(k_w[i], (fan_in, fan_out), jnp.float32)
             / np.sqrt(float(fan_in)))
        w_np[i, :fan_in, :fan_out] = np.asarray(w)
    w_stack = jnp.asarray(w_np, dtype=jnp.bfloat16)         # [L, Cp, Cp]
    b_stack = jnp.zeros((num_layers, 1, c_pad), jnp.float32)  # [L, 1, Cp]

    out = mesh_gcn_forward(a_bd, x_pad, w_stack, b_stack,
                           out_channels=out_channels)
    out = jax.block_until_ready(out)
    assert out.shape == (N, out_channels) and out.dtype == jnp.float32

    # ---- tolerance check vs. a pure-JAX reference with identical bf16 casts ----
    h = x_pad
    for l in range(num_layers):
        xw = jnp.einsum('gnc,cd->gnd', h.astype(jnp.bfloat16), w_stack[l],
                        preferred_element_type=jnp.float32)
        h = jnp.einsum('gnm,gmd->gnd', a_bd, xw.astype(jnp.bfloat16),
                       preferred_element_type=jnp.float32) + b_stack[l]
        if l < num_layers - 1:
            h = jnp.maximum(h, 0.0)
    ref = h.reshape(N, c_pad)[:, :out_channels]
    np.testing.assert_allclose(np.asarray(out), np.asarray(ref),
                               rtol=2e-2, atol=2e-2)

    print("KERNEL_OK")
</pallas_src>

<mosaic_0001>
module attributes {stable_mosaic.version = 11 : i64} {
  func.func @_mesh_gcn_packed_kernel(%arg0: i32, %arg1: memref<1x256x256xbf16, #tpu.memory_space<vmem>>, %arg2: memref<1x256x128xf32, #tpu.memory_space<vmem>>, %arg3: memref<6x128x128xbf16, #tpu.memory_space<vmem>>, %arg4: memref<6x1x128xf32, #tpu.memory_space<vmem>>, %arg5: memref<1x256x128xf32, #tpu.memory_space<vmem>>) attributes {dimension_semantics = [#tpu.dimension_semantics<parallel>], iteration_bounds = array<i64: 2>, scalar_prefetch = 0 : i64, scratch_operands = 0 : i64, tpu.core_type = #tpu.core_type<tc>, window_params = [{transform_indices = @transform_0, window_bounds = array<i64: 1, 256, 256>}, {transform_indices = @transform_1, window_bounds = array<i64: 1, 256, 128>}, {pipeline_mode = #tpu.pipeline_mode<synchronous>, transform_indices = @transform_2, window_bounds = array<i64: 6, 128, 128>}, {pipeline_mode = #tpu.pipeline_mode<synchronous>, transform_indices = @transform_3, window_bounds = array<i64: 6, 1, 128>}, {transform_indices = @transform_4, window_bounds = array<i64: 1, 256, 128>}]} {
    %c0 = arith.constant 0 : index
    %c0_0 = arith.constant 0 : index
    %c0_1 = arith.constant 0 : index
    %0 = vector.load %arg1[%c0, %c0_0, %c0_1] : memref<1x256x256xbf16, #tpu.memory_space<vmem>>, vector<1x256x256xbf16>
    %1 = vector.shape_cast %0 : vector<1x256x256xbf16> to vector<256x256xbf16>
    %c0_2 = arith.constant 0 : index
    %c0_3 = arith.constant 0 : index
    %c0_4 = arith.constant 0 : index
    %2 = vector.load %arg2[%c0_2, %c0_3, %c0_4] : memref<1x256x128xf32, #tpu.memory_space<vmem>>, vector<1x256x128xf32>
    %3 = vector.shape_cast %2 : vector<1x256x128xf32> to vector<256x128xf32>
    %4 = arith.truncf %3 : vector<256x128xf32> to vector<256x128xbf16>
    %c0_5 = arith.constant 0 : index
    %c0_6 = arith.constant 0 : index
    %c0_7 = arith.constant 0 : index
    %5 = vector.load %arg3[%c0_5, %c0_6, %c0_7] : memref<6x128x128xbf16, #tpu.memory_space<vmem>>, vector<1x128x128xbf16>
    %6 = vector.shape_cast %5 : vector<1x128x128xbf16> to vector<128x128xbf16>
    %cst = arith.constant dense<0.000000e+00> : vector<256x128xf32>
    %7 = tpu.matmul %4, %6, %cst {dimension_numbers = #tpu.dot_dimension_numbers<[1], [0], [0], [1], [0, 0, 1, 1], [], []>} : vector<256x128xbf16>, vector<128x128xbf16>, vector<256x128xf32> -> vector<256x128xf32>
    %8 = arith.truncf %7 : vector<256x128xf32> to vector<256x128xbf16>
    %cst_8 = arith.constant dense<0.000000e+00> : vector<256x128xf32>
    %9 = tpu.matmul %1, %8, %cst_8 {dimension_numbers = #tpu.dot_dimension_numbers<[1], [0], [0], [1], [0, 0, 1, 1], [], []>} : vector<256x256xbf16>, vector<256x128xbf16>, vector<256x128xf32> -> vector<256x128xf32>
    %c0_9 = arith.constant 0 : index
    %c0_10 = arith.constant 0 : index
    %c0_11 = arith.constant 0 : index
    %10 = vector.load %arg4[%c0_9, %c0_10, %c0_11] : memref<6x1x128xf32, #tpu.memory_space<vmem>>, vector<1x1x128xf32>
    %11 = vector.shape_cast %10 : vector<1x1x128xf32> to vector<1x128xf32>
    %12 = vector.broadcast %11 : vector<1x128xf32> to vector<256x128xf32>
    %13 = arith.addf %9, %12 : vector<256x128xf32>
    %cst_12 = arith.constant 0.000000e+00 : f32
    %14 = vector.broadcast %cst_12 : f32 to vector<256x128xf32>
    %15 = arith.maximumf %13, %14 : vector<256x128xf32>
    %16 = arith.truncf %15 : vector<256x128xf32> to vector<256x128xbf16>
    %c1 = arith.constant 1 : index
    %c0_13 = arith.constant 0 : index
    %c0_14 = arith.constant 0 : index
    %17 = vector.load %arg3[%c1, %c0_13, %c0_14] : memref<6x128x128xbf16, #tpu.memory_space<vmem>>, vector<1x128x128xbf16>
    %18 = vector.shape_cast %17 : vector<1x128x128xbf16> to vector<128x128xbf16>
    %cst_15 = arith.constant dense<0.000000e+00> : vector<256x128xf32>
    %19 = tpu.matmul %16, %18, %cst_15 {dimension_numbers = #tpu.dot_dimension_numbers<[1], [0], [0], [1], [0, 0, 1, 1], [], []>} : vector<256x128xbf16>, vector<128x128xbf16>, vector<256x128xf32> -> vector<256x128xf32>
    %20 = arith.truncf %19 : vector<256x128xf32> to vector<256x128xbf16>
    %cst_16 = arith.constant dense<0.000000e+00> : vector<256x128xf32>
    %21 = tpu.matmul %1, %20, %cst_16 {dimension_numbers = #tpu.dot_dimension_numbers<[1], [0], [0], [1], [0, 0, 1, 1], [], []>} : vector<256x256xbf16>, vector<256x128xbf16>, vector<256x128xf32> -> vector<256x128xf32>
    %c1_17 = arith.constant 1 : index
    %c0_18 = arith.constant 0 : index
    %c0_19 = arith.constant 0 : index
    %22 = vector.load %arg4[%c1_17, %c0_18, %c0_19] : memref<6x1x128xf32, #tpu.memory_space<vmem>>, vector<1x1x128xf32>
    %23 = vector.shape_cast %22 : vector<1x1x128xf32> to vector<1x128xf32>
    %24 = vector.broadcast %23 : vector<1x128xf32> to vector<256x128xf32>
    %25 = arith.addf %21, %24 : vector<256x128xf32>
    %cst_20 = arith.constant 0.000000e+00 : f32
    %26 = vector.broadcast %cst_20 : f32 to vector<256x128xf32>
    %27 = arith.maximumf %25, %26 : vector<256x128xf32>
    %28 = arith.truncf %27 : vector<256x128xf32> to vector<256x128xbf16>
    %c2 = arith.constant 2 : index
    %c0_21 = arith.constant 0 : index
    %c0_22 = arith.constant 0 : index
    %29 = vector.load %arg3[%c2, %c0_21, %c0_22] : memref<6x128x128xbf16, #tpu.memory_space<vmem>>, vector<1x128x128xbf16>
    %30 = vector.shape_cast %29 : vector<1x128x128xbf16> to vector<128x128xbf16>
    %cst_23 = arith.constant dense<0.000000e+00> : vector<256x128xf32>
    %31 = tpu.matmul %28, %30, %cst_23 {dimension_numbers = #tpu.dot_dimension_numbers<[1], [0], [0], [1], [0, 0, 1, 1], [], []>} : vector<256x128xbf16>, vector<128x128xbf16>, vector<256x128xf32> -> vector<256x128xf32>
    %32 = arith.truncf %31 : vector<256x128xf32> to vector<256x128xbf16>
    %cst_24 = arith.constant dense<0.000000e+00> : vector<256x128xf32>
    %33 = tpu.matmul %1, %32, %cst_24 {dimension_numbers = #tpu.dot_dimension_numbers<[1], [0], [0], [1], [0, 0, 1, 1], [], []>} : vector<256x256xbf16>, vector<256x128xbf16>, vector<256x128xf32> -> vector<256x128xf32>
    %c2_25 = arith.constant 2 : index
    %c0_26 = arith.constant 0 : index
    %c0_27 = arith.constant 0 : index
    %34 = vector.load %arg4[%c2_25, %c0_26, %c0_27] : memref<6x1x128xf32, #tpu.memory_space<vmem>>, vector<1x1x128xf32>
    %35 = vector.shape_cast %34 : vector<1x1x128xf32> to vector<1x128xf32>
    %36 = vector.broadcast %35 : vector<1x128xf32> to vector<256x128xf32>
    %37 = arith.addf %33, %36 : vector<256x128xf32>
    %cst_28 = arith.constant 0.000000e+00 : f32
    %38 = vector.broadcast %cst_28 : f32 to vector<256x128xf32>
    %39 = arith.maximumf %37, %38 : vector<256x128xf32>
    %40 = arith.truncf %39 : vector<256x128xf32> to vector<256x128xbf16>
    %c3 = arith.constant 3 : index
    %c0_29 = arith.constant 0 : index
    %c0_30 = arith.constant 0 : index
    %41 = vector.load %arg3[%c3, %c0_29, %c0_30] : memref<6x128x128xbf16, #tpu.memory_space<vmem>>, vector<1x128x128xbf16>
    %42 = vector.shape_cast %41 : vector<1x128x128xbf16> to vector<128x128xbf16>
    %cst_31 = arith.constant dense<0.000000e+00> : vector<256x128xf32>
    %43 = tpu.matmul %40, %42, %cst_31 {dimension_numbers = #tpu.dot_dimension_numbers<[1], [0], [0], [1], [0, 0, 1, 1], [], []>} : vector<256x128xbf16>, vector<128x128xbf16>, vector<256x128xf32> -> vector<256x128xf32>
    %44 = arith.truncf %43 : vector<256x128xf32> to vector<256x128xbf16>
    %cst_32 = arith.constant dense<0.000000e+00> : vector<256x128xf32>
    %45 = tpu.matmul %1, %44, %cst_32 {dimension_numbers = #tpu.dot_dimension_numbers<[1], [0], [0], [1], [0, 0, 1, 1], [], []>} : vector<256x256xbf16>, vector<256x128xbf16>, vector<256x128xf32> -> vector<256x128xf32>
    %c3_33 = arith.constant 3 : index
    %c0_34 = arith.constant 0 : index
    %c0_35 = arith.constant 0 : index
    %46 = vector.load %arg4[%c3_33, %c0_34, %c0_35] : memref<6x1x128xf32, #tpu.memory_space<vmem>>, vector<1x1x128xf32>
    %47 = vector.shape_cast %46 : vector<1x1x128xf32> to vector<1x128xf32>
    %48 = vector.broadcast %47 : vector<1x128xf32> to vector<256x128xf32>
    %49 = arith.addf %45, %48 : vector<256x128xf32>
    %cst_36 = arith.constant 0.000000e+00 : f32
    %50 = vector.broadcast %cst_36 : f32 to vector<256x128xf32>
    %51 = arith.maximumf %49, %50 : vector<256x128xf32>
    %52 = arith.truncf %51 : vector<256x128xf32> to vector<256x128xbf16>
    %c4 = arith.constant 4 : index
    %c0_37 = arith.constant 0 : index
    %c0_38 = arith.constant 0 : index
    %53 = vector.load %arg3[%c4, %c0_37, %c0_38] : memref<6x128x128xbf16, #tpu.memory_space<vmem>>, vector<1x128x128xbf16>
    %54 = vector.shape_cast %53 : vector<1x128x128xbf16> to vector<128x128xbf16>
    %cst_39 = arith.constant dense<0.000000e+00> : vector<256x128xf32>
    %55 = tpu.matmul %52, %54, %cst_39 {dimension_numbers = #tpu.dot_dimension_numbers<[1], [0], [0], [1], [0, 0, 1, 1], [], []>} : vector<256x128xbf16>, vector<128x128xbf16>, vector<256x128xf32> -> vector<256x128xf32>
    %56 = arith.truncf %55 : vector<256x128xf32> to vector<256x128xbf16>
    %cst_40 = arith.constant dense<0.000000e+00> : vector<256x128xf32>
    %57 = tpu.matmul %1, %56, %cst_40 {dimension_numbers = #tpu.dot_dimension_numbers<[1], [0], [0], [1], [0, 0, 1, 1], [], []>} : vector<256x256xbf16>, vector<256x128xbf16>, vector<256x128xf32> -> vector<256x128xf32>
    %c4_41 = arith.constant 4 : index
    %c0_42 = arith.constant 0 : index
    %c0_43 = arith.constant 0 : index
    %58 = vector.load %arg4[%c4_41, %c0_42, %c0_43] : memref<6x1x128xf32, #tpu.memory_space<vmem>>, vector<1x1x128xf32>
    %59 = vector.shape_cast %58 : vector<1x1x128xf32> to vector<1x128xf32>
    %60 = vector.broadcast %59 : vector<1x128xf32> to vector<256x128xf32>
    %61 = arith.addf %57, %60 : vector<256x128xf32>
    %cst_44 = arith.constant 0.000000e+00 : f32
    %62 = vector.broadcast %cst_44 : f32 to vector<256x128xf32>
    %63 = arith.maximumf %61, %62 : vector<256x128xf32>
    %64 = arith.truncf %63 : vector<256x128xf32> to vector<256x128xbf16>
    %c5 = arith.constant 5 : index
    %c0_45 = arith.constant 0 : index
    %c0_46 = arith.constant 0 : index
    %65 = vector.load %arg3[%c5, %c0_45, %c0_46] : memref<6x128x128xbf16, #tpu.memory_space<vmem>>, vector<1x128x128xbf16>
    %66 = vector.shape_cast %65 : vector<1x128x128xbf16> to vector<128x128xbf16>
    %cst_47 = arith.constant dense<0.000000e+00> : vector<256x128xf32>
    %67 = tpu.matmul %64, %66, %cst_47 {dimension_numbers = #tpu.dot_dimension_numbers<[1], [0], [0], [1], [0, 0, 1, 1], [], []>} : vector<256x128xbf16>, vector<128x128xbf16>, vector<256x128xf32> -> vector<256x128xf32>
    %68 = arith.truncf %67 : vector<256x128xf32> to vector<256x128xbf16>
    %cst_48 = arith.constant dense<0.000000e+00> : vector<256x128xf32>
    %69 = tpu.matmul %1, %68, %cst_48 {dimension_numbers = #tpu.dot_dimension_numbers<[1], [0], [0], [1], [0, 0, 1, 1], [], []>} : vector<256x256xbf16>, vector<256x128xbf16>, vector<256x128xf32> -> vector<256x128xf32>
    %c5_49 = arith.constant 5 : index
    %c0_50 = arith.constant 0 : index
    %c0_51 = arith.constant 0 : index
    %70 = vector.load %arg4[%c5_49, %c0_50, %c0_51] : memref<6x1x128xf32, #tpu.memory_space<vmem>>, vector<1x1x128xf32>
    %71 = vector.shape_cast %70 : vector<1x1x128xf32> to vector<1x128xf32>
    %72 = vector.broadcast %71 : vector<1x128xf32> to vector<256x128xf32>
    %73 = arith.addf %69, %72 : vector<256x128xf32>
    %c0_52 = arith.constant 0 : index
    %c0_53 = arith.constant 0 : index
    %c0_54 = arith.constant 0 : index
    %74 = vector.load %arg5[%c0_52, %c0_53, %c0_54] : memref<1x256x128xf32, #tpu.memory_space<vmem>>, vector<1x256x128xf32>
    %75 = vector.shape_cast %74 : vector<1x256x128xf32> to vector<256x128xf32>
    %76 = vector.shape_cast %73 : vector<256x128xf32> to vector<1x256x128xf32>
    tpu.vector_store %arg5[%c0_52, %c0_53, %c0_54], %76 {strides = array<i32>} : memref<1x256x128xf32, #tpu.memory_space<vmem>>, vector<1x256x128xf32>,
    return
  }
  func.func @transform_0(%arg0: i32) -> (i32, i32, i32) {
    %c0_i32 = arith.constant 0 : i32
    %c0_i32_0 = arith.constant 0 : i32
    %c0_i32_1 = arith.constant 0 : i32
    return %arg0, %c0_i32, %c0_i32_0 : i32, i32, i32
  }
  func.func @transform_1(%arg0: i32) -> (i32, i32, i32) {
    %c0_i32 = arith.constant 0 : i32
    %c0_i32_0 = arith.constant 0 : i32
    %c0_i32_1 = arith.constant 0 : i32
    return %arg0, %c0_i32, %c0_i32_0 : i32, i32, i32
  }
  func.func @transform_2(%arg0: i32) -> (i32, i32, i32) {
    %c0_i32 = arith.constant 0 : i32
    %c0_i32_0 = arith.constant 0 : i32
    %c0_i32_1 = arith.constant 0 : i32
    %c0_i32_2 = arith.constant 0 : i32
    return %c0_i32, %c0_i32_0, %c0_i32_1 : i32, i32, i32
  }
  func.func @transform_3(%arg0: i32) -> (i32, i32, i32) {
    %c0_i32 = arith.constant 0 : i32
    %c0_i32_0 = arith.constant 0 : i32
    %c0_i32_1 = arith.constant 0 : i32
    %c0_i32_2 = arith.constant 0 : i32
    return %c0_i32, %c0_i32_0, %c0_i32_1 : i32, i32, i32
  }
  func.func @transform_4(%arg0: i32) -> (i32, i32, i32) {
    %c0_i32 = arith.constant 0 : i32
    %c0_i32_0 = arith.constant 0 : i32
    %c0_i32_1 = arith.constant 0 : i32
    return %arg0, %c0_i32, %c0_i32_0 : i32, i32, i32
  }
}

</mosaic_0001>

<llo_original>
// kernel: tpu_custom_call.1
$region0: #{tpu_custom_call.1}
  #allocation0 [shape = 'u32[]', space=smem, size = 0x4, offset = 0x4, fixed_abs, tag = 'smem constant byte address 0x4 - core index']
  #allocation1 [shape = 'u32[144,128]{1,0:T(1,128)}', space=vmem, size = 0x12000, scoped, tag = 'internal scratch']
  %s0 = inlined_call_operand.hbm [shape: bf16[2,256,256], index: 0, kind: input, shape index: {}]
  %s1 = inlined_call_operand.hbm [shape: f32[2,256,128], index: 1, kind: input, shape index: {}]
  %s2 = inlined_call_operand.hbm [shape: bf16[6,128,128], index: 2, kind: input, shape index: {}]
  %s3 = inlined_call_operand.vmem [shape: f32[6,1,128], index: 3, kind: input, shape index: {}]
  %s4 = inlined_call_operand.hbm [shape: f32[2,256,128], index: 4, kind: output, shape index: {}]
  %s5 = sld [smem:[#allocation0]]
  $region61: #{tpu_custom_call.1} parent=0
    _
  %s7 = ssub.s32 1, %s5
  %s8 = scalar_select 0, %s7, %s5
  $region1: #{tpu_custom_call.1} parent=0
    #allocation2 [shape = 'u8[262144]{0}', space=vmem, size = 0x40000, scoped, tag = 'input window, operand 0']
    #allocation3 [shape = 's32[2]{0}', space=sflag, size = 0x8, scoped, tag = 'scoped memory for tpu_custom_call.1']
    #allocation4 [shape = 's32[2]{0}', space=sflag, size = 0x8, scoped, tag = 'scoped memory for tpu_custom_call.1']
    #allocation5 [shape = 'u8[262144]{0}', space=vmem, size = 0x40000, scoped, tag = 'input window, operand 1']
    #allocation6 [shape = 's32[2]{0}', space=sflag, size = 0x8, scoped, tag = 'scoped memory for tpu_custom_call.1']
    #allocation7 [shape = 'u8[196608]{0}', space=vmem, size = 0x30000, scoped, tag = 'input window, operand 2, single buffered']
    #allocation8 [shape = 'u8[262144]{0}', space=vmem, size = 0x40000, scoped, tag = 'output window, operand 0']
    %9 = vsyncpa [#allocation3], 0
    %s10 = scalar_lea.sflag [#allocation3], 1
    %11 = vsyncpa %s10, 0
    %12 = vsyncpa [#allocation6], 0
    %s13 = scalar_lea.sflag [#allocation6], 1
    %14 = vsyncpa %s13, 0
    %15 = vsyncpa [#allocation4], 0
    %s16 = scalar_lea.sflag [#allocation4], 1
    %17 = vsyncpa %s16, 0
    loop: start=0, step=1, limit=4
    $region2: #{tpu_custom_call.1} parent=1 // loop_pre_header
      _
    $region3: #{tpu_custom_call.1} parent=1 // loop_header
      %s19 = sphi 0, %s23
      %p20 = scmp.ge.s32.totalorder %s19, 4
      %s29 = sphi 0, %s31
      %s32 = sphi 0, %s29
      %s33 = sphi 0, %s32
      %s49 = sphi 0, %s33
      %s55 = sphi 0, %s57
      %s58 = sphi 0, %s55
      %s59 = sphi 0, %s58
      %s75 = sphi 0, %s59
      %s79 = sphi 0, %s79
      %s81 = sphi 0, %s79
      %s82 = sphi 0, %s81
      %s96 = sphi 0, %s82
      %s100 = sphi 0, %s100
      %s102 = sphi 0, %s100
      %s103 = sphi 0, %s102
      %s117 = sphi 0, %s103
      %s123 = sphi 0, %s125
      %s126 = sphi 0, %s123
      %s127 = sphi 0, %s126
      %s143 = sphi 0, %s127
    $region4: #{tpu_custom_call.1} parent=1 // loop_header_branch
      %22 = sbr.rel (%p20) target = $region8
    $region5: #{tpu_custom_call.1} parent=1 // loop_body
      %s24 = ssub.s32 %s19, 1
      %s25 = ssub.s32 %s19, 2
      %s26 = sadd.s32 %s19, 1
      %s27 = ssub.s32 %s19, %s26
      %p28 = scmp.eq.s32.totalorder %s27, 0
      %s30 = sadd.s32 %s29, 1
      %s31 = scalar_select %p28, %s29, %s30
      %p34 = pneg %p28
      %p35 = scmp.eq.s32.totalorder %s19, 1
      %p36 = por %p34, %p35
      %p37 = scmp.ne.s32.totalorder %s29, %s32
      %p38 = scmp.eq.s32.totalorder %s19, 0
      %p39 = por %p37, %p38
      %p40 = scmp.ne.s32.totalorder %s29, %s32
      %p41 = scmp.eq.s32.totalorder %s24, 1
      %p42 = por %p40, %p41
      %p43 = scmp.ne.s32.totalorder %s32, %s33
      %p44 = scmp.eq.s32.totalorder %s24, 0
      %p45 = por %p43, %p44
      %p46 = scmp.ne.s32.totalorder %s32, %s33
      %p47 = scmp.eq.s32.totalorder %s25, 1
      %p48 = por %p46, %p47
      %p50 = scmp.ne.s32.totalorder %s33, %s49
      %p51 = scmp.eq.s32.totalorder %s25, 0
      %p52 = por %p50, %p51
      %s53 = ssub.s32 %s19, %s26
      %p54 = scmp.eq.s32.totalorder %s53, 0
      %s56 = sadd.s32 %s55, 1
      %s57 = scalar_select %p54, %s55, %s56
      %p60 = pneg %p54
      %p61 = scmp.eq.s32.totalorder %s19, 1
      %p62 = por %p60, %p61
      %p63 = scmp.ne.s32.totalorder %s55, %s58
      %p64 = scmp.eq.s32.totalorder %s19, 0
      %p65 = por %p63, %p64
      %p66 = scmp.ne.s32.totalorder %s55, %s58
      %p67 = scmp.eq.s32.totalorder %s24, 1
      %p68 = por %p66, %p67
      %p69 = scmp.ne.s32.totalorder %s58, %s59
      %p70 = scmp.eq.s32.totalorder %s24, 0
      %p71 = por %p69, %p70
      %p72 = scmp.ne.s32.totalorder %s58, %s59
      %p73 = scmp.eq.s32.totalorder %s25, 1
      %p74 = por %p72, %p73
      %p76 = scmp.ne.s32.totalorder %s59, %s75
      %p77 = scmp.eq.s32.totalorder %s25, 0
      %p78 = por %p76, %p77
      %s80 = sadd.s32 %s79, 1
      %p83 = scmp.eq.s32.totalorder %s19, 1
      %p84 = scmp.ne.s32.totalorder %s79, %s81
      %p85 = scmp.eq.s32.totalorder %s19, 0
      %p86 = por %p84, %p85
      %p87 = scmp.ne.s32.totalorder %s79, %s81
      %p88 = scmp.eq.s32.totalorder %s24, 1
      %p89 = por %p87, %p88
      %p90 = scmp.ne.s32.totalorder %s81, %s82
      %p91 = scmp.eq.s32.totalorder %s24, 0
      %p92 = por %p90, %p91
      %p93 = scmp.ne.s32.totalorder %s81, %s82
      %p94 = scmp.eq.s32.totalorder %s25, 1
      %p95 = por %p93, %p94
      %p97 = scmp.ne.s32.totalorder %s82, %s96
      %p98 = scmp.eq.s32.totalorder %s25, 0
      %p99 = por %p97, %p98
      %s101 = sadd.s32 %s100, 1
      %p104 = scmp.eq.s32.totalorder %s19, 1
      %p105 = scmp.ne.s32.totalorder %s100, %s102
      %p106 = scmp.eq.s32.totalorder %s19, 0
      %p107 = por %p105, %p106
      %p108 = scmp.ne.s32.totalorder %s100, %s102
      %p109 = scmp.eq.s32.totalorder %s24, 1
      %p110 = por %p108, %p109
      %p111 = scmp.ne.s32.totalorder %s102, %s103
      %p112 = scmp.eq.s32.totalorder %s24, 0
      %p113 = por %p111, %p112
      %p114 = scmp.ne.s32.totalorder %s102, %s103
      %p115 = scmp.eq.s32.totalorder %s25, 1
      %p116 = por %p114, %p115
      %p118 = scmp.ne.s32.totalorder %s103, %s117
      %p119 = scmp.eq.s32.totalorder %s25, 0
      %p120 = por %p118, %p119
      %s121 = ssub.s32 %s19, %s26
      %p122 = scmp.eq.s32.totalorder %s121, 0
      %s124 = sadd.s32 %s123, 1
      %s125 = scalar_select %p122, %s123, %s124
      %p128 = pneg %p122
      %p129 = scmp.eq.s32.totalorder %s19, 1
      %p130 = por %p128, %p129
      %p131 = scmp.ne.s32.totalorder %s123, %s126
      %p132 = scmp.eq.s32.totalorder %s19, 0
      %p133 = por %p131, %p132
      %p134 = scmp.ne.s32.totalorder %s123, %s126
      %p135 = scmp.eq.s32.totalorder %s24, 1
      %p136 = por %p134, %p135
      %p137 = scmp.ne.s32.totalorder %s126, %s127
      %p138 = scmp.eq.s32.totalorder %s24, 0
      %p139 = por %p137, %p138
      %p140 = scmp.ne.s32.totalorder %s126, %s127
      %p141 = scmp.eq.s32.totalorder %s25, 1
      %p142 = por %p140, %p141
      %p144 = scmp.ne.s32.totalorder %s127, %s143
      %p145 = scmp.eq.s32.totalorder %s25, 0
      %p146 = por %p144, %p145
      %p147 = scmp.le.s32.totalorder 1, %s19
      %p148 = scmp.lt.s32.totalorder %s19, 3
      %p149 = pnand %p147, %p148
      %p150 = pneg %p149
      // Predicated region
      $region9: #{tpu_custom_call.1} parent=5 // pred_check
        _
      $region10: #{tpu_custom_call.1} parent=5 // pred_check_branch
        %152 = sbr.rel (%p149) target = $region12
      $region11: #{tpu_custom_call.1} parent=5 // pred_region
        %s153 = ssub.s32 %s19, 1
        // Predicated region
        $region13: #{tpu_custom_call.1} parent=11 // pred_check
          %p154 = pneg %p92
        $region14: #{tpu_custom_call.1} parent=11 // pred_check_branch
          %156 = sbr.rel (%p154) target = $region16
        $region15: #{tpu_custom_call.1} parent=11 // pred_region
          %s158 = ssub.s32 6144, 6144
          %159 = vsyncadd [#allocation6], %s158
          %s160 = sshll.u32 [#allocation7], 4
          %s161 = int_to_ptr.vmem [resolvable:$true] %s160
          %166 = dma.hbm_to_vmem [thread:$0]  %s2, 6144, %s161, [#allocation6], 64, 64, 4
        $region16: #{tpu_custom_call.1} parent=11 // pred_fallthru
          _
        // Predicated region
        $region17: #{tpu_custom_call.1} parent=11 // pred_check
          %p167 = pneg %p113
        $region18: #{tpu_custom_call.1} parent=11 // pred_check_branch
          %169 = sbr.rel (%p167) target = $region20
        $region19: #{tpu_custom_call.1} parent=11 // pred_region
          _
        $region20: #{tpu_custom_call.1} parent=11 // pred_fallthru
          _
      $region12: #{tpu_custom_call.1} parent=5 // pred_fallthru
        _
      %p170 = scmp.lt.s32.totalorder %s19, 2
      // Predicated region
      $region21: #{tpu_custom_call.1} parent=5 // pred_check
        %p171 = pneg %p170
      $region22: #{tpu_custom_call.1} parent=5 // pred_check_branch
        %173 = sbr.rel (%p171) target = $region24
      $region23: #{tpu_custom_call.1} parent=5 // pred_region
        // Predicated region
        $region25: #{tpu_custom_call.1} parent=23 // pred_check
          %p174 = pneg %p39
        $region26: #{tpu_custom_call.1} parent=23 // pred_check_branch
          %176 = sbr.rel (%p174) target = $region28
        $region27: #{tpu_custom_call.1} parent=23 // pred_region
          %s177 = sand.u32 %s29, 1
          %s178 = scalar_lea.sflag [#allocation3], %s177
          %s179 = sand.u32 %s29, 1
          %s180 = smul.addr %s179, 256
          %s181 = scalar_lea.vmem [#allocation2], %s180
          %s183 = ssub.s32 4096, 4096
          %184 = vsyncadd %s178, %s183
          %s185 = smul.addr %s19, 64
          %s186 = smul.addr %s185, 64
          %s187 = scalar_lea.hbm %s0, %s186
          %s188 = sshll.u32 %s181, 4
          %s189 = int_to_ptr.vmem [resolvable:$true] %s188
          %194 = dma.hbm_to_vmem [thread:$0]  %s187, 4096, %s189, %s178, 128, 128, 8
        $region28: #{tpu_custom_call.1} parent=23 // pred_fallthru
          _
        // Predicated region
        $region29: #{tpu_custom_call.1} parent=23 // pred_check
          %p195 = pneg %p65
        $region30: #{tpu_custom_call.1} parent=23 // pred_check_branch
          %197 = sbr.rel (%p195) target = $region32
        $region31: #{tpu_custom_call.1} parent=23 // pred_region
          %s198 = sand.u32 %s19, 1
          %s199 = scalar_lea.sflag [#allocation6], %s198
          %s200 = sand.u32 %s55, 1
          %s201 = smul.addr %s200, 256
          %s202 = scalar_lea.vmem [#allocation5], %s201
          %s204 = ssub.s32 4096, 4096
          %205 = vsyncadd %s199, %s204
          %s206 = smul.addr %s19, 32
          %s207 = smul.addr %s206, 128
          %s208 = scalar_lea.hbm %s1, %s207
          %s209 = sshll.u32 %s202, 4
          %s210 = int_to_ptr.vmem [resolvable:$true] %s209
          %215 = dma.hbm_to_vmem [thread:$0]  %s208, 4096, %s210, %s199, 128, 128, 8
        $region32: #{tpu_custom_call.1} parent=23 // pred_fallthru
          _
      $region24: #{tpu_custom_call.1} parent=5 // pred_fallthru
        _
      %p216 = scmp.le.s32.totalorder 1, %s19
      %p217 = scmp.lt.s32.totalorder %s19, 3
      %p218 = pnand %p216, %p217
      %p219 = pneg %p218
      // Predicated region
      $region33: #{tpu_custom_call.1} parent=5 // pred_check
        _
      $region34: #{tpu_custom_call.1} parent=5 // pred_check_branch
        %221 = sbr.rel (%p218) target = $region36
      $region35: #{tpu_custom_call.1} parent=5 // pred_region
        %s222 = ssub.s32 %s19, 1
        %s223 = sand.u32 %s32, 1
        %s224 = scalar_lea.sflag [#allocation3], %s223
        %s225 = sand.u32 %s32, 1
        %s226 = smul.addr %s225, 256
        %s227 = scalar_lea.vmem [#allocation2], %s226
        // Predicated region
        $region37: #{tpu_custom_call.1} parent=35 // pred_check
          %p228 = pneg %p45
        $region38: #{tpu_custom_call.1} parent=35 // pred_check_branch
          %230 = sbr.rel (%p228) target = $region40
        $region39: #{tpu_custom_call.1} parent=35 // pred_region
          %231 = dma.done %s224, 4096
        $region40: #{tpu_custom_call.1} parent=35 // pred_fallthru
          _
        %s232 = sand.u32 %s24, 1
        %s233 = scalar_lea.sflag [#allocation6], %s232
        %s234 = sand.u32 %s58, 1
        %s235 = smul.addr %s234, 256
        %s236 = scalar_lea.vmem [#allocation5], %s235
        // Predicated region
        $region41: #{tpu_custom_call.1} parent=35 // pred_check
          %p237 = pneg %p71
        $region42: #{tpu_custom_call.1} parent=35 // pred_check_branch
          %239 = sbr.rel (%p237) target = $region44
        $region43: #{tpu_custom_call.1} parent=35 // pred_region
          %240 = dma.done %s233, 4096
        $region44: #{tpu_custom_call.1} parent=35 // pred_fallthru
          _
        // Predicated region
        $region45: #{tpu_custom_call.1} parent=35 // pred_check
          %p241 = pneg %p92
        $region46: #{tpu_custom_call.1} parent=35 // pred_check_branch
          %243 = sbr.rel (%p241) target = $region48
        $region47: #{tpu_custom_call.1} parent=35 // pred_region
          %244 = dma.done [#allocation6], 6144
        $region48: #{tpu_custom_call.1} parent=35 // pred_fallthru
          _
        %s245 = sand.u32 %s32, 1
        %s246 = scalar_lea.sflag [#allocation3], %s245
        %s247 = sand.u32 %s32, 1
        %s248 = smul.addr %s247, 256
        %s249 = scalar_lea.vmem [#allocation2], %s248
        %p250 = pneg %p45
        %p251 = pneg %p42
        %s252 = sand.u32 %s24, 1
        %s253 = scalar_lea.sflag [#allocation6], %s252
        %s254 = sand.u32 %s58, 1
        %s255 = smul.addr %s254, 256
        %s256 = scalar_lea.vmem [#allocation5], %s255
        %p257 = pneg %p71
        %p258 = pneg %p68
        %p259 = pneg %p92
        %p260 = pneg %p89
        %p261 = pneg %p113
        %p262 = pneg %p110
        %p263 = pneg %p139
        %p264 = pneg %p136
        %s265 = sand.u32 %s126, 1
        %s266 = scalar_lea.sflag [#allocation4], %s265
        %s267 = sand.u32 %s126, 1
        %s268 = smul.addr %s267, 256
        %s269 = scalar_lea.vmem [#allocation8], %s268
        %v271 = vld [vmem:[%s227] sm:$0xff]
        %v272 = vld [vmem:[%s227 + $0x8] sm:$0xff]
        %v273 = vld [vmem:[%s227 + $0x10] sm:$0xff]
        %v274 = vld [vmem:[%s227 + $0x18] sm:$0xff]
        %v275 = vld [vmem:[%s227 + $0x20] sm:$0xff]
        %v276 = vld [vmem:[%s227 + $0x28] sm:$0xff]
        %v277 = vld [vmem:[%s227 + $0x30] sm:$0xff]
        %v278 = vld [vmem:[%s227 + $0x38] sm:$0xff]
        %v279 = vld [vmem:[%s227 + $0x40] sm:$0xff]
        %v280 = vld [vmem:[%s227 + $0x48] sm:$0xff]
        %v281 = vld [vmem:[%s227 + $0x50] sm:$0xff]
        %v282 = vld [vmem:[%s227 + $0x58] sm:$0xff]
        %v283 = vld [vmem:[%s227 + $0x60] sm:$0xff]
        %v284 = vld [vmem:[%s227 + $0x68] sm:$0xff]
        %v285 = vld [vmem:[%s227 + $0x70] sm:$0xff]
        %v286 = vld [vmem:[%s227 + $0x78] sm:$0xff]
        %v287 = vld [vmem:[%s227 + $0x80] sm:$0xff]
        %v288 = vld [vmem:[%s227 + $0x88] sm:$0xff]
        %v289 = vld [vmem:[%s227 + $0x90] sm:$0xff]
        %v290 = vld [vmem:[%s227 + $0x98] sm:$0xff]
        %v291 = vld [vmem:[%s227 + $0xa0] sm:$0xff]
        %v292 = vld [vmem:[%s227 + $0xa8] sm:$0xff]
        %v293 = vld [vmem:[%s227 + $0xb0] sm:$0xff]
        %v294 = vld [vmem:[%s227 + $0xb8] sm:$0xff]
        %v295 = vld [vmem:[%s227 + $0xc0] sm:$0xff]
        %v296 = vld [vmem:[%s227 + $0xc8] sm:$0xff]
        %v297 = vld [vmem:[%s227 + $0xd0] sm:$0xff]
        %v298 = vld [vmem:[%s227 + $0xd8] sm:$0xff]
        %v299 = vld [vmem:[%s227 + $0xe0] sm:$0xff]
        %v300 = vld [vmem:[%s227 + $0xe8] sm:$0xff]
        %v301 = vld [vmem:[%s227 + $0xf0] sm:$0xff]
        %v302 = vld [vmem:[%s227 + $0xf8] sm:$0xff]
        %v303 = vld [vmem:[%s236] sm:$0xff]
        %v304 = vld [vmem:[%s236 + $0x8] sm:$0xff]
        %v305 = vld [vmem:[%s236 + $0x10] sm:$0xff]
        %v306 = vld [vmem:[%s236 + $0x18] sm:$0xff]
        %v307 = vld [vmem:[%s236 + $0x20] sm:$0xff]
        %v308 = vld [vmem:[%s236 + $0x28] sm:$0xff]
        %v309 = vld [vmem:[%s236 + $0x30] sm:$0xff]
        %v310 = vld [vmem:[%s236 + $0x38] sm:$0xff]
        %v311 = vld [vmem:[%s236 + $0x40] sm:$0xff]
        %v312 = vld [vmem:[%s236 + $0x48] sm:$0xff]
        %v313 = vld [vmem:[%s236 + $0x50] sm:$0xff]
        %v314 = vld [vmem:[%s236 + $0x58] sm:$0xff]
        %v315 = vld [vmem:[%s236 + $0x60] sm:$0xff]
        %v316 = vld [vmem:[%s236 + $0x68] sm:$0xff]
        %v317 = vld [vmem:[%s236 + $0x70] sm:$0xff]
        %v318 = vld [vmem:[%s236 + $0x78] sm:$0xff]
        %v319 = vld [vmem:[%s236 + $0x80] sm:$0xff]
        %v320 = vld [vmem:[%s236 + $0x88] sm:$0xff]
        %v321 = vld [vmem:[%s236 + $0x90] sm:$0xff]
        %v322 = vld [vmem:[%s236 + $0x98] sm:$0xff]
        %v323 = vld [vmem:[%s236 + $0xa0] sm:$0xff]
        %v324 = vld [vmem:[%s236 + $0xa8] sm:$0xff]
        %v325 = vld [vmem:[%s236 + $0xb0] sm:$0xff]
        %v326 = vld [vmem:[%s236 + $0xb8] sm:$0xff]
        %v327 = vld [vmem:[%s236 + $0xc0] sm:$0xff]
        %v328 = vld [vmem:[%s236 + $0xc8] sm:$0xff]
        %v329 = vld [vmem:[%s236 + $0xd0] sm:$0xff]
        %v330 = vld [vmem:[%s236 + $0xd8] sm:$0xff]
        %v331 = vld [vmem:[%s236 + $0xe0] sm:$0xff]
        %v332 = vld [vmem:[%s236 + $0xe8] sm:$0xff]
        %v333 = vld [vmem:[%s236 + $0xf0] sm:$0xff]
        %v334 = vld [vmem:[%s236 + $0xf8] sm:$0xff]
        %v335 = vpack.c.bf16 %v304, %v303
        %v336 = vpack.c.bf16 %v306, %v305
        %v337 = vpack.c.bf16 %v308, %v307
        %v338 = vpack.c.bf16 %v310, %v309
        %v339 = vpack.c.bf16 %v312, %v311
        %v340 = vpack.c.bf16 %v314, %v313
        %v341 = vpack.c.bf16 %v316, %v315
        %v342 = vpack.c.bf16 %v318, %v317
        %v343 = vpack.c.bf16 %v320, %v319
        %v344 = vpack.c.bf16 %v322, %v321
        %v345 = vpack.c.bf16 %v324, %v323
        %v346 = vpack.c.bf16 %v326, %v325
        %v347 = vpack.c.bf16 %v328, %v327
        %v348 = vpack.c.bf16 %v330, %v329
        %v349 = vpack.c.bf16 %v332, %v331
        %v350 = vpack.c.bf16 %v334, %v333
        %v351 = vld [vmem:[#allocation7] sm:$0xf]
        %v352 = vld [vmem:[#allocation7 + $0x4] sm:$0xf]
        %v353 = vld [vmem:[#allocation7 + $0x8] sm:$0xf]
        %v354 = vld [vmem:[#allocation7 + $0xc] sm:$0xf]
        %v355 = vld [vmem:[#allocation7 + $0x10] sm:$0xf]
        %v356 = vld [vmem:[#allocation7 + $0x14] sm:$0xf]
        %v357 = vld [vmem:[#allocation7 + $0x18] sm:$0xf]
        %v358 = vld [vmem:[#allocation7 + $0x1c] sm:$0xf]
        %v359 = vld [vmem:[#allocation7 + $0x20] sm:$0xf]
        %v360 = vld [vmem:[#allocation7 + $0x24] sm:$0xf]
        %v361 = vld [vmem:[#allocation7 + $0x28] sm:$0xf]
        %v362 = vld [vmem:[#allocation7 + $0x2c] sm:$0xf]
        %v363 = vld [vmem:[#allocation7 + $0x30] sm:$0xf]
        %v364 = vld [vmem:[#allocation7 + $0x34] sm:$0xf]
        %v365 = vld [vmem:[#allocation7 + $0x38] sm:$0xf]
        %v366 = vld [vmem:[#allocation7 + $0x3c] sm:$0xf]
        %v383 = vunpack.c.l.b16 %v351
        %v384 = vunpack.c.l.b16 %v352
        %v385 = vunpack.c.l.b16 %v353
        %v386 = vunpack.c.l.b16 %v354
        %v387 = vunpack.c.l.b16 %v355
        %v388 = vunpack.c.l.b16 %v356
        %v389 = vunpack.c.l.b16 %v357
        %v390 = vunpack.c.l.b16 %v358
        %v391 = vunpack.c.l.b16 %v359
        %v392 = vunpack.c.l.b16 %v360
        %v393 = vunpack.c.l.b16 %v361
        %v394 = vunpack.c.l.b16 %v362
        %v395 = vunpack.c.l.b16 %v363
        %v396 = vunpack.c.l.b16 %v364
        %v397 = vunpack.c.l.b16 %v365
        %v398 = vunpack.c.l.b16 %v366
        %v399 = vpack.c.b16 %v384, %v383
        %v400 = vpack.c.b16 %v386, %v385
        %v401 = vpack.c.b16 %v388, %v387
        %v402 = vpack.c.b16 %v390, %v389
        %v403 = vpack.c.b16 %v392, %v391
        %v404 = vpack.c.b16 %v394, %v393
        %v405 = vpack.c.b16 %v396, %v395
        %v406 = vpack.c.b16 %v398, %v397
        %415 = vmatprep.subr.bf16.mxu0 0
        %416 = vmatpush1.bf16.msra.mxu0 %v399
        %417 = vmatprep.subr.bf16.mxu0 0
        %418 = vmatpush1.bf16.msra.mxu0 %v400
        %419 = vmatprep.subr.bf16.mxu0 0
        %420 = vmatpush1.bf16.msra.mxu0 %v401
        %421 = vmatprep.subr.bf16.mxu0 0
        %422 = vmatpush1.bf16.msra.mxu0 %v402
        %423 = vmatprep.subr.bf16.mxu0 0
        %424 = vmatpush1.bf16.msra.mxu0 %v403
        %425 = vmatprep.subr.bf16.mxu0 0
        %426 = vmatpush1.bf16.msra.mxu0 %v404
        %427 = vmatprep.subr.bf16.mxu0 0
        %428 = vmatpush1.bf16.msra.mxu0 %v405
        %429 = vmatprep.subr.bf16.mxu0 0
        %430 = vmatpush1.bf16.msra.mxu0 %v406
        %431 = vmatprep.subr.bf16.mxu0 0
        %432 = vmatpush1.bf16.msra.mxu0 0
        %433 = vmatprep.subr.bf16.mxu0 0
        %434 = vmatpush1.bf16.msra.mxu0 0
        %435 = vmatprep.subr.bf16.mxu0 0
        %436 = vmatpush1.bf16.msra.mxu0 0
        %437 = vmatprep.subr.bf16.mxu0 0
        %438 = vmatpush1.bf16.msra.mxu0 0
        %439 = vmatprep.subr.bf16.mxu0 0
        %440 = vmatpush1.bf16.msra.mxu0 0
        %441 = vmatprep.subr.bf16.mxu0 0
        %442 = vmatpush1.bf16.msra.mxu0 0
        %443 = vmatprep.subr.bf16.mxu0 0
        %444 = vmatpush1.bf16.msra.mxu0 0
        %445 = vmatprep.subr.bf16.mxu0 0
        %446 = vmatpush1.bf16.msra.mxu0 0
        %447 = vmatprep.mubr.bf16.mxu0 0
        %448 = vmatmul.mubr.bf16.gmra.mrb[0].mxu0 %v335
        %v449 = vpop.f32.mrb[0].mxu0
        %v450 = vadd.f32 0.0, %v449
        %v451 = vpop.f32.mrb[0].mxu0
        %v452 = vpop.f32.mrb[0].mxu0
        %v453 = vadd.f32 0.0, %v452
        %v454 = vpop.f32.mrb[0].mxu0
        %455 = vmatprep.mubr.bf16.mxu0 0
        %456 = vmatmul.mubr.bf16.gmra.mrb[0].mxu0 %v336
        %v457 = vpop.f32.mrb[0].mxu0
        %v458 = vadd.f32 0.0, %v457
        %v459 = vpop.f32.mrb[0].mxu0
        %v460 = vpop.f32.mrb[0].mxu0
        %v461 = vadd.f32 0.0, %v460
        %v462 = vpop.f32.mrb[0].mxu0
        %463 = vmatprep.mubr.bf16.mxu0 0
        %464 = vmatmul.mubr.bf16.gmra.mrb[0].mxu0 %v337
        %v465 = vpop.f32.mrb[0].mxu0
        %v466 = vadd.f32 0.0, %v465
        %v467 = vpop.f32.mrb[0].mxu0
        %v468 = vpop.f32.mrb[0].mxu0
        %v469 = vadd.f32 0.0, %v468
        %v470 = vpop.f32.mrb[0].mxu0
        %471 = vmatprep.mubr.bf16.mxu0 0
        %472 = vmatmul.mubr.bf16.gmra.mrb[0].mxu0 %v338
        %v473 = vpop.f32.mrb[0].mxu0
        %v474 = vadd.f32 0.0, %v473
        %v475 = vpop.f32.mrb[0].mxu0
        %v476 = vpop.f32.mrb[0].mxu0
        %v477 = vadd.f32 0.0, %v476
        %v478 = vpop.f32.mrb[0].mxu0
        %479 = vmatprep.mubr.bf16.mxu0 0
        %480 = vmatmul.mubr.bf16.gmra.mrb[0].mxu0 %v339
        %v481 = vpop.f32.mrb[0].mxu0
        %v482 = vadd.f32 0.0, %v481
        %v483 = vpop.f32.mrb[0].mxu0
        %v484 = vpop.f32.mrb[0].mxu0
        %v485 = vadd.f32 0.0, %v484
        %v486 = vpop.f32.mrb[0].mxu0
        %487 = vmatprep.mubr.bf16.mxu0 0
        %488 = vmatmul.mubr.bf16.gmra.mrb[0].mxu0 %v340
        %v489 = vpop.f32.mrb[0].mxu0
        %v490 = vadd.f32 0.0, %v489
        %v491 = vpop.f32.mrb[0].mxu0
        %v492 = vpop.f32.mrb[0].mxu0
        %v493 = vadd.f32 0.0, %v492
        %v494 = vpop.f32.mrb[0].mxu0
        %495 = vmatprep.mubr.bf16.mxu0 0
        %496 = vmatmul.mubr.bf16.gmra.mrb[0].mxu0 %v341
        %v497 = vpop.f32.mrb[0].mxu0
        %v498 = vadd.f32 0.0, %v497
        %v499 = vpop.f32.mrb[0].mxu0
        %v500 = vpop.f32.mrb[0].mxu0
        %v501 = vadd.f32 0.0, %v500
        %v502 = vpop.f32.mrb[0].mxu0
        %503 = vmatprep.mubr.bf16.mxu0 0
        %504 = vmatmul.mubr.bf16.gmra.mrb[0].mxu0 %v342
        %v505 = vpop.f32.mrb[0].mxu0
        %v506 = vadd.f32 0.0, %v505
        %v507 = vpop.f32.mrb[0].mxu0
        %v508 = vpop.f32.mrb[0].mxu0
        %v509 = vadd.f32 0.0, %v508
        %v510 = vpop.f32.mrb[0].mxu0
        %511 = vmatprep.mubr.bf16.mxu0 0
        %512 = vmatmul.mubr.bf16.gmra.mrb[0].mxu0 %v343
        %v513 = vpop.f32.mrb[0].mxu0
        %v514 = vadd.f32 0.0, %v513
        %v515 = vpop.f32.mrb[0].mxu0
        %v516 = vpop.f32.mrb[0].mxu0
        %v517 = vadd.f32 0.0, %v516
        %v518 = vpop.f32.mrb[0].mxu0
        %519 = vmatprep.mubr.bf16.mxu0 0
        %520 = vmatmul.mubr.bf16.gmra.mrb[0].mxu0 %v344
        %v521 = vpop.f32.mrb[0].mxu0
        %v522 = vadd.f32 0.0, %v521
        %v523 = vpop.f32.mrb[0].mxu0
        %v524 = vpop.f32.mrb[0].mxu0
        %v525 = vadd.f32 0.0, %v524
        %v526 = vpop.f32.mrb[0].mxu0
        %527 = vmatprep.mubr.bf16.mxu0 0
        %528 = vmatmul.mubr.bf16.gmra.mrb[0].mxu0 %v345
        %v529 = vpop.f32.mrb[0].mxu0
        %v530 = vadd.f32 0.0, %v529
        %v531 = vpop.f32.mrb[0].mxu0
        %v532 = vpop.f32.mrb[0].mxu0
        %v533 = vadd.f32 0.0, %v532
        %v534 = vpop.f32.mrb[0].mxu0
        %535 = vmatprep.mubr.bf16.mxu0 0
        %536 = vmatmul.mubr.bf16.gmra.mrb[0].mxu0 %v346
        %v537 = vpop.f32.mrb[0].mxu0
        %v538 = vadd.f32 0.0, %v537
        %v539 = vpop.f32.mrb[0].mxu0
        %v540 = vpop.f32.mrb[0].mxu0
        %v541 = vadd.f32 0.0, %v540
        %v542 = vpop.f32.mrb[0].mxu0
        %543 = vmatprep.mubr.bf16.mxu0 0
        %544 = vmatmul.mubr.bf16.gmra.mrb[0].mxu0 %v347
        %v545 = vpop.f32.mrb[0].mxu0
        %v546 = vadd.f32 0.0, %v545
        %v547 = vpop.f32.mrb[0].mxu0
        %v548 = vpop.f32.mrb[0].mxu0
        %v549 = vadd.f32 0.0, %v548
        %v550 = vpop.f32.mrb[0].mxu0
        %551 = vmatprep.mubr.bf16.mxu0 0
        %552 = vmatmul.mubr.bf16.gmra.mrb[0].mxu0 %v348
        %v553 = vpop.f32.mrb[0].mxu0
        %v554 = vadd.f32 0.0, %v553
        %v555 = vpop.f32.mrb[0].mxu0
        %v556 = vpop.f32.mrb[0].mxu0
        %v557 = vadd.f32 0.0, %v556
        %v558 = vpop.f32.mrb[0].mxu0
        %559 = vmatprep.mubr.bf16.mxu0 0
        %560 = vmatmul.mubr.bf16.gmra.mrb[0].mxu0 %v349
        %v561 = vpop.f32.mrb[0].mxu0
        %v562 = vadd.f32 0.0, %v561
        %v563 = vpop.f32.mrb[0].mxu0
        %v564 = vpop.f32.mrb[0].mxu0
        %v565 = vadd.f32 0.0, %v564
        %v566 = vpop.f32.mrb[0].mxu0
        %567 = vmatprep.mubr.bf16.mxu0 0
        %568 = vmatmul.mubr.bf16.gmra.mrb[0].mxu0 %v350
        %v569 = vpop.f32.mrb[0].mxu0
        %v570 = vadd.f32 0.0, %v569
        %v571 = vpop.f32.mrb[0].mxu0
        %v572 = vpop.f32.mrb[0].mxu0
        %v573 = vadd.f32 0.0, %v572
        %v574 = vpop.f32.mrb[0].mxu0
        %575 = vdwg.mxu0
        %v576 = vpack.c.bf16 %v453, %v450
        %v577 = vpack.c.bf16 %v461, %v458
        %v578 = vpack.c.bf16 %v469, %v466
        %v579 = vpack.c.bf16 %v477, %v474
        %v580 = vpack.c.bf16 %v485, %v482
        %v581 = vpack.c.bf16 %v493, %v490
        %v582 = vpack.c.bf16 %v501, %v498
        %v583 = vpack.c.bf16 %v509, %v506
        %v584 = vpack.c.bf16 %v517, %v514
        %v585 = vpack.c.bf16 %v525, %v522
        %v586 = vpack.c.bf16 %v533, %v530
        %v587 = vpack.c.bf16 %v541, %v538
        %v588 = vpack.c.bf16 %v549, %v546
        %v589 = vpack.c.bf16 %v557, %v554
        %v590 = vpack.c.bf16 %v565, %v562
        %v591 = vpack.c.bf16 %v573, %v570
        %v592 = vld [vmem:[%s3] sm:$0x1]
        %v594 = vlaneseq
        %v595 = vshrl.u32 %v594, 7
        %v596 = vsub.s32 0, %v595
        %v597 = vrot.slane %v592, %v596
        %v631 = vunpack.c.l.b16 %v271
        %v632 = vunpack.c.h.b16 %v271
        %v633 = vunpack.c.l.b16 %v272
        %v634 = vunpack.c.h.b16 %v272
        %v635 = vunpack.c.l.b16 %v273
        %v636 = vunpack.c.h.b16 %v273
        %v637 = vunpack.c.l.b16 %v274
        %v638 = vunpack.c.h.b16 %v274
        %v639 = vunpack.c.l.b16 %v275
        %v640 = vunpack.c.h.b16 %v275
        %v641 = vunpack.c.l.b16 %v276
        %v642 = vunpack.c.h.b16 %v276
        %v643 = vunpack.c.l.b16 %v277
        %v644 = vunpack.c.h.b16 %v277
        %v645 = vunpack.c.l.b16 %v278
        %v646 = vunpack.c.h.b16 %v278
        %v647 = vunpack.c.l.b16 %v279
        %v648 = vunpack.c.h.b16 %v279
        %v649 = vunpack.c.l.b16 %v280
        %v650 = vunpack.c.h.b16 %v280
        %v651 = vunpack.c.l.b16 %v281
        %v652 = vunpack.c.h.b16 %v281
        %v653 = vunpack.c.l.b16 %v282
        %v654 = vunpack.c.h.b16 %v282
        %v655 = vunpack.c.l.b16 %v283
        %v656 = vunpack.c.h.b16 %v283
        %v657 = vunpack.c.l.b16 %v284
        %v658 = vunpack.c.h.b16 %v284
        %v659 = vunpack.c.l.b16 %v285
        %v660 = vunpack.c.h.b16 %v285
        %v661 = vunpack.c.l.b16 %v286
        %v662 = vunpack.c.h.b16 %v286
        %v663 = vunpack.c.l.b16 %v287
        %v664 = vunpack.c.h.b16 %v287
        %v665 = vunpack.c.l.b16 %v288
        %v666 = vunpack.c.h.b16 %v288
        %v667 = vunpack.c.l.b16 %v289
        %v668 = vunpack.c.h.b16 %v289
        %v669 = vunpack.c.l.b16 %v290
        %v670 = vunpack.c.h.b16 %v290
        %v671 = vunpack.c.l.b16 %v291
        %v672 = vunpack.c.h.b16 %v291
        %v673 = vunpack.c.l.b16 %v292
        %v674 = vunpack.c.h.b16 %v292
        %v675 = vunpack.c.l.b16 %v293
        %v676 = vunpack.c.h.b16 %v293
        %v677 = vunpack.c.l.b16 %v294
        %v678 = vunpack.c.h.b16 %v294
        %v679 = vunpack.c.l.b16 %v295
        %v680 = vunpack.c.h.b16 %v295
        %v681 = vunpack.c.l.b16 %v296
        %v682 = vunpack.c.h.b16 %v296
        %v683 = vunpack.c.l.b16 %v297
        %v684 = vunpack.c.h.b16 %v297
        %v685 = vunpack.c.l.b16 %v298
        %v686 = vunpack.c.h.b16 %v298
        %v687 = vunpack.c.l.b16 %v299
        %v688 = vunpack.c.h.b16 %v299
        %v689 = vunpack.c.l.b16 %v300
        %v690 = vunpack.c.h.b16 %v300
        %v691 = vunpack.c.l.b16 %v301
        %v692 = vunpack.c.h.b16 %v301
        %v693 = vunpack.c.l.b16 %v302
        %v694 = vunpack.c.h.b16 %v302
        %v695 = vpack.c.b16 %v633, %v631
        %v696 = vpack.c.b16 %v634, %v632
        %v697 = vpack.c.b16 %v637, %v635
        %v698 = vpack.c.b16 %v638, %v636
        %v699 = vpack.c.b16 %v641, %v639
        %v700 = vpack.c.b16 %v642, %v640
        %v701 = vpack.c.b16 %v645, %v643
        %v702 = vpack.c.b16 %v646, %v644
        %v703 = vpack.c.b16 %v649, %v647
        %v704 = vpack.c.b16 %v650, %v648
        %v705 = vpack.c.b16 %v653, %v651
        %v706 = vpack.c.b16 %v654, %v652
        %v707 = vpack.c.b16 %v657, %v655
        %v708 = vpack.c.b16 %v658, %v656
        %v709 = vpack.c.b16 %v661, %v659
        %v710 = vpack.c.b16 %v662, %v660
        %v711 = vpack.c.b16 %v665, %v663
        %v712 = vpack.c.b16 %v666, %v664
        %v713 = vpack.c.b16 %v669, %v667
        %v714 = vpack.c.b16 %v670, %v668
        %v715 = vpack.c.b16 %v673, %v671
        %v716 = vpack.c.b16 %v674, %v672
        %v717 = vpack.c.b16 %v677, %v675
        %v718 = vpack.c.b16 %v678, %v676
        %v719 = vpack.c.b16 %v681, %v679
        %v720 = vpack.c.b16 %v682, %v680
        %v721 = vpack.c.b16 %v685, %v683
        %v722 = vpack.c.b16 %v686, %v684
        %v723 = vpack.c.b16 %v689, %v687
        %v724 = vpack.c.b16 %v690, %v688
        %v725 = vpack.c.b16 %v693, %v691
        %v726 = vpack.c.b16 %v694, %v692
        %759 = vmatprep.subr.bf16.mxu0 0
        %760 = vmatpush1.bf16.msra.mxu0 %v576
        %761 = vmatprep.subr.bf16.mxu0 0
        %762 = vmatpush1.bf16.msra.mxu0 %v577
        %763 = vmatprep.subr.bf16.mxu0 0
        %764 = vmatpush1.bf16.msra.mxu0 %v578
        %765 = vmatprep.subr.bf16.mxu0 0
        %766 = vmatpush1.bf16.msra.mxu0 %v579
        %767 = vmatprep.subr.bf16.mxu0 0
        %768 = vmatpush1.bf16.msra.mxu0 %v580
        %769 = vmatprep.subr.bf16.mxu0 0
        %770 = vmatpush1.bf16.msra.mxu0 %v581
        %771 = vmatprep.subr.bf16.mxu0 0
        %772 = vmatpush1.bf16.msra.mxu0 %v582
        %773 = vmatprep.subr.bf16.mxu0 0
        %774 = vmatpush1.bf16.msra.mxu0 %v583
        %775 = vmatprep.subr.bf16.mxu0 0
        %776 = vmatpush1.bf16.msra.mxu0 %v584
        %777 = vmatprep.subr.bf16.mxu0 0
        %778 = vmatpush1.bf16.msra.mxu0 %v585
        %779 = vmatprep.subr.bf16.mxu0 0
        %780 = vmatpush1.bf16.msra.mxu0 %v586
        %781 = vmatprep.subr.bf16.mxu0 0
        %782 = vmatpush1.bf16.msra.mxu0 %v587
        %783 = vmatprep.subr.bf16.mxu0 0
        %784 = vmatpush1.bf16.msra.mxu0 %v588
        %785 = vmatprep.subr.bf16.mxu0 0
        %786 = vmatpush1.bf16.msra.mxu0 %v589
        %787 = vmatprep.subr.bf16.mxu0 0
        %788 = vmatpush1.bf16.msra.mxu0 %v590
        %789 = vmatprep.subr.bf16.mxu0 0
        %790 = vmatpush1.bf16.msra.mxu0 %v591
        %791 = vmatprep.mubr.bf16.mxu0 %v696
        %792 = vmatmul.mubr.bf16.gmra.mrb[0].mxu0 %v695
        %v793 = vpop.f32.mrb[0].mxu0
        %v794 = vadd.f32 %v597, %v793
        %v795 = vpop.f32.mrb[0].mxu0
        %v796 = vpop.f32.mrb[0].mxu0
        %v797 = vadd.f32 %v597, %v796
        %v798 = vpop.f32.mrb[0].mxu0
        %799 = vmatprep.mubr.bf16.mxu0 %v698
        %800 = vmatmul.mubr.bf16.gmra.mrb[0].mxu0 %v697
        %v801 = vpop.f32.mrb[0].mxu0
        %v802 = vadd.f32 %v597, %v801
        %v803 = vpop.f32.mrb[0].mxu0
        %v804 = vpop.f32.mrb[0].mxu0
        %v805 = vadd.f32 %v597, %v804
        %v806 = vpop.f32.mrb[0].mxu0
        %807 = vmatprep.mubr.bf16.mxu0 %v700
        %808 = vmatmul.mubr.bf16.gmra.mrb[0].mxu0 %v699
        %v809 = vpop.f32.mrb[0].mxu0
        %v810 = vadd.f32 %v597, %v809
        %v811 = vpop.f32.mrb[0].mxu0
        %v812 = vpop.f32.mrb[0].mxu0
        %v813 = vadd.f32 %v597, %v812
        %v814 = vpop.f32.mrb[0].mxu0
        %815 = vmatprep.mubr.bf16.mxu0 %v702
        %816 = vmatmul.mubr.bf16.gmra.mrb[0].mxu0 %v701
        %v817 = vpop.f32.mrb[0].mxu0
        %v818 = vadd.f32 %v597, %v817
        %v819 = vpop.f32.mrb[0].mxu0
        %v820 = vpop.f32.mrb[0].mxu0
        %v821 = vadd.f32 %v597, %v820
        %v822 = vpop.f32.mrb[0].mxu0
        %823 = vmatprep.mubr.bf16.mxu0 %v704
        %824 = vmatmul.mubr.bf16.gmra.mrb[0].mxu0 %v703
        %v825 = vpop.f32.mrb[0].mxu0
        %v826 = vadd.f32 %v597, %v825
        %v827 = vpop.f32.mrb[0].mxu0
        %v828 = vpop.f32.mrb[0].mxu0
        %v829 = vadd.f32 %v597, %v828
        %v830 = vpop.f32.mrb[0].mxu0
        %831 = vmatprep.mubr.bf16.mxu0 %v706
        %832 = vmatmul.mubr.bf16.gmra.mrb[0].mxu0 %v705
        %v833 = vpop.f32.mrb[0].mxu0
        %v834 = vadd.f32 %v597, %v833
        %v835 = vpop.f32.mrb[0].mxu0
        %v836 = vpop.f32.mrb[0].mxu0
        %v837 = vadd.f32 %v597, %v836
        %v838 = vpop.f32.mrb[0].mxu0
        %839 = vmatprep.mubr.bf16.mxu0 %v708
        %840 = vmatmul.mubr.bf16.gmra.mrb[0].mxu0 %v707
        %v841 = vpop.f32.mrb[0].mxu0
        %v842 = vadd.f32 %v597, %v841
        %v843 = vpop.f32.mrb[0].mxu0
        %v844 = vpop.f32.mrb[0].mxu0
        %v845 = vadd.f32 %v597, %v844
        %v846 = vpop.f32.mrb[0].mxu0
        %847 = vmatprep.mubr.bf16.mxu0 %v710
        %848 = vmatmul.mubr.bf16.gmra.mrb[0].mxu0 %v709
        %v849 = vpop.f32.mrb[0].mxu0
        %v850 = vadd.f32 %v597, %v849
        %v851 = vpop.f32.mrb[0].mxu0
        %v852 = vpop.f32.mrb[0].mxu0
        %v853 = vadd.f32 %v597, %v852
        %v854 = vpop.f32.mrb[0].mxu0
        %855 = vmatprep.mubr.bf16.mxu0 %v712
        %856 = vmatmul.mubr.bf16.gmra.mrb[0].mxu0 %v711
        %v857 = vpop.f32.mrb[0].mxu0
        %v858 = vadd.f32 %v597, %v857
        %v859 = vpop.f32.mrb[0].mxu0
        %v860 = vpop.f32.mrb[0].mxu0
        %v861 = vadd.f32 %v597, %v860
        %v862 = vpop.f32.mrb[0].mxu0
        %863 = vmatprep.mubr.bf16.mxu0 %v714
        %864 = vmatmul.mubr.bf16.gmra.mrb[0].mxu0 %v713
        %v865 = vpop.f32.mrb[0].mxu0
        %v866 = vadd.f32 %v597, %v865
        %v867 = vpop.f32.mrb[0].mxu0
        %v868 = vpop.f32.mrb[0].mxu0
        %v869 = vadd.f32 %v597, %v868
        %v870 = vpop.f32.mrb[0].mxu0
        %871 = vmatprep.mubr.bf16.mxu0 %v716
        %872 = vmatmul.mubr.bf16.gmra.mrb[0].mxu0 %v715
        %v873 = vpop.f32.mrb[0].mxu0
        %v874 = vadd.f32 %v597, %v873
        %v875 = vpop.f32.mrb[0].mxu0
        %v876 = vpop.f32.mrb[0].mxu0
        %v877 = vadd.f32 %v597, %v876
        %v878 = vpop.f32.mrb[0].mxu0
        %879 = vmatprep.mubr.bf16.mxu0 %v718
        %880 = vmatmul.mubr.bf16.gmra.mrb[0].mxu0 %v717
        %v881 = vpop.f32.mrb[0].mxu0
        %v882 = vadd.f32 %v597, %v881
        %v883 = vpop.f32.mrb[0].mxu0
        %v884 = vpop.f32.mrb[0].mxu0
        %v885 = vadd.f32 %v597, %v884
        %v886 = vpop.f32.mrb[0].mxu0
        %887 = vmatprep.mubr.bf16.mxu0 %v720
        %888 = vmatmul.mubr.bf16.gmra.mrb[0].mxu0 %v719
        %v889 = vpop.f32.mrb[0].mxu0
        %v890 = vadd.f32 %v597, %v889
        %v891 = vpop.f32.mrb[0].mxu0
        %v892 = vpop.f32.mrb[0].mxu0
        %v893 = vadd.f32 %v597, %v892
        %v894 = vpop.f32.mrb[0].mxu0
        %895 = vmatprep.mubr.bf16.mxu0 %v722
        %896 = vmatmul.mubr.bf16.gmra.mrb[0].mxu0 %v721
        %v897 = vpop.f32.mrb[0].mxu0
        %v898 = vadd.f32 %v597, %v897
        %v899 = vpop.f32.mrb[0].mxu0
        %v900 = vpop.f32.mrb[0].mxu0
        %v901 = vadd.f32 %v597, %v900
        %v902 = vpop.f32.mrb[0].mxu0
        %903 = vmatprep.mubr.bf16.mxu0 %v724
        %904 = vmatmul.mubr.bf16.gmra.mrb[0].mxu0 %v723
        %v905 = vpop.f32.mrb[0].mxu0
        %v906 = vadd.f32 %v597, %v905
        %v907 = vpop.f32.mrb[0].mxu0
        %v908 = vpop.f32.mrb[0].mxu0
        %v909 = vadd.f32 %v597, %v908
        %v910 = vpop.f32.mrb[0].mxu0
        %911 = vmatprep.mubr.bf16.mxu0 %v726
        %912 = vmatmul.mubr.bf16.gmra.mrb[0].mxu0 %v725
        %v913 = vpop.f32.mrb[0].mxu0
        %v914 = vadd.f32 %v597, %v913
        %v915 = vpop.f32.mrb[0].mxu0
        %v916 = vpop.f32.mrb[0].mxu0
        %v917 = vadd.f32 %v597, %v916
        %v918 = vpop.f32.mrb[0].mxu0
        %919 = vdwg.mxu0
        %v920 = vmax.f32 %v794, 0.0
        %v921 = vmax.f32 %v797, 0.0
        %v922 = vmax.f32 %v802, 0.0
        %v923 = vmax.f32 %v805, 0.0
        %v924 = vmax.f32 %v810, 0.0
        %v925 = vmax.f32 %v813, 0.0
        %v926 = vmax.f32 %v818, 0.0
        %v927 = vmax.f32 %v821, 0.0
        %v928 = vmax.f32 %v826, 0.0
        %v929 = vmax.f32 %v829, 0.0
        %v930 = vmax.f32 %v834, 0.0
        %v931 = vmax.f32 %v837, 0.0
        %v932 = vmax.f32 %v842, 0.0
        %v933 = vmax.f32 %v845, 0.0
        %v934 = vmax.f32 %v850, 0.0
        %v935 = vmax.f32 %v853, 0.0
        %v936 = vmax.f32 %v858, 0.0
        %v937 = vmax.f32 %v861, 0.0
        %v938 = vmax.f32 %v866, 0.0
        %v939 = vmax.f32 %v869, 0.0
        %v940 = vmax.f32 %v874, 0.0
        %v941 = vmax.f32 %v877, 0.0
        %v942 = vmax.f32 %v882, 0.0
        %v943 = vmax.f32 %v885, 0.0
        %v944 = vmax.f32 %v890, 0.0
        %v945 = vmax.f32 %v893, 0.0
        %v946 = vmax.f32 %v898, 0.0
        %v947 = vmax.f32 %v901, 0.0
        %v948 = vmax.f32 %v906, 0.0
        %v949 = vmax.f32 %v909, 0.0
        %v950 = vmax.f32 %v914, 0.0
        %v951 = vmax.f32 %v917, 0.0
        %v952 = vpack.c.bf16 %v921, %v920
        %v953 = vpack.c.bf16 %v923, %v922
        %v954 = vpack.c.bf16 %v925, %v924
        %v955 = vpack.c.bf16 %v927, %v926
        %v956 = vpack.c.bf16 %v929, %v928
        %v957 = vpack.c.bf16 %v931, %v930
        %v958 = vpack.c.bf16 %v933, %v932
        %v959 = vpack.c.bf16 %v935, %v934
        %v960 = vpack.c.bf16 %v937, %v936
        %v961 = vpack.c.bf16 %v939, %v938
        %v962 = vpack.c.bf16 %v941, %v940
        %v963 = vpack.c.bf16 %v943, %v942
        %v964 = vpack.c.bf16 %v945, %v944
        %v965 = vpack.c.bf16 %v947, %v946
        %v966 = vpack.c.bf16 %v949, %v948
        %v967 = vpack.c.bf16 %v951, %v950
        %s968 = scalar_lea.vmem [#allocation7], 64
        %v969 = vld [vmem:[%s968] sm:$0xf]
        %v970 = vld [vmem:[%s968 + $0x4] sm:$0xf]
        %v971 = vld [vmem:[%s968 + $0x8] sm:$0xf]
        %v972 = vld [vmem:[%s968 + $0xc] sm:$0xf]
        %v973 = vld [vmem:[%s968 + $0x10] sm:$0xf]
        %v974 = vld [vmem:[%s968 + $0x14] sm:$0xf]
        %v975 = vld [vmem:[%s968 + $0x18] sm:$0xf]
        %v976 = vld [vmem:[%s968 + $0x1c] sm:$0xf]
        %v977 = vld [vmem:[%s968 + $0x20] sm:$0xf]
        %v978 = vld [vmem:[%s968 + $0x24] sm:$0xf]
        %v979 = vld [vmem:[%s968 + $0x28] sm:$0xf]
        %v980 = vld [vmem:[%s968 + $0x2c] sm:$0xf]
        %v981 = vld [vmem:[%s968 + $0x30] sm:$0xf]
        %v982 = vld [vmem:[%s968 + $0x34] sm:$0xf]
        %v983 = vld [vmem:[%s968 + $0x38] sm:$0xf]
        %v984 = vld [vmem:[%s968 + $0x3c] sm:$0xf]
        %v1001 = vunpack.c.l.b16 %v969
        %v1002 = vunpack.c.l.b16 %v970
        %v1003 = vunpack.c.l.b16 %v971
        %v1004 = vunpack.c.l.b16 %v972
        %v1005 = vunpack.c.l.b16 %v973
        %v1006 = vunpack.c.l.b16 %v974
        %v1007 = vunpack.c.l.b16 %v975
        %v1008 = vunpack.c.l.b16 %v976
        %v1009 = vunpack.c.l.b16 %v977
        %v1010 = vunpack.c.l.b16 %v978
        %v1011 = vunpack.c.l.b16 %v979
        %v1012 = vunpack.c.l.b16 %v980
        %v1013 = vunpack.c.l.b16 %v981
        %v1014 = vunpack.c.l.b16 %v982
        %v1015 = vunpack.c.l.b16 %v983
        %v1016 = vunpack.c.l.b16 %v984
        %v1017 = vpack.c.b16 %v1002, %v1001
        %v1018 = vpack.c.b16 %v1004, %v1003
        %v1019 = vpack.c.b16 %v1006, %v1005
        %v1020 = vpack.c.b16 %v1008, %v1007
        %v1021 = vpack.c.b16 %v1010, %v1009
        %v1022 = vpack.c.b16 %v1012, %v1011
        %v1023 = vpack.c.b16 %v1014, %v1013
        %v1024 = vpack.c.b16 %v1016, %v1015
        %1033 = vmatprep.subr.bf16.mxu0 0
        %1034 = vmatpush1.bf16.msra.mxu0 %v1017
        %1035 = vmatprep.subr.bf16.mxu0 0
        %1036 = vmatpush1.bf16.msra.mxu0 %v1018
        %1037 = vmatprep.subr.bf16.mxu0 0
        %1038 = vmatpush1.bf16.msra.mxu0 %v1019
        %1039 = vmatprep.subr.bf16.mxu0 0
        %1040 = vmatpush1.bf16.msra.mxu0 %v1020
        %1041 = vmatprep.subr.bf16.mxu0 0
        %1042 = vmatpush1.bf16.msra.mxu0 %v1021
        %1043 = vmatprep.subr.bf16.mxu0 0
        %1044 = vmatpush1.bf16.msra.mxu0 %v1022
        %1045 = vmatprep.subr.bf16.mxu0 0
        %1046 = vmatpush1.bf16.msra.mxu0 %v1023
        %1047 = vmatprep.subr.bf16.mxu0 0
        %1048 = vmatpush1.bf16.msra.mxu0 %v1024
        %1049 = vmatprep.subr.bf16.mxu0 0
        %1050 = vmatpush1.bf16.msra.mxu0 0
        %1051 = vmatprep.subr.bf16.mxu0 0
        %1052 = vmatpush1.bf16.msra.mxu0 0
        %1053 = vmatprep.subr.bf16.mxu0 0
        %1054 = vmatpush1.bf16.msra.mxu0 0
        %1055 = vmatprep.subr.bf16.mxu0 0
        %1056 = vmatpush1.bf16.msra.mxu0 0
        %1057 = vmatprep.subr.bf16.mxu0 0
        %1058 = vmatpush1.bf16.msra.mxu0 0
        %1059 = vmatprep.subr.bf16.mxu0 0
        %1060 = vmatpush1.bf16.msra.mxu0 0
        %1061 = vmatprep.subr.bf16.mxu0 0
        %1062 = vmatpush1.bf16.msra.mxu0 0
        %1063 = vmatprep.subr.bf16.mxu0 0
        %1064 = vmatpush1.bf16.msra.mxu0 0
        %1065 = vmatprep.mubr.bf16.mxu0 0
        %1066 = vmatmul.mubr.bf16.gmra.mrb[0].mxu0 %v952
        %v1067 = vpop.f32.mrb[0].mxu0
        %v1068 = vadd.f32 0.0, %v1067
        %v1069 = vpop.f32.mrb[0].mxu0
        %v1070 = vpop.f32.mrb[0].mxu0
        %v1071 = vadd.f32 0.0, %v1070
        %v1072 = vpop.f32.mrb[0].mxu0
        %1073 = vmatprep.mubr.bf16.mxu0 0
        %1074 = vmatmul.mubr.bf16.gmra.mrb[0].mxu0 %v953
        %v1075 = vpop.f32.mrb[0].mxu0
        %v1076 = vadd.f32 0.0, %v1075
        %v1077 = vpop.f32.mrb[0].mxu0
        %v1078 = vpop.f32.mrb[0].mxu0
        %v1079 = vadd.f32 0.0, %v1078
        %v1080 = vpop.f32.mrb[0].mxu0
        %1081 = vmatprep.mubr.bf16.mxu0 0
        %1082 = vmatmul.mubr.bf16.gmra.mrb[0].mxu0 %v954
        %v1083 = vpop.f32.mrb[0].mxu0
        %v1084 = vadd.f32 0.0, %v1083
        %v1085 = vpop.f32.mrb[0].mxu0
        %v1086 = vpop.f32.mrb[0].mxu0
        %v1087 = vadd.f32 0.0, %v1086
        %v1088 = vpop.f32.mrb[0].mxu0
        %1089 = vmatprep.mubr.bf16.mxu0 0
        %1090 = vmatmul.mubr.bf16.gmra.mrb[0].mxu0 %v955
        %v1091 = vpop.f32.mrb[0].mxu0
        %v1092 = vadd.f32 0.0, %v1091
        %v1093 = vpop.f32.mrb[0].mxu0
        %v1094 = vpop.f32.mrb[0].mxu0
        %v1095 = vadd.f32 0.0, %v1094
        %v1096 = vpop.f32.mrb[0].mxu0
        %1097 = vmatprep.mubr.bf16.mxu0 0
        %1098 = vmatmul.mubr.bf16.gmra.mrb[0].mxu0 %v956
        %v1099 = vpop.f32.mrb[0].mxu0
        %v1100 = vadd.f32 0.0, %v1099
        %v1101 = vpop.f32.mrb[0].mxu0
        %v1102 = vpop.f32.mrb[0].mxu0
        %v1103 = vadd.f32 0.0, %v1102
        %v1104 = vpop.f32.mrb[0].mxu0
        %1105 = vmatprep.mubr.bf16.mxu0 0
        %1106 = vmatmul.mubr.bf16.gmra.mrb[0].mxu0 %v957
        %v1107 = vpop.f32.mrb[0].mxu0
        %v1108 = vadd.f32 0.0, %v1107
        %v1109 = vpop.f32.mrb[0].mxu0
        %v1110 = vpop.f32.mrb[0].mxu0
        %v1111 = vadd.f32 0.0, %v1110
        %v1112 = vpop.f32.mrb[0].mxu0
        %1113 = vmatprep.mubr.bf16.mxu0 0
        %1114 = vmatmul.mubr.bf16.gmra.mrb[0].mxu0 %v958
        %v1115 = vpop.f32.mrb[0].mxu0
        %v1116 = vadd.f32 0.0, %v1115
        %v1117 = vpop.f32.mrb[0].mxu0
        %v1118 = vpop.f32.mrb[0].mxu0
        %v1119 = vadd.f32 0.0, %v1118
        %v1120 = vpop.f32.mrb[0].mxu0
        %1121 = vmatprep.mubr.bf16.mxu0 0
        %1122 = vmatmul.mubr.bf16.gmra.mrb[0].mxu0 %v959
        %v1123 = vpop.f32.mrb[0].mxu0
        %v1124 = vadd.f32 0.0, %v1123
        %v1125 = vpop.f32.mrb[0].mxu0
        %v1126 = vpop.f32.mrb[0].mxu0
        %v1127 = vadd.f32 0.0, %v1126
        %v1128 = vpop.f32.mrb[0].mxu0
        %1129 = vmatprep.mubr.bf16.mxu0 0
        %1130 = vmatmul.mubr.bf16.gmra.mrb[0].mxu0 %v960
        %v1131 = vpop.f32.mrb[0].mxu0
        %v1132 = vadd.f32 0.0, %v1131
        %v1133 = vpop.f32.mrb[0].mxu0
        %v1134 = vpop.f32.mrb[0].mxu0
        %v1135 = vadd.f32 0.0, %v1134
        %v1136 = vpop.f32.mrb[0].mxu0
        %1137 = vmatprep.mubr.bf16.mxu0 0
        %1138 = vmatmul.mubr.bf16.gmra.mrb[0].mxu0 %v961
        %v1139 = vpop.f32.mrb[0].mxu0
        %v1140 = vadd.f32 0.0, %v1139
        %v1141 = vpop.f32.mrb[0].mxu0
        %v1142 = vpop.f32.mrb[0].mxu0
        %v1143 = vadd.f32 0.0, %v1142
        %v1144 = vpop.f32.mrb[0].mxu0
        %1145 = vmatprep.mubr.bf16.mxu0 0
        %1146 = vmatmul.mubr.bf16.gmra.mrb[0].mxu0 %v962
        %v1147 = vpop.f32.mrb[0].mxu0
        %v1148 = vadd.f32 0.0, %v1147
        %v1149 = vpop.f32.mrb[0].mxu0
        %v1150 = vpop.f32.mrb[0].mxu0
        %v1151 = vadd.f32 0.0, %v1150
        %v1152 = vpop.f32.mrb[0].mxu0
        %1153 = vmatprep.mubr.bf16.mxu0 0
        %1154 = vmatmul.mubr.bf16.gmra.mrb[0].mxu0 %v963
        %v1155 = vpop.f32.mrb[0].mxu0
        %v1156 = vadd.f32 0.0, %v1155
        %v1157 = vpop.f32.mrb[0].mxu0
        %v1158 = vpop.f32.mrb[0].mxu0
        %v1159 = vadd.f32 0.0, %v1158
        %v1160 = vpop.f32.mrb[0].mxu0
        %1161 = vmatprep.mubr.bf16.mxu0 0
        %1162 = vmatmul.mubr.bf16.gmra.mrb[0].mxu0 %v964
        %v1163 = vpop.f32.mrb[0].mxu0
        %v1164 = vadd.f32 0.0, %v1163
        %v1165 = vpop.f32.mrb[0].mxu0
        %v1166 = vpop.f32.mrb[0].mxu0
        %v1167 = vadd.f32 0.0, %v1166
        %v1168 = vpop.f32.mrb[0].mxu0
        %1169 = vmatprep.mubr.bf16.mxu0 0
        %1170 = vmatmul.mubr.bf16.gmra.mrb[0].mxu0 %v965
        %v1171 = vpop.f32.mrb[0].mxu0
        %v1172 = vadd.f32 0.0, %v1171
        %v1173 = vpop.f32.mrb[0].mxu0
        %v1174 = vpop.f32.mrb[0].mxu0
        %v1175 = vadd.f32 0.0, %v1174
        %v1176 = vpop.f32.mrb[0].mxu0
        %1177 = vmatprep.mubr.bf16.mxu0 0
        %1178 = vmatmul.mubr.bf16.gmra.mrb[0].mxu0 %v966
        %v1179 = vpop.f32.mrb[0].mxu0
        %v1180 = vadd.f32 0.0, %v1179
        %v1181 = vpop.f32.mrb[0].mxu0
        %v1182 = vpop.f32.mrb[0].mxu0
        %v1183 = vadd.f32 0.0, %v1182
        %v1184 = vpop.f32.mrb[0].mxu0
        %1185 = vmatprep.mubr.bf16.mxu0 0
        %1186 = vmatmul.mubr.bf16.gmra.mrb[0].mxu0 %v967
        %v1187 = vpop.f32.mrb[0].mxu0
        %v1188 = vadd.f32 0.0, %v1187
        %v1189 = vpop.f32.mrb[0].mxu0
        %v1190 = vpop.f32.mrb[0].mxu0
        %v1191 = vadd.f32 0.0, %v1190
        %v1192 = vpop.f32.mrb[0].mxu0
        %1193 = vdwg.mxu0
        %v1194 = vpack.c.bf16 %v1071, %v1068
        %v1195 = vpack.c.bf16 %v1079, %v1076
        %v1196 = vpack.c.bf16 %v1087, %v1084
        %v1197 = vpack.c.bf16 %v1095, %v1092
        %v1198 = vpack.c.bf16 %v1103, %v1100
        %v1199 = vpack.c.bf16 %v1111, %v1108
        %v1200 = vpack.c.bf16 %v1119, %v1116
        %v1201 = vpack.c.bf16 %v1127, %v1124
        %v1202 = vpack.c.bf16 %v1135, %v1132
        %v1203 = vpack.c.bf16 %v1143, %v1140
        %v1204 = vpack.c.bf16 %v1151, %v1148
        %v1205 = vpack.c.bf16 %v1159, %v1156
        %v1206 = vpack.c.bf16 %v1167, %v1164
        %v1207 = vpack.c.bf16 %v1175, %v1172
        %v1208 = vpack.c.bf16 %v1183, %v1180
        %v1209 = vpack.c.bf16 %v1191, %v1188
        %s1210 = scalar_lea.vmem %s3, 1
        %v1211 = vld [vmem:[%s1210] sm:$0x1]
        %v1213 = vlaneseq
        %v1214 = vshrl.u32 %v1213, 7
        %v1215 = vsub.s32 0, %v1214
        %v1216 = vrot.slane %v1211, %v1215
        %1218 = vmatprep.subr.bf16.mxu0 0
        %1219 = vmatpush1.bf16.msra.mxu0 %v1194
        %1220 = vmatprep.subr.bf16.mxu0 0
        %1221 = vmatpush1.bf16.msra.mxu0 %v1195
        %1222 = vmatprep.subr.bf16.mxu0 0
        %1223 = vmatpush1.bf16.msra.mxu0 %v1196
        %1224 = vmatprep.subr.bf16.mxu0 0
        %1225 = vmatpush1.bf16.msra.mxu0 %v1197
        %1226 = vmatprep.subr.bf16.mxu0 0
        %1227 = vmatpush1.bf16.msra.mxu0 %v1198
        %1228 = vmatprep.subr.bf16.mxu0 0
        %1229 = vmatpush1.bf16.msra.mxu0 %v1199
        %1230 = vmatprep.subr.bf16.mxu0 0
        %1231 = vmatpush1.bf16.msra.mxu0 %v1200
        %1232 = vmatprep.subr.bf16.mxu0 0
        %1233 = vmatpush1.bf16.msra.mxu0 %v1201
        %1234 = vmatprep.subr.bf16.mxu0 0
        %1235 = vmatpush1.bf16.msra.mxu0 %v1202
        %1236 = vmatprep.subr.bf16.mxu0 0
        %1237 = vmatpush1.bf16.msra.mxu0 %v1203
        %1238 = vmatprep.subr.bf16.mxu0 0
        %1239 = vmatpush1.bf16.msra.mxu0 %v1204
        %1240 = vmatprep.subr.bf16.mxu0 0
        %1241 = vmatpush1.bf16.msra.mxu0 %v1205
        %1242 = vmatprep.subr.bf16.mxu0 0
        %1243 = vmatpush1.bf16.msra.mxu0 %v1206
        %1244 = vmatprep.subr.bf16.mxu0 0
        %1245 = vmatpush1.bf16.msra.mxu0 %v1207
        %1246 = vmatprep.subr.bf16.mxu0 0
        %1247 = vmatpush1.bf16.msra.mxu0 %v1208
        %1248 = vmatprep.subr.bf16.mxu0 0
        %1249 = vmatpush1.bf16.msra.mxu0 %v1209
        %1250 = vmatprep.mubr.bf16.mxu0 %v696
        %1251 = vmatmul.mubr.bf16.gmra.mrb[0].mxu0 %v695
        %v1252 = vpop.f32.mrb[0].mxu0
        %v1253 = vadd.f32 %v1216, %v1252
        %v1254 = vpop.f32.mrb[0].mxu0
        %v1255 = vpop.f32.mrb[0].mxu0
        %v1256 = vadd.f32 %v1216, %v1255
        %v1257 = vpop.f32.mrb[0].mxu0
        %1258 = vmatprep.mubr.bf16.mxu0 %v698
        %1259 = vmatmul.mubr.bf16.gmra.mrb[0].mxu0 %v697
        %v1260 = vpop.f32.mrb[0].mxu0
        %v1261 = vadd.f32 %v1216, %v1260
        %v1262 = vpop.f32.mrb[0].mxu0
        %v1263 = vpop.f32.mrb[0].mxu0
        %v1264 = vadd.f32 %v1216, %v1263
        %v1265 = vpop.f32.mrb[0].mxu0
        %1266 = vmatprep.mubr.bf16.mxu0 %v700
        %1267 = vmatmul.mubr.bf16.gmra.mrb[0].mxu0 %v699
        %v1268 = vpop.f32.mrb[0].mxu0
        %v1269 = vadd.f32 %v1216, %v1268
        %v1270 = vpop.f32.mrb[0].mxu0
        %v1271 = vpop.f32.mrb[0].mxu0
        %v1272 = vadd.f32 %v1216, %v1271
        %v1273 = vpop.f32.mrb[0].mxu0
        %1274 = vmatprep.mubr.bf16.mxu0 %v702
        %1275 = vmatmul.mubr.bf16.gmra.mrb[0].mxu0 %v701
        %v1276 = vpop.f32.mrb[0].mxu0
        %v1277 = vadd.f32 %v1216, %v1276
        %v1278 = vpop.f32.mrb[0].mxu0
        %v1279 = vpop.f32.mrb[0].mxu0
        %v1280 = vadd.f32 %v1216, %v1279
        %v1281 = vpop.f32.mrb[0].mxu0
        %1282 = vmatprep.mubr.bf16.mxu0 %v704
        %1283 = vmatmul.mubr.bf16.gmra.mrb[0].mxu0 %v703
        %v1284 = vpop.f32.mrb[0].mxu0
        %v1285 = vadd.f32 %v1216, %v1284
        %v1286 = vpop.f32.mrb[0].mxu0
        %v1287 = vpop.f32.mrb[0].mxu0
        %v1288 = vadd.f32 %v1216, %v1287
        %v1289 = vpop.f32.mrb[0].mxu0
        %1290 = vmatprep.mubr.bf16.mxu0 %v706
        %1291 = vmatmul.mubr.bf16.gmra.mrb[0].mxu0 %v705
        %v1292 = vpop.f32.mrb[0].mxu0
        %v1293 = vadd.f32 %v1216, %v1292
        %v1294 = vpop.f32.mrb[0].mxu0
        %v1295 = vpop.f32.mrb[0].mxu0
        %v1296 = vadd.f32 %v1216, %v1295
        %v1297 = vpop.f32.mrb[0].mxu0
        %1298 = vmatprep.mubr.bf16.mxu0 %v708
        %1299 = vmatmul.mubr.bf16.gmra.mrb[0].mxu0 %v707
        %v1300 = vpop.f32.mrb[0].mxu0
        %v1301 = vadd.f32 %v1216, %v1300
        %v1302 = vpop.f32.mrb[0].mxu0
        %v1303 = vpop.f32.mrb[0].mxu0
        %v1304 = vadd.f32 %v1216, %v1303
        %v1305 = vpop.f32.mrb[0].mxu0
        %1306 = vmatprep.mubr.bf16.mxu0 %v710
        %1307 = vmatmul.mubr.bf16.gmra.mrb[0].mxu0 %v709
        %v1308 = vpop.f32.mrb[0].mxu0
        %v1309 = vadd.f32 %v1216, %v1308
        %v1310 = vpop.f32.mrb[0].mxu0
        %v1311 = vpop.f32.mrb[0].mxu0
        %v1312 = vadd.f32 %v1216, %v1311
        %v1313 = vpop.f32.mrb[0].mxu0
        %1314 = vmatprep.mubr.bf16.mxu0 %v712
        %1315 = vmatmul.mubr.bf16.gmra.mrb[0].mxu0 %v711
        %v1316 = vpop.f32.mrb[0].mxu0
        %v1317 = vadd.f32 %v1216, %v1316
        %v1318 = vpop.f32.mrb[0].mxu0
        %v1319 = vpop.f32.mrb[0].mxu0
        %v1320 = vadd.f32 %v1216, %v1319
        %v1321 = vpop.f32.mrb[0].mxu0
        %1322 = vmatprep.mubr.bf16.mxu0 %v714
        %1323 = vmatmul.mubr.bf16.gmra.mrb[0].mxu0 %v713
        %v1324 = vpop.f32.mrb[0].mxu0
        %v1325 = vadd.f32 %v1216, %v1324
        %v1326 = vpop.f32.mrb[0].mxu0
        %v1327 = vpop.f32.mrb[0].mxu0
        %v1328 = vadd.f32 %v1216, %v1327
        %v1329 = vpop.f32.mrb[0].mxu0
        %1330 = vmatprep.mubr.bf16.mxu0 %v716
        %1331 = vmatmul.mubr.bf16.gmra.mrb[0].mxu0 %v715
        %v1332 = vpop.f32.mrb[0].mxu0
        %v1333 = vadd.f32 %v1216, %v1332
        %v1334 = vpop.f32.mrb[0].mxu0
        %v1335 = vpop.f32.mrb[0].mxu0
        %v1336 = vadd.f32 %v1216, %v1335
        %v1337 = vpop.f32.mrb[0].mxu0
        %1338 = vmatprep.mubr.bf16.mxu0 %v718
        %1339 = vmatmul.mubr.bf16.gmra.mrb[0].mxu0 %v717
        %v1340 = vpop.f32.mrb[0].mxu0
        %v1341 = vadd.f32 %v1216, %v1340
        %v1342 = vpop.f32.mrb[0].mxu0
        %v1343 = vpop.f32.mrb[0].mxu0
        %v1344 = vadd.f32 %v1216, %v1343
        %v1345 = vpop.f32.mrb[0].mxu0
        %1346 = vmatprep.mubr.bf16.mxu0 %v720
        %1347 = vmatmul.mubr.bf16.gmra.mrb[0].mxu0 %v719
        %v1348 = vpop.f32.mrb[0].mxu0
        %v1349 = vadd.f32 %v1216, %v1348
        %v1350 = vpop.f32.mrb[0].mxu0
        %v1351 = vpop.f32.mrb[0].mxu0
        %v1352 = vadd.f32 %v1216, %v1351
        %v1353 = vpop.f32.mrb[0].mxu0
        %1354 = vmatprep.mubr.bf16.mxu0 %v722
        %1355 = vmatmul.mubr.bf16.gmra.mrb[0].mxu0 %v721
        %v1356 = vpop.f32.mrb[0].mxu0
        %v1357 = vadd.f32 %v1216, %v1356
        %v1358 = vpop.f32.mrb[0].mxu0
        %v1359 = vpop.f32.mrb[0].mxu0
        %v1360 = vadd.f32 %v1216, %v1359
        %v1361 = vpop.f32.mrb[0].mxu0
        %1362 = vmatprep.mubr.bf16.mxu0 %v724
        %1363 = vmatmul.mubr.bf16.gmra.mrb[0].mxu0 %v723
        %v1364 = vpop.f32.mrb[0].mxu0
        %v1365 = vadd.f32 %v1216, %v1364
        %v1366 = vpop.f32.mrb[0].mxu0
        %v1367 = vpop.f32.mrb[0].mxu0
        %v1368 = vadd.f32 %v1216, %v1367
        %v1369 = vpop.f32.mrb[0].mxu0
        %1370 = vmatprep.mubr.bf16.mxu0 %v726
        %1371 = vmatmul.mubr.bf16.gmra.mrb[0].mxu0 %v725
        %v1372 = vpop.f32.mrb[0].mxu0
        %v1373 = vadd.f32 %v1216, %v1372
        %v1374 = vpop.f32.mrb[0].mxu0
        %v1375 = vpop.f32.mrb[0].mxu0
        %v1376 = vadd.f32 %v1216, %v1375
        %v1377 = vpop.f32.mrb[0].mxu0
        %1378 = vdwg.mxu0
        %v1379 = vmax.f32 %v1253, 0.0
        %v1380 = vmax.f32 %v1256, 0.0
        %v1381 = vmax.f32 %v1261, 0.0
        %v1382 = vmax.f32 %v1264, 0.0
        %v1383 = vmax.f32 %v1269, 0.0
        %v1384 = vmax.f32 %v1272, 0.0
        %v1385 = vmax.f32 %v1277, 0.0
        %v1386 = vmax.f32 %v1280, 0.0
        %v1387 = vmax.f32 %v1285, 0.0
        %v1388 = vmax.f32 %v1288, 0.0
        %v1389 = vmax.f32 %v1293, 0.0
        %v1390 = vmax.f32 %v1296, 0.0
        %v1391 = vmax.f32 %v1301, 0.0
        %v1392 = vmax.f32 %v1304, 0.0
        %v1393 = vmax.f32 %v1309, 0.0
        %v1394 = vmax.f32 %v1312, 0.0
        %v1395 = vmax.f32 %v1317, 0.0
        %v1396 = vmax.f32 %v1320, 0.0
        %v1397 = vmax.f32 %v1325, 0.0
        %v1398 = vmax.f32 %v1328, 0.0
        %v1399 = vmax.f32 %v1333, 0.0
        %v1400 = vmax.f32 %v1336, 0.0
        %v1401 = vmax.f32 %v1341, 0.0
        %v1402 = vmax.f32 %v1344, 0.0
        %v1403 = vmax.f32 %v1349, 0.0
        %v1404 = vmax.f32 %v1352, 0.0
        %v1405 = vmax.f32 %v1357, 0.0
        %v1406 = vmax.f32 %v1360, 0.0
        %v1407 = vmax.f32 %v1365, 0.0
        %v1408 = vmax.f32 %v1368, 0.0
        %v1409 = vmax.f32 %v1373, 0.0
        %v1410 = vmax.f32 %v1376, 0.0
        %v1411 = vpack.c.bf16 %v1380, %v1379
        %v1412 = vpack.c.bf16 %v1382, %v1381
        %v1413 = vpack.c.bf16 %v1384, %v1383
        %v1414 = vpack.c.bf16 %v1386, %v1385
        %v1415 = vpack.c.bf16 %v1388, %v1387
        %v1416 = vpack.c.bf16 %v1390, %v1389
        %v1417 = vpack.c.bf16 %v1392, %v1391
        %v1418 = vpack.c.bf16 %v1394, %v1393
        %v1419 = vpack.c.bf16 %v1396, %v1395
        %v1420 = vpack.c.bf16 %v1398, %v1397
        %v1421 = vpack.c.bf16 %v1400, %v1399
        %v1422 = vpack.c.bf16 %v1402, %v1401
        %v1423 = vpack.c.bf16 %v1404, %v1403
        %v1424 = vpack.c.bf16 %v1406, %v1405
        %v1425 = vpack.c.bf16 %v1408, %v1407
        %v1426 = vpack.c.bf16 %v1410, %v1409
        %s1427 = scalar_lea.vmem [#allocation7], 128
        %v1428 = vld [vmem:[%s1427] sm:$0xf]
        %v1429 = vld [vmem:[%s1427 + $0x4] sm:$0xf]
        %v1430 = vld [vmem:[%s1427 + $0x8] sm:$0xf]
        %v1431 = vld [vmem:[%s1427 + $0xc] sm:$0xf]
        %v1432 = vld [vmem:[%s1427 + $0x10] sm:$0xf]
        %v1433 = vld [vmem:[%s1427 + $0x14] sm:$0xf]
        %v1434 = vld [vmem:[%s1427 + $0x18] sm:$0xf]
        %v1435 = vld [vmem:[%s1427 + $0x1c] sm:$0xf]
        %v1436 = vld [vmem:[%s1427 + $0x20] sm:$0xf]
        %v1437 = vld [vmem:[%s1427 + $0x24] sm:$0xf]
        %v1438 = vld [vmem:[%s1427 + $0x28] sm:$0xf]
        %v1439 = vld [vmem:[%s1427 + $0x2c] sm:$0xf]
        %v1440 = vld [vmem:[%s1427 + $0x30] sm:$0xf]
        %v1441 = vld [vmem:[%s1427 + $0x34] sm:$0xf]
        %v1442 = vld [vmem:[%s1427 + $0x38] sm:$0xf]
        %v1443 = vld [vmem:[%s1427 + $0x3c] sm:$0xf]
        %v1460 = vunpack.c.l.b16 %v1428
        %v1461 = vunpack.c.l.b16 %v1429
        %v1462 = vunpack.c.l.b16 %v1430
        %v1463 = vunpack.c.l.b16 %v1431
        %v1464 = vunpack.c.l.b16 %v1432
        %v1465 = vunpack.c.l.b16 %v1433
        %v1466 = vunpack.c.l.b16 %v1434
        %v1467 = vunpack.c.l.b16 %v1435
        %v1468 = vunpack.c.l.b16 %v1436
        %v1469 = vunpack.c.l.b16 %v1437
        %v1470 = vunpack.c.l.b16 %v1438
        %v1471 = vunpack.c.l.b16 %v1439
        %v1472 = vunpack.c.l.b16 %v1440
        %v1473 = vunpack.c.l.b16 %v1441
        %v1474 = vunpack.c.l.b16 %v1442
        %v1475 = vunpack.c.l.b16 %v1443
        %v1476 = vpack.c.b16 %v1461, %v1460
        %v1477 = vpack.c.b16 %v1463, %v1462
        %v1478 = vpack.c.b16 %v1465, %v1464
        %v1479 = vpack.c.b16 %v1467, %v1466
        %v1480 = vpack.c.b16 %v1469, %v1468
        %v1481 = vpack.c.b16 %v1471, %v1470
        %v1482 = vpack.c.b16 %v1473, %v1472
        %v1483 = vpack.c.b16 %v1475, %v1474
        %1492 = vmatprep.subr.bf16.mxu0 0
        %1493 = vmatpush1.bf16.msra.mxu0 %v1476
        %1494 = vmatprep.subr.bf16.mxu0 0
        %1495 = vmatpush1.bf16.msra.mxu0 %v1477
        %1496 = vmatprep.subr.bf16.mxu0 0
        %1497 = vmatpush1.bf16.msra.mxu0 %v1478
        %1498 = vmatprep.subr.bf16.mxu0 0
        %1499 = vmatpush1.bf16.msra.mxu0 %v1479
        %1500 = vmatprep.subr.bf16.mxu0 0
        %1501 = vmatpush1.bf16.msra.mxu0 %v1480
        %1502 = vmatprep.subr.bf16.mxu0 0
        %1503 = vmatpush1.bf16.msra.mxu0 %v1481
        %1504 = vmatprep.subr.bf16.mxu0 0
        %1505 = vmatpush1.bf16.msra.mxu0 %v1482
        %1506 = vmatprep.subr.bf16.mxu0 0
        %1507 = vmatpush1.bf16.msra.mxu0 %v1483
        %1508 = vmatprep.subr.bf16.mxu0 0
        %1509 = vmatpush1.bf16.msra.mxu0 0
        %1510 = vmatprep.subr.bf16.mxu0 0
        %1511 = vmatpush1.bf16.msra.mxu0 0
        %1512 = vmatprep.subr.bf16.mxu0 0
        %1513 = vmatpush1.bf16.msra.mxu0 0
        %1514 = vmatprep.subr.bf16.mxu0 0
        %1515 = vmatpush1.bf16.msra.mxu0 0
        %1516 = vmatprep.subr.bf16.mxu0 0
        %1517 = vmatpush1.bf16.msra.mxu0 0
        %1518 = vmatprep.subr.bf16.mxu0 0
        %1519 = vmatpush1.bf16.msra.mxu0 0
        %1520 = vmatprep.subr.bf16.mxu0 0
        %1521 = vmatpush1.bf16.msra.mxu0 0
        %1522 = vmatprep.subr.bf16.mxu0 0
        %1523 = vmatpush1.bf16.msra.mxu0 0
        %1524 = vmatprep.mubr.bf16.mxu0 0
        %1525 = vmatmul.mubr.bf16.gmra.mrb[0].mxu0 %v1411
        %v1526 = vpop.f32.mrb[0].mxu0
        %v1527 = vadd.f32 0.0, %v1526
        %v1528 = vpop.f32.mrb[0].mxu0
        %v1529 = vpop.f32.mrb[0].mxu0
        %v1530 = vadd.f32 0.0, %v1529
        %v1531 = vpop.f32.mrb[0].mxu0
        %1532 = vmatprep.mubr.bf16.mxu0 0
        %1533 = vmatmul.mubr.bf16.gmra.mrb[0].mxu0 %v1412
        %v1534 = vpop.f32.mrb[0].mxu0
        %v1535 = vadd.f32 0.0, %v1534
        %v1536 = vpop.f32.mrb[0].mxu0
        %v1537 = vpop.f32.mrb[0].mxu0
        %v1538 = vadd.f32 0.0, %v1537
        %v1539 = vpop.f32.mrb[0].mxu0
        %1540 = vmatprep.mubr.bf16.mxu0 0
        %1541 = vmatmul.mubr.bf16.gmra.mrb[0].mxu0 %v1413
        %v1542 = vpop.f32.mrb[0].mxu0
        %v1543 = vadd.f32 0.0, %v1542
        %v1544 = vpop.f32.mrb[0].mxu0
        %v1545 = vpop.f32.mrb[0].mxu0
        %v1546 = vadd.f32 0.0, %v1545
        %v1547 = vpop.f32.mrb[0].mxu0
        %1548 = vmatprep.mubr.bf16.mxu0 0
        %1549 = vmatmul.mubr.bf16.gmra.mrb[0].mxu0 %v1414
        %v1550 = vpop.f32.mrb[0].mxu0
        %v1551 = vadd.f32 0.0, %v1550
        %v1552 = vpop.f32.mrb[0].mxu0
        %v1553 = vpop.f32.mrb[0].mxu0
        %v1554 = vadd.f32 0.0, %v1553
        %v1555 = vpop.f32.mrb[0].mxu0
        %1556 = vmatprep.mubr.bf16.mxu0 0
        %1557 = vmatmul.mubr.bf16.gmra.mrb[0].mxu0 %v1415
        %v1558 = vpop.f32.mrb[0].mxu0
        %v1559 = vadd.f32 0.0, %v1558
        %v1560 = vpop.f32.mrb[0].mxu0
        %v1561 = vpop.f32.mrb[0].mxu0
        %v1562 = vadd.f32 0.0, %v1561
        %v1563 = vpop.f32.mrb[0].mxu0
        %1564 = vmatprep.mubr.bf16.mxu0 0
        %1565 = vmatmul.mubr.bf16.gmra.mrb[0].mxu0 %v1416
        %v1566 = vpop.f32.mrb[0].mxu0
        %v1567 = vadd.f32 0.0, %v1566
        %v1568 = vpop.f32.mrb[0].mxu0
        %v1569 = vpop.f32.mrb[0].mxu0
        %v1570 = vadd.f32 0.0, %v1569
        %v1571 = vpop.f32.mrb[0].mxu0
        %1572 = vmatprep.mubr.bf16.mxu0 0
        %1573 = vmatmul.mubr.bf16.gmra.mrb[0].mxu0 %v1417
        %v1574 = vpop.f32.mrb[0].mxu0
        %v1575 = vadd.f32 0.0, %v1574
        %v1576 = vpop.f32.mrb[0].mxu0
        %v1577 = vpop.f32.mrb[0].mxu0
        %v1578 = vadd.f32 0.0, %v1577
        %v1579 = vpop.f32.mrb[0].mxu0
        %1580 = vmatprep.mubr.bf16.mxu0 0
        %1581 = vmatmul.mubr.bf16.gmra.mrb[0].mxu0 %v1418
        %v1582 = vpop.f32.mrb[0].mxu0
        %v1583 = vadd.f32 0.0, %v1582
        %v1584 = vpop.f32.mrb[0].mxu0
        %v1585 = vpop.f32.mrb[0].mxu0
        %v1586 = vadd.f32 0.0, %v1585
        %v1587 = vpop.f32.mrb[0].mxu0
        %1588 = vmatprep.mubr.bf16.mxu0 0
        %1589 = vmatmul.mubr.bf16.gmra.mrb[0].mxu0 %v1419
        %v1590 = vpop.f32.mrb[0].mxu0
        %v1591 = vadd.f32 0.0, %v1590
        %v1592 = vpop.f32.mrb[0].mxu0
        %v1593 = vpop.f32.mrb[0].mxu0
        %v1594 = vadd.f32 0.0, %v1593
        %v1595 = vpop.f32.mrb[0].mxu0
        %1596 = vmatprep.mubr.bf16.mxu0 0
        %1597 = vmatmul.mubr.bf16.gmra.mrb[0].mxu0 %v1420
        %v1598 = vpop.f32.mrb[0].mxu0
        %v1599 = vadd.f32 0.0, %v1598
        %v1600 = vpop.f32.mrb[0].mxu0
        %v1601 = vpop.f32.mrb[0].mxu0
        %v1602 = vadd.f32 0.0, %v1601
        %v1603 = vpop.f32.mrb[0].mxu0
        %1604 = vmatprep.mubr.bf16.mxu0 0
        %1605 = vmatmul.mubr.bf16.gmra.mrb[0].mxu0 %v1421
        %v1606 = vpop.f32.mrb[0].mxu0
        %v1607 = vadd.f32 0.0, %v1606
        %v1608 = vpop.f32.mrb[0].mxu0
        %v1609 = vpop.f32.mrb[0].mxu0
        %v1610 = vadd.f32 0.0, %v1609
        %v1611 = vpop.f32.mrb[0].mxu0
        %1612 = vmatprep.mubr.bf16.mxu0 0
        %1613 = vmatmul.mubr.bf16.gmra.mrb[0].mxu0 %v1422
        %v1614 = vpop.f32.mrb[0].mxu0
        %v1615 = vadd.f32 0.0, %v1614
        %v1616 = vpop.f32.mrb[0].mxu0
        %v1617 = vpop.f32.mrb[0].mxu0
        %v1618 = vadd.f32 0.0, %v1617
        %v1619 = vpop.f32.mrb[0].mxu0
        %1620 = vmatprep.mubr.bf16.mxu0 0
        %1621 = vmatmul.mubr.bf16.gmra.mrb[0].mxu0 %v1423
        %v1622 = vpop.f32.mrb[0].mxu0
        %v1623 = vadd.f32 0.0, %v1622
        %v1624 = vpop.f32.mrb[0].mxu0
        %v1625 = vpop.f32.mrb[0].mxu0
        %v1626 = vadd.f32 0.0, %v1625
        %v1627 = vpop.f32.mrb[0].mxu0
        %1628 = vmatprep.mubr.bf16.mxu0 0
        %1629 = vmatmul.mubr.bf16.gmra.mrb[0].mxu0 %v1424
        %v1630 = vpop.f32.mrb[0].mxu0
        %v1631 = vadd.f32 0.0, %v1630
        %v1632 = vpop.f32.mrb[0].mxu0
        %v1633 = vpop.f32.mrb[0].mxu0
        %v1634 = vadd.f32 0.0, %v1633
        %v1635 = vpop.f32.mrb[0].mxu0
        %1636 = vmatprep.mubr.bf16.mxu0 0
        %1637 = vmatmul.mubr.bf16.gmra.mrb[0].mxu0 %v1425
        %v1638 = vpop.f32.mrb[0].mxu0
        %v1639 = vadd.f32 0.0, %v1638
        %v1640 = vpop.f32.mrb[0].mxu0
        %v1641 = vpop.f32.mrb[0].mxu0
        %v1642 = vadd.f32 0.0, %v1641
        %v1643 = vpop.f32.mrb[0].mxu0
        %1644 = vmatprep.mubr.bf16.mxu0 0
        %1645 = vmatmul.mubr.bf16.gmra.mrb[0].mxu0 %v1426
        %v1646 = vpop.f32.mrb[0].mxu0
        %v1647 = vadd.f32 0.0, %v1646
        %v1648 = vpop.f32.mrb[0].mxu0
        %v1649 = vpop.f32.mrb[0].mxu0
        %v1650 = vadd.f32 0.0, %v1649
        %v1651 = vpop.f32.mrb[0].mxu0
        %1652 = vdwg.mxu0
        %v1653 = vpack.c.bf16 %v1530, %v1527
        %v1654 = vpack.c.bf16 %v1538, %v1535
        %v1655 = vpack.c.bf16 %v1546, %v1543
        %v1656 = vpack.c.bf16 %v1554, %v1551
        %v1657 = vpack.c.bf16 %v1562, %v1559
        %v1658 = vpack.c.bf16 %v1570, %v1567
        %v1659 = vpack.c.bf16 %v1578, %v1575
        %v1660 = vpack.c.bf16 %v1586, %v1583
        %v1661 = vpack.c.bf16 %v1594, %v1591
        %v1662 = vpack.c.bf16 %v1602, %v1599
        %v1663 = vpack.c.bf16 %v1610, %v1607
        %v1664 = vpack.c.bf16 %v1618, %v1615
        %v1665 = vpack.c.bf16 %v1626, %v1623
        %v1666 = vpack.c.bf16 %v1634, %v1631
        %v1667 = vpack.c.bf16 %v1642, %v1639
        %v1668 = vpack.c.bf16 %v1650, %v1647
        %s1669 = scalar_lea.vmem %s3, 2
        %v1670 = vld [vmem:[%s1669] sm:$0x1]
        %v1672 = vlaneseq
        %v1673 = vshrl.u32 %v1672, 7
        %v1674 = vsub.s32 0, %v1673
        %v1675 = vrot.slane %v1670, %v1674
        %1677 = vmatprep.subr.bf16.mxu0 0
        %1678 = vmatpush1.bf16.msra.mxu0 %v1653
        %1679 = vmatprep.subr.bf16.mxu0 0
        %1680 = vmatpush1.bf16.msra.mxu0 %v1654
        %1681 = vmatprep.subr.bf16.mxu0 0
        %1682 = vmatpush1.bf16.msra.mxu0 %v1655
        %1683 = vmatprep.subr.bf16.mxu0 0
        %1684 = vmatpush1.bf16.msra.mxu0 %v1656
        %1685 = vmatprep.subr.bf16.mxu0 0
        %1686 = vmatpush1.bf16.msra.mxu0 %v1657
        %1687 = vmatprep.subr.bf16.mxu0 0
        %1688 = vmatpush1.bf16.msra.mxu0 %v1658
        %1689 = vmatprep.subr.bf16.mxu0 0
        %1690 = vmatpush1.bf16.msra.mxu0 %v1659
        %1691 = vmatprep.subr.bf16.mxu0 0
        %1692 = vmatpush1.bf16.msra.mxu0 %v1660
        %1693 = vmatprep.subr.bf16.mxu0 0
        %1694 = vmatpush1.bf16.msra.mxu0 %v1661
        %1695 = vmatprep.subr.bf16.mxu0 0
        %1696 = vmatpush1.bf16.msra.mxu0 %v1662
        %1697 = vmatprep.subr.bf16.mxu0 0
        %1698 = vmatpush1.bf16.msra.mxu0 %v1663
        %1699 = vmatprep.subr.bf16.mxu0 0
        %1700 = vmatpush1.bf16.msra.mxu0 %v1664
        %1701 = vmatprep.subr.bf16.mxu0 0
        %1702 = vmatpush1.bf16.msra.mxu0 %v1665
        %1703 = vmatprep.subr.bf16.mxu0 0
        %1704 = vmatpush1.bf16.msra.mxu0 %v1666
        %1705 = vmatprep.subr.bf16.mxu0 0
        %1706 = vmatpush1.bf16.msra.mxu0 %v1667
        %1707 = vmatprep.subr.bf16.mxu0 0
        %1708 = vmatpush1.bf16.msra.mxu0 %v1668
        %1709 = vmatprep.mubr.bf16.mxu0 %v696
        %1710 = vmatmul.mubr.bf16.gmra.mrb[0].mxu0 %v695
        %v1711 = vpop.f32.mrb[0].mxu0
        %v1712 = vadd.f32 %v1675, %v1711
        %v1713 = vpop.f32.mrb[0].mxu0
        %v1714 = vpop.f32.mrb[0].mxu0
        %v1715 = vadd.f32 %v1675, %v1714
        %v1716 = vpop.f32.mrb[0].mxu0
        %1717 = vmatprep.mubr.bf16.mxu0 %v698
        %1718 = vmatmul.mubr.bf16.gmra.mrb[0].mxu0 %v697
        %v1719 = vpop.f32.mrb[0].mxu0
        %v1720 = vadd.f32 %v1675, %v1719
        %v1721 = vpop.f32.mrb[0].mxu0
        %v1722 = vpop.f32.mrb[0].mxu0
        %v1723 = vadd.f32 %v1675, %v1722
        %v1724 = vpop.f32.mrb[0].mxu0
        %1725 = vmatprep.mubr.bf16.mxu0 %v700
        %1726 = vmatmul.mubr.bf16.gmra.mrb[0].mxu0 %v699
        %v1727 = vpop.f32.mrb[0].mxu0
        %v1728 = vadd.f32 %v1675, %v1727
        %v1729 = vpop.f32.mrb[0].mxu0
        %v1730 = vpop.f32.mrb[0].mxu0
        %v1731 = vadd.f32 %v1675, %v1730
        %v1732 = vpop.f32.mrb[0].mxu0
        %1733 = vmatprep.mubr.bf16.mxu0 %v702
        %1734 = vmatmul.mubr.bf16.gmra.mrb[0].mxu0 %v701
        %v1735 = vpop.f32.mrb[0].mxu0
        %v1736 = vadd.f32 %v1675, %v1735
        %v1737 = vpop.f32.mrb[0].mxu0
        %v1738 = vpop.f32.mrb[0].mxu0
        %v1739 = vadd.f32 %v1675, %v1738
        %v1740 = vpop.f32.mrb[0].mxu0
        %1741 = vmatprep.mubr.bf16.mxu0 %v704
        %1742 = vmatmul.mubr.bf16.gmra.mrb[0].mxu0 %v703
        %v1743 = vpop.f32.mrb[0].mxu0
        %v1744 = vadd.f32 %v1675, %v1743
        %v1745 = vpop.f32.mrb[0].mxu0
        %v1746 = vpop.f32.mrb[0].mxu0
        %v1747 = vadd.f32 %v1675, %v1746
        %v1748 = vpop.f32.mrb[0].mxu0
        %1749 = vmatprep.mubr.bf16.mxu0 %v706
        %1750 = vmatmul.mubr.bf16.gmra.mrb[0].mxu0 %v705
        %v1751 = vpop.f32.mrb[0].mxu0
        %v1752 = vadd.f32 %v1675, %v1751
        %v1753 = vpop.f32.mrb[0].mxu0
        %v1754 = vpop.f32.mrb[0].mxu0
        %v1755 = vadd.f32 %v1675, %v1754
        %v1756 = vpop.f32.mrb[0].mxu0
        %1757 = vmatprep.mubr.bf16.mxu0 %v708
        %1758 = vmatmul.mubr.bf16.gmra.mrb[0].mxu0 %v707
        %v1759 = vpop.f32.mrb[0].mxu0
        %v1760 = vadd.f32 %v1675, %v1759
        %v1761 = vpop.f32.mrb[0].mxu0
        %v1762 = vpop.f32.mrb[0].mxu0
        %v1763 = vadd.f32 %v1675, %v1762
        %v1764 = vpop.f32.mrb[0].mxu0
        %1765 = vmatprep.mubr.bf16.mxu0 %v710
        %1766 = vmatmul.mubr.bf16.gmra.mrb[0].mxu0 %v709
        %v1767 = vpop.f32.mrb[0].mxu0
        %v1768 = vadd.f32 %v1675, %v1767
        %v1769 = vpop.f32.mrb[0].mxu0
        %v1770 = vpop.f32.mrb[0].mxu0
        %v1771 = vadd.f32 %v1675, %v1770
        %v1772 = vpop.f32.mrb[0].mxu0
        %1773 = vmatprep.mubr.bf16.mxu0 %v712
        %1774 = vmatmul.mubr.bf16.gmra.mrb[0].mxu0 %v711
        %v1775 = vpop.f32.mrb[0].mxu0
        %v1776 = vadd.f32 %v1675, %v1775
        %v1777 = vpop.f32.mrb[0].mxu0
        %v1778 = vpop.f32.mrb[0].mxu0
        %v1779 = vadd.f32 %v1675, %v1778
        %v1780 = vpop.f32.mrb[0].mxu0
        %1781 = vmatprep.mubr.bf16.mxu0 %v714
        %1782 = vmatmul.mubr.bf16.gmra.mrb[0].mxu0 %v713
        %v1783 = vpop.f32.mrb[0].mxu0
        %v1784 = vadd.f32 %v1675, %v1783
        %v1785 = vpop.f32.mrb[0].mxu0
        %v1786 = vpop.f32.mrb[0].mxu0
        %v1787 = vadd.f32 %v1675, %v1786
        %v1788 = vpop.f32.mrb[0].mxu0
        %1789 = vmatprep.mubr.bf16.mxu0 %v716
        %1790 = vmatmul.mubr.bf16.gmra.mrb[0].mxu0 %v715
        %v1791 = vpop.f32.mrb[0].mxu0
        %v1792 = vadd.f32 %v1675, %v1791
        %v1793 = vpop.f32.mrb[0].mxu0
        %v1794 = vpop.f32.mrb[0].mxu0
        %v1795 = vadd.f32 %v1675, %v1794
        %v1796 = vpop.f32.mrb[0].mxu0
        %1797 = vmatprep.mubr.bf16.mxu0 %v718
        %1798 = vmatmul.mubr.bf16.gmra.mrb[0].mxu0 %v717
        %v1799 = vpop.f32.mrb[0].mxu0
        %v1800 = vadd.f32 %v1675, %v1799
        %v1801 = vpop.f32.mrb[0].mxu0
        %v1802 = vpop.f32.mrb[0].mxu0
        %v1803 = vadd.f32 %v1675, %v1802
        %v1804 = vpop.f32.mrb[0].mxu0
        %1805 = vmatprep.mubr.bf16.mxu0 %v720
        %1806 = vmatmul.mubr.bf16.gmra.mrb[0].mxu0 %v719
        %v1807 = vpop.f32.mrb[0].mxu0
        %v1808 = vadd.f32 %v1675, %v1807
        %v1809 = vpop.f32.mrb[0].mxu0
        %v1810 = vpop.f32.mrb[0].mxu0
        %v1811 = vadd.f32 %v1675, %v1810
        %v1812 = vpop.f32.mrb[0].mxu0
        %1813 = vmatprep.mubr.bf16.mxu0 %v722
        %1814 = vmatmul.mubr.bf16.gmra.mrb[0].mxu0 %v721
        %v1815 = vpop.f32.mrb[0].mxu0
        %v1816 = vadd.f32 %v1675, %v1815
        %v1817 = vpop.f32.mrb[0].mxu0
        %v1818 = vpop.f32.mrb[0].mxu0
        %v1819 = vadd.f32 %v1675, %v1818
        %v1820 = vpop.f32.mrb[0].mxu0
        %1821 = vmatprep.mubr.bf16.mxu0 %v724
        %1822 = vmatmul.mubr.bf16.gmra.mrb[0].mxu0 %v723
        %v1823 = vpop.f32.mrb[0].mxu0
        %v1824 = vadd.f32 %v1675, %v1823
        %v1825 = vpop.f32.mrb[0].mxu0
        %v1826 = vpop.f32.mrb[0].mxu0
        %v1827 = vadd.f32 %v1675, %v1826
        %v1828 = vpop.f32.mrb[0].mxu0
        %1829 = vmatprep.mubr.bf16.mxu0 %v726
        %1830 = vmatmul.mubr.bf16.gmra.mrb[0].mxu0 %v725
        %v1831 = vpop.f32.mrb[0].mxu0
        %v1832 = vadd.f32 %v1675, %v1831
        %v1833 = vpop.f32.mrb[0].mxu0
        %v1834 = vpop.f32.mrb[0].mxu0
        %v1835 = vadd.f32 %v1675, %v1834
        %v1836 = vpop.f32.mrb[0].mxu0
        %1837 = vdwg.mxu0
        %v1838 = vmax.f32 %v1712, 0.0
        %v1839 = vmax.f32 %v1715, 0.0
        %v1840 = vmax.f32 %v1720, 0.0
        %v1841 = vmax.f32 %v1723, 0.0
        %v1842 = vmax.f32 %v1728, 0.0
        %v1843 = vmax.f32 %v1731, 0.0
        %v1844 = vmax.f32 %v1736, 0.0
        %v1845 = vmax.f32 %v1739, 0.0
        %v1846 = vmax.f32 %v1744, 0.0
        %v1847 = vmax.f32 %v1747, 0.0
        %v1848 = vmax.f32 %v1752, 0.0
        %v1849 = vmax.f32 %v1755, 0.0
        %v1850 = vmax.f32 %v1760, 0.0
        %v1851 = vmax.f32 %v1763, 0.0
        %v1852 = vmax.f32 %v1768, 0.0
        %v1853 = vmax.f32 %v1771, 0.0
        %v1854 = vmax.f32 %v1776, 0.0
        %v1855 = vmax.f32 %v1779, 0.0
        %v1856 = vmax.f32 %v1784, 0.0
        %v1857 = vmax.f32 %v1787, 0.0
        %v1858 = vmax.f32 %v1792, 0.0
        %v1859 = vmax.f32 %v1795, 0.0
        %v1860 = vmax.f32 %v1800, 0.0
        %v1861 = vmax.f32 %v1803, 0.0
        %v1862 = vmax.f32 %v1808, 0.0
        %v1863 = vmax.f32 %v1811, 0.0
        %v1864 = vmax.f32 %v1816, 0.0
        %v1865 = vmax.f32 %v1819, 0.0
        %v1866 = vmax.f32 %v1824, 0.0
        %v1867 = vmax.f32 %v1827, 0.0
        %v1868 = vmax.f32 %v1832, 0.0
        %v1869 = vmax.f32 %v1835, 0.0
        %v1870 = vpack.c.bf16 %v1839, %v1838
        %v1871 = vpack.c.bf16 %v1841, %v1840
        %v1872 = vpack.c.bf16 %v1843, %v1842
        %v1873 = vpack.c.bf16 %v1845, %v1844
        %v1874 = vpack.c.bf16 %v1847, %v1846
        %v1875 = vpack.c.bf16 %v1849, %v1848
        %v1876 = vpack.c.bf16 %v1851, %v1850
        %v1877 = vpack.c.bf16 %v1853, %v1852
        %v1878 = vpack.c.bf16 %v1855, %v1854
        %v1879 = vpack.c.bf16 %v1857, %v1856
        %v1880 = vpack.c.bf16 %v1859, %v1858
        %v1881 = vpack.c.bf16 %v1861, %v1860
        %v1882 = vpack.c.bf16 %v1863, %v1862
        %v1883 = vpack.c.bf16 %v1865, %v1864
        %v1884 = vpack.c.bf16 %v1867, %v1866
        %v1885 = vpack.c.bf16 %v1869, %v1868
        %s1886 = scalar_lea.vmem [#allocation7], 192
        %v1887 = vld [vmem:[%s1886] sm:$0xf]
        %v1888 = vld [vmem:[%s1886 + $0x4] sm:$0xf]
        %v1889 = vld [vmem:[%s1886 + $0x8] sm:$0xf]
        %v1890 = vld [vmem:[%s1886 + $0xc] sm:$0xf]
        %v1891 = vld [vmem:[%s1886 + $0x10] sm:$0xf]
        %v1892 = vld [vmem:[%s1886 + $0x14] sm:$0xf]
        %v1893 = vld [vmem:[%s1886 + $0x18] sm:$0xf]
        %v1894 = vld [vmem:[%s1886 + $0x1c] sm:$0xf]
        %v1895 = vld [vmem:[%s1886 + $0x20] sm:$0xf]
        %v1896 = vld [vmem:[%s1886 + $0x24] sm:$0xf]
        %v1897 = vld [vmem:[%s1886 + $0x28] sm:$0xf]
        %v1898 = vld [vmem:[%s1886 + $0x2c] sm:$0xf]
        %v1899 = vld [vmem:[%s1886 + $0x30] sm:$0xf]
        %v1900 = vld [vmem:[%s1886 + $0x34] sm:$0xf]
        %v1901 = vld [vmem:[%s1886 + $0x38] sm:$0xf]
        %v1902 = vld [vmem:[%s1886 + $0x3c] sm:$0xf]
        %v1919 = vunpack.c.l.b16 %v1887
        %v1920 = vunpack.c.l.b16 %v1888
        %v1921 = vunpack.c.l.b16 %v1889
        %v1922 = vunpack.c.l.b16 %v1890
        %v1923 = vunpack.c.l.b16 %v1891
        %v1924 = vunpack.c.l.b16 %v1892
        %v1925 = vunpack.c.l.b16 %v1893
        %v1926 = vunpack.c.l.b16 %v1894
        %v1927 = vunpack.c.l.b16 %v1895
        %v1928 = vunpack.c.l.b16 %v1896
        %v1929 = vunpack.c.l.b16 %v1897
        %v1930 = vunpack.c.l.b16 %v1898
        %v1931 = vunpack.c.l.b16 %v1899
        %v1932 = vunpack.c.l.b16 %v1900
        %v1933 = vunpack.c.l.b16 %v1901
        %v1934 = vunpack.c.l.b16 %v1902
        %v1935 = vpack.c.b16 %v1920, %v1919
        %v1936 = vpack.c.b16 %v1922, %v1921
        %v1937 = vpack.c.b16 %v1924, %v1923
        %v1938 = vpack.c.b16 %v1926, %v1925
        %v1939 = vpack.c.b16 %v1928, %v1927
        %v1940 = vpack.c.b16 %v1930, %v1929
        %v1941 = vpack.c.b16 %v1932, %v1931
        %v1942 = vpack.c.b16 %v1934, %v1933
        %1951 = vmatprep.subr.bf16.mxu0 0
        %1952 = vmatpush1.bf16.msra.mxu0 %v1935
        %1953 = vmatprep.subr.bf16.mxu0 0
        %1954 = vmatpush1.bf16.msra.mxu0 %v1936
        %1955 = vmatprep.subr.bf16.mxu0 0
        %1956 = vmatpush1.bf16.msra.mxu0 %v1937
        %1957 = vmatprep.subr.bf16.mxu0 0
        %1958 = vmatpush1.bf16.msra.mxu0 %v1938
        %1959 = vmatprep.subr.bf16.mxu0 0
        %1960 = vmatpush1.bf16.msra.mxu0 %v1939
        %1961 = vmatprep.subr.bf16.mxu0 0
        %1962 = vmatpush1.bf16.msra.mxu0 %v1940
        %1963 = vmatprep.subr.bf16.mxu0 0
        %1964 = vmatpush1.bf16.msra.mxu0 %v1941
        %1965 = vmatprep.subr.bf16.mxu0 0
        %1966 = vmatpush1.bf16.msra.mxu0 %v1942
        %1967 = vmatprep.subr.bf16.mxu0 0
        %1968 = vmatpush1.bf16.msra.mxu0 0
        %1969 = vmatprep.subr.bf16.mxu0 0
        %1970 = vmatpush1.bf16.msra.mxu0 0
        %1971 = vmatprep.subr.bf16.mxu0 0
        %1972 = vmatpush1.bf16.msra.mxu0 0
        %1973 = vmatprep.subr.bf16.mxu0 0
        %1974 = vmatpush1.bf16.msra.mxu0 0
        %1975 = vmatprep.subr.bf16.mxu0 0
        %1976 = vmatpush1.bf16.msra.mxu0 0
        %1977 = vmatprep.subr.bf16.mxu0 0
        %1978 = vmatpush1.bf16.msra.mxu0 0
        %1979 = vmatprep.subr.bf16.mxu0 0
        %1980 = vmatpush1.bf16.msra.mxu0 0
        %1981 = vmatprep.subr.bf16.mxu0 0
        %1982 = vmatpush1.bf16.msra.mxu0 0
        %1983 = vmatprep.mubr.bf16.mxu0 0
        %1984 = vmatmul.mubr.bf16.gmra.mrb[0].mxu0 %v1870
        %v1985 = vpop.f32.mrb[0].mxu0
        %v1986 = vadd.f32 0.0, %v1985
        %v1987 = vpop.f32.mrb[0].mxu0
        %v1988 = vpop.f32.mrb[0].mxu0
        %v1989 = vadd.f32 0.0, %v1988
        %v1990 = vpop.f32.mrb[0].mxu0
        %1991 = vmatprep.mubr.bf16.mxu0 0
        %1992 = vmatmul.mubr.bf16.gmra.mrb[0].mxu0 %v1871
        %v1993 = vpop.f32.mrb[0].mxu0
        %v1994 = vadd.f32 0.0, %v1993
        %v1995 = vpop.f32.mrb[0].mxu0
        %v1996 = vpop.f32.mrb[0].mxu0
        %v1997 = vadd.f32 0.0, %v1996
        %v1998 = vpop.f32.mrb[0].mxu0
        %1999 = vmatprep.mubr.bf16.mxu0 0
        %2000 = vmatmul.mubr.bf16.gmra.mrb[0].mxu0 %v1872
        %v2001 = vpop.f32.mrb[0].mxu0
        %v2002 = vadd.f32 0.0, %v2001
        %v2003 = vpop.f32.mrb[0].mxu0
        %v2004 = vpop.f32.mrb[0].mxu0
        %v2005 = vadd.f32 0.0, %v2004
        %v2006 = vpop.f32.mrb[0].mxu0
        %2007 = vmatprep.mubr.bf16.mxu0 0
        %2008 = vmatmul.mubr.bf16.gmra.mrb[0].mxu0 %v1873
        %v2009 = vpop.f32.mrb[0].mxu0
        %v2010 = vadd.f32 0.0, %v2009
        %v2011 = vpop.f32.mrb[0].mxu0
        %v2012 = vpop.f32.mrb[0].mxu0
        %v2013 = vadd.f32 0.0, %v2012
        %v2014 = vpop.f32.mrb[0].mxu0
        %2015 = vmatprep.mubr.bf16.mxu0 0
        %2016 = vmatmul.mubr.bf16.gmra.mrb[0].mxu0 %v1874
        %v2017 = vpop.f32.mrb[0].mxu0
        %v2018 = vadd.f32 0.0, %v2017
        %v2019 = vpop.f32.mrb[0].mxu0
        %v2020 = vpop.f32.mrb[0].mxu0
        %v2021 = vadd.f32 0.0, %v2020
        %v2022 = vpop.f32.mrb[0].mxu0
        %2023 = vmatprep.mubr.bf16.mxu0 0
        %2024 = vmatmul.mubr.bf16.gmra.mrb[0].mxu0 %v1875
        %v2025 = vpop.f32.mrb[0].mxu0
        %v2026 = vadd.f32 0.0, %v2025
        %v2027 = vpop.f32.mrb[0].mxu0
        %v2028 = vpop.f32.mrb[0].mxu0
        %v2029 = vadd.f32 0.0, %v2028
        %v2030 = vpop.f32.mrb[0].mxu0
        %2031 = vmatprep.mubr.bf16.mxu0 0
        %2032 = vmatmul.mubr.bf16.gmra.mrb[0].mxu0 %v1876
        %v2033 = vpop.f32.mrb[0].mxu0
        %v2034 = vadd.f32 0.0, %v2033
        %v2035 = vpop.f32.mrb[0].mxu0
        %v2036 = vpop.f32.mrb[0].mxu0
        %v2037 = vadd.f32 0.0, %v2036
        %v2038 = vpop.f32.mrb[0].mxu0
        %2039 = vmatprep.mubr.bf16.mxu0 0
        %2040 = vmatmul.mubr.bf16.gmra.mrb[0].mxu0 %v1877
        %v2041 = vpop.f32.mrb[0].mxu0
        %v2042 = vadd.f32 0.0, %v2041
        %v2043 = vpop.f32.mrb[0].mxu0
        %v2044 = vpop.f32.mrb[0].mxu0
        %v2045 = vadd.f32 0.0, %v2044
        %v2046 = vpop.f32.mrb[0].mxu0
        %2047 = vmatprep.mubr.bf16.mxu0 0
        %2048 = vmatmul.mubr.bf16.gmra.mrb[0].mxu0 %v1878
        %v2049 = vpop.f32.mrb[0].mxu0
        %v2050 = vadd.f32 0.0, %v2049
        %v2051 = vpop.f32.mrb[0].mxu0
        %v2052 = vpop.f32.mrb[0].mxu0
        %v2053 = vadd.f32 0.0, %v2052
        %v2054 = vpop.f32.mrb[0].mxu0
        %2055 = vmatprep.mubr.bf16.mxu0 0
        %2056 = vmatmul.mubr.bf16.gmra.mrb[0].mxu0 %v1879
        %v2057 = vpop.f32.mrb[0].mxu0
        %v2058 = vadd.f32 0.0, %v2057
        %v2059 = vpop.f32.mrb[0].mxu0
        %v2060 = vpop.f32.mrb[0].mxu0
        %v2061 = vadd.f32 0.0, %v2060
        %v2062 = vpop.f32.mrb[0].mxu0
        %2063 = vmatprep.mubr.bf16.mxu0 0
        %2064 = vmatmul.mubr.bf16.gmra.mrb[0].mxu0 %v1880
        %v2065 = vpop.f32.mrb[0].mxu0
        %v2066 = vadd.f32 0.0, %v2065
        %v2067 = vpop.f32.mrb[0].mxu0
        %v2068 = vpop.f32.mrb[0].mxu0
        %v2069 = vadd.f32 0.0, %v2068
        %v2070 = vpop.f32.mrb[0].mxu0
        %2071 = vmatprep.mubr.bf16.mxu0 0
        %2072 = vmatmul.mubr.bf16.gmra.mrb[0].mxu0 %v1881
        %v2073 = vpop.f32.mrb[0].mxu0
        %v2074 = vadd.f32 0.0, %v2073
        %v2075 = vpop.f32.mrb[0].mxu0
        %v2076 = vpop.f32.mrb[0].mxu0
        %v2077 = vadd.f32 0.0, %v2076
        %v2078 = vpop.f32.mrb[0].mxu0
        %2079 = vmatprep.mubr.bf16.mxu0 0
        %2080 = vmatmul.mubr.bf16.gmra.mrb[0].mxu0 %v1882
        %v2081 = vpop.f32.mrb[0].mxu0
        %v2082 = vadd.f32 0.0, %v2081
        %v2083 = vpop.f32.mrb[0].mxu0
        %v2084 = vpop.f32.mrb[0].mxu0
        %v2085 = vadd.f32 0.0, %v2084
        %v2086 = vpop.f32.mrb[0].mxu0
        %2087 = vmatprep.mubr.bf16.mxu0 0
        %2088 = vmatmul.mubr.bf16.gmra.mrb[0].mxu0 %v1883
        %v2089 = vpop.f32.mrb[0].mxu0
        %v2090 = vadd.f32 0.0, %v2089
        %v2091 = vpop.f32.mrb[0].mxu0
        %v2092 = vpop.f32.mrb[0].mxu0
        %v2093 = vadd.f32 0.0, %v2092
        %v2094 = vpop.f32.mrb[0].mxu0
        %2095 = vmatprep.mubr.bf16.mxu0 0
        %2096 = vmatmul.mubr.bf16.gmra.mrb[0].mxu0 %v1884
        %v2097 = vpop.f32.mrb[0].mxu0
        %v2098 = vadd.f32 0.0, %v2097
        %v2099 = vpop.f32.mrb[0].mxu0
        %v2100 = vpop.f32.mrb[0].mxu0
        %v2101 = vadd.f32 0.0, %v2100
        %v2102 = vpop.f32.mrb[0].mxu0
        %2103 = vmatprep.mubr.bf16.mxu0 0
        %2104 = vmatmul.mubr.bf16.gmra.mrb[0].mxu0 %v1885
        %v2105 = vpop.f32.mrb[0].mxu0
        %v2106 = vadd.f32 0.0, %v2105
        %v2107 = vpop.f32.mrb[0].mxu0
        %v2108 = vpop.f32.mrb[0].mxu0
        %v2109 = vadd.f32 0.0, %v2108
        %v2110 = vpop.f32.mrb[0].mxu0
        %2111 = vdwg.mxu0
        %v2112 = vpack.c.bf16 %v1989, %v1986
        %v2113 = vpack.c.bf16 %v1997, %v1994
        %v2114 = vpack.c.bf16 %v2005, %v2002
        %v2115 = vpack.c.bf16 %v2013, %v2010
        %v2116 = vpack.c.bf16 %v2021, %v2018
        %v2117 = vpack.c.bf16 %v2029, %v2026
        %v2118 = vpack.c.bf16 %v2037, %v2034
        %v2119 = vpack.c.bf16 %v2045, %v2042
        %v2120 = vpack.c.bf16 %v2053, %v2050
        %v2121 = vpack.c.bf16 %v2061, %v2058
        %v2122 = vpack.c.bf16 %v2069, %v2066
        %v2123 = vpack.c.bf16 %v2077, %v2074
        %v2124 = vpack.c.bf16 %v2085, %v2082
        %v2125 = vpack.c.bf16 %v2093, %v2090
        %v2126 = vpack.c.bf16 %v2101, %v2098
        %v2127 = vpack.c.bf16 %v2109, %v2106
        %s2128 = scalar_lea.vmem %s3, 3
        %v2129 = vld [vmem:[%s2128] sm:$0x1]
        %v2131 = vlaneseq
        %v2132 = vshrl.u32 %v2131, 7
        %v2133 = vsub.s32 0, %v2132
        %v2134 = vrot.slane %v2129, %v2133
        %2136 = vmatprep.subr.bf16.mxu0 0
        %2137 = vmatpush1.bf16.msra.mxu0 %v2112
        %2138 = vmatprep.subr.bf16.mxu0 0
        %2139 = vmatpush1.bf16.msra.mxu0 %v2113
        %2140 = vmatprep.subr.bf16.mxu0 0
        %2141 = vmatpush1.bf16.msra.mxu0 %v2114
        %2142 = vmatprep.subr.bf16.mxu0 0
        %2143 = vmatpush1.bf16.msra.mxu0 %v2115
        %2144 = vmatprep.subr.bf16.mxu0 0
        %2145 = vmatpush1.bf16.msra.mxu0 %v2116
        %2146 = vmatprep.subr.bf16.mxu0 0
        %2147 = vmatpush1.bf16.msra.mxu0 %v2117
        %2148 = vmatprep.subr.bf16.mxu0 0
        %2149 = vmatpush1.bf16.msra.mxu0 %v2118
        %2150 = vmatprep.subr.bf16.mxu0 0
        %2151 = vmatpush1.bf16.msra.mxu0 %v2119
        %2152 = vmatprep.subr.bf16.mxu0 0
        %2153 = vmatpush1.bf16.msra.mxu0 %v2120
        %2154 = vmatprep.subr.bf16.mxu0 0
        %2155 = vmatpush1.bf16.msra.mxu0 %v2121
        %2156 = vmatprep.subr.bf16.mxu0 0
        %2157 = vmatpush1.bf16.msra.mxu0 %v2122
        %2158 = vmatprep.subr.bf16.mxu0 0
        %2159 = vmatpush1.bf16.msra.mxu0 %v2123
        %2160 = vmatprep.subr.bf16.mxu0 0
        %2161 = vmatpush1.bf16.msra.mxu0 %v2124
        %2162 = vmatprep.subr.bf16.mxu0 0
        %2163 = vmatpush1.bf16.msra.mxu0 %v2125
        %2164 = vmatprep.subr.bf16.mxu0 0
        %2165 = vmatpush1.bf16.msra.mxu0 %v2126
        %2166 = vmatprep.subr.bf16.mxu0 0
        %2167 = vmatpush1.bf16.msra.mxu0 %v2127
        %2168 = vmatprep.mubr.bf16.mxu0 %v696
        %2169 = vmatmul.mubr.bf16.gmra.mrb[0].mxu0 %v695
        %v2170 = vpop.f32.mrb[0].mxu0
        %v2171 = vadd.f32 %v2134, %v2170
        %v2172 = vpop.f32.mrb[0].mxu0
        %v2173 = vpop.f32.mrb[0].mxu0
        %v2174 = vadd.f32 %v2134, %v2173
        %v2175 = vpop.f32.mrb[0].mxu0
        %2176 = vmatprep.mubr.bf16.mxu0 %v698
        %2177 = vmatmul.mubr.bf16.gmra.mrb[0].mxu0 %v697
        %v2178 = vpop.f32.mrb[0].mxu0
        %v2179 = vadd.f32 %v2134, %v2178
        %v2180 = vpop.f32.mrb[0].mxu0
        %v2181 = vpop.f32.mrb[0].mxu0
        %v2182 = vadd.f32 %v2134, %v2181
        %v2183 = vpop.f32.mrb[0].mxu0
        %2184 = vmatprep.mubr.bf16.mxu0 %v700
        %2185 = vmatmul.mubr.bf16.gmra.mrb[0].mxu0 %v699
        %v2186 = vpop.f32.mrb[0].mxu0
        %v2187 = vadd.f32 %v2134, %v2186
        %v2188 = vpop.f32.mrb[0].mxu0
        %v2189 = vpop.f32.mrb[0].mxu0
        %v2190 = vadd.f32 %v2134, %v2189
        %v2191 = vpop.f32.mrb[0].mxu0
        %2192 = vmatprep.mubr.bf16.mxu0 %v702
        %2193 = vmatmul.mubr.bf16.gmra.mrb[0].mxu0 %v701
        %v2194 = vpop.f32.mrb[0].mxu0
        %v2195 = vadd.f32 %v2134, %v2194
        %v2196 = vpop.f32.mrb[0].mxu0
        %v2197 = vpop.f32.mrb[0].mxu0
        %v2198 = vadd.f32 %v2134, %v2197
        %v2199 = vpop.f32.mrb[0].mxu0
        %2200 = vmatprep.mubr.bf16.mxu0 %v704
        %2201 = vmatmul.mubr.bf16.gmra.mrb[0].mxu0 %v703
        %v2202 = vpop.f32.mrb[0].mxu0
        %v2203 = vadd.f32 %v2134, %v2202
        %v2204 = vpop.f32.mrb[0].mxu0
        %v2205 = vpop.f32.mrb[0].mxu0
        %v2206 = vadd.f32 %v2134, %v2205
        %v2207 = vpop.f32.mrb[0].mxu0
        %2208 = vmatprep.mubr.bf16.mxu0 %v706
        %2209 = vmatmul.mubr.bf16.gmra.mrb[0].mxu0 %v705
        %v2210 = vpop.f32.mrb[0].mxu0
        %v2211 = vadd.f32 %v2134, %v2210
        %v2212 = vpop.f32.mrb[0].mxu0
        %v2213 = vpop.f32.mrb[0].mxu0
        %v2214 = vadd.f32 %v2134, %v2213
        %v2215 = vpop.f32.mrb[0].mxu0
        %2216 = vmatprep.mubr.bf16.mxu0 %v708
        %2217 = vmatmul.mubr.bf16.gmra.mrb[0].mxu0 %v707
        %v2218 = vpop.f32.mrb[0].mxu0
        %v2219 = vadd.f32 %v2134, %v2218
        %v2220 = vpop.f32.mrb[0].mxu0
        %v2221 = vpop.f32.mrb[0].mxu0
        %v2222 = vadd.f32 %v2134, %v2221
        %v2223 = vpop.f32.mrb[0].mxu0
        %2224 = vmatprep.mubr.bf16.mxu0 %v710
        %2225 = vmatmul.mubr.bf16.gmra.mrb[0].mxu0 %v709
        %v2226 = vpop.f32.mrb[0].mxu0
        %v2227 = vadd.f32 %v2134, %v2226
        %v2228 = vpop.f32.mrb[0].mxu0
        %v2229 = vpop.f32.mrb[0].mxu0
        %v2230 = vadd.f32 %v2134, %v2229
        %v2231 = vpop.f32.mrb[0].mxu0
        %2232 = vmatprep.mubr.bf16.mxu0 %v712
        %2233 = vmatmul.mubr.bf16.gmra.mrb[0].mxu0 %v711
        %v2234 = vpop.f32.mrb[0].mxu0
        %v2235 = vadd.f32 %v2134, %v2234
        %v2236 = vpop.f32.mrb[0].mxu0
        %v2237 = vpop.f32.mrb[0].mxu0
        %v2238 = vadd.f32 %v2134, %v2237
        %v2239 = vpop.f32.mrb[0].mxu0
        %2240 = vmatprep.mubr.bf16.mxu0 %v714
        %2241 = vmatmul.mubr.bf16.gmra.mrb[0].mxu0 %v713
        %v2242 = vpop.f32.mrb[0].mxu0
        %v2243 = vadd.f32 %v2134, %v2242
        %v2244 = vpop.f32.mrb[0].mxu0
        %v2245 = vpop.f32.mrb[0].mxu0
        %v2246 = vadd.f32 %v2134, %v2245
        %v2247 = vpop.f32.mrb[0].mxu0
        %2248 = vmatprep.mubr.bf16.mxu0 %v716
        %2249 = vmatmul.mubr.bf16.gmra.mrb[0].mxu0 %v715
        %v2250 = vpop.f32.mrb[0].mxu0
        %v2251 = vadd.f32 %v2134, %v2250
        %v2252 = vpop.f32.mrb[0].mxu0
        %v2253 = vpop.f32.mrb[0].mxu0
        %v2254 = vadd.f32 %v2134, %v2253
        %v2255 = vpop.f32.mrb[0].mxu0
        %2256 = vmatprep.mubr.bf16.mxu0 %v718
        %2257 = vmatmul.mubr.bf16.gmra.mrb[0].mxu0 %v717
        %v2258 = vpop.f32.mrb[0].mxu0
        %v2259 = vadd.f32 %v2134, %v2258
        %v2260 = vpop.f32.mrb[0].mxu0
        %v2261 = vpop.f32.mrb[0].mxu0
        %v2262 = vadd.f32 %v2134, %v2261
        %v2263 = vpop.f32.mrb[0].mxu0
        %2264 = vmatprep.mubr.bf16.mxu0 %v720
        %2265 = vmatmul.mubr.bf16.gmra.mrb[0].mxu0 %v719
        %v2266 = vpop.f32.mrb[0].mxu0
        %v2267 = vadd.f32 %v2134, %v2266
        %v2268 = vpop.f32.mrb[0].mxu0
        %v2269 = vpop.f32.mrb[0].mxu0
        %v2270 = vadd.f32 %v2134, %v2269
        %v2271 = vpop.f32.mrb[0].mxu0
        %2272 = vmatprep.mubr.bf16.mxu0 %v722
        %2273 = vmatmul.mubr.bf16.gmra.mrb[0].mxu0 %v721
        %v2274 = vpop.f32.mrb[0].mxu0
        %v2275 = vadd.f32 %v2134, %v2274
        %v2276 = vpop.f32.mrb[0].mxu0
        %v2277 = vpop.f32.mrb[0].mxu0
        %v2278 = vadd.f32 %v2134, %v2277
        %v2279 = vpop.f32.mrb[0].mxu0
        %2280 = vmatprep.mubr.bf16.mxu0 %v724
        %2281 = vmatmul.mubr.bf16.gmra.mrb[0].mxu0 %v723
        %v2282 = vpop.f32.mrb[0].mxu0
        %v2283 = vadd.f32 %v2134, %v2282
        %v2284 = vpop.f32.mrb[0].mxu0
        %v2285 = vpop.f32.mrb[0].mxu0
        %v2286 = vadd.f32 %v2134, %v2285
        %v2287 = vpop.f32.mrb[0].mxu0
        %2288 = vmatprep.mubr.bf16.mxu0 %v726
        %2289 = vmatmul.mubr.bf16.gmra.mrb[0].mxu0 %v725
        %v2290 = vpop.f32.mrb[0].mxu0
        %v2291 = vadd.f32 %v2134, %v2290
        %v2292 = vpop.f32.mrb[0].mxu0
        %v2293 = vpop.f32.mrb[0].mxu0
        %v2294 = vadd.f32 %v2134, %v2293
        %v2295 = vpop.f32.mrb[0].mxu0
        %2296 = vdwg.mxu0
        %v2297 = vmax.f32 %v2171, 0.0
        %v2298 = vmax.f32 %v2174, 0.0
        %v2299 = vmax.f32 %v2179, 0.0
        %v2300 = vmax.f32 %v2182, 0.0
        %v2301 = vmax.f32 %v2187, 0.0
        %v2302 = vmax.f32 %v2190, 0.0
        %v2303 = vmax.f32 %v2195, 0.0
        %v2304 = vmax.f32 %v2198, 0.0
        %v2305 = vmax.f32 %v2203, 0.0
        %v2306 = vmax.f32 %v2206, 0.0
        %v2307 = vmax.f32 %v2211, 0.0
        %v2308 = vmax.f32 %v2214, 0.0
        %v2309 = vmax.f32 %v2219, 0.0
        %v2310 = vmax.f32 %v2222, 0.0
        %v2311 = vmax.f32 %v2227, 0.0
        %v2312 = vmax.f32 %v2230, 0.0
        %v2313 = vmax.f32 %v2235, 0.0
        %v2314 = vmax.f32 %v2238, 0.0
        %v2315 = vmax.f32 %v2243, 0.0
        %v2316 = vmax.f32 %v2246, 0.0
        %v2317 = vmax.f32 %v2251, 0.0
        %v2318 = vmax.f32 %v2254, 0.0
        %v2319 = vmax.f32 %v2259, 0.0
        %v2320 = vmax.f32 %v2262, 0.0
        %v2321 = vmax.f32 %v2267, 0.0
        %v2322 = vmax.f32 %v2270, 0.0
        %v2323 = vmax.f32 %v2275, 0.0
        %v2324 = vmax.f32 %v2278, 0.0
        %v2325 = vmax.f32 %v2283, 0.0
        %v2326 = vmax.f32 %v2286, 0.0
        %v2327 = vmax.f32 %v2291, 0.0
        %v2328 = vmax.f32 %v2294, 0.0
        %v2329 = vpack.c.bf16 %v2298, %v2297
        %v2330 = vpack.c.bf16 %v2300, %v2299
        %v2331 = vpack.c.bf16 %v2302, %v2301
        %v2332 = vpack.c.bf16 %v2304, %v2303
        %v2333 = vpack.c.bf16 %v2306, %v2305
        %v2334 = vpack.c.bf16 %v2308, %v2307
        %v2335 = vpack.c.bf16 %v2310, %v2309
        %v2336 = vpack.c.bf16 %v2312, %v2311
        %v2337 = vpack.c.bf16 %v2314, %v2313
        %v2338 = vpack.c.bf16 %v2316, %v2315
        %v2339 = vpack.c.bf16 %v2318, %v2317
        %v2340 = vpack.c.bf16 %v2320, %v2319
        %v2341 = vpack.c.bf16 %v2322, %v2321
        %v2342 = vpack.c.bf16 %v2324, %v2323
        %v2343 = vpack.c.bf16 %v2326, %v2325
        %v2344 = vpack.c.bf16 %v2328, %v2327
        %s2345 = scalar_lea.vmem [#allocation7], 256
        %v2346 = vld [vmem:[%s2345] sm:$0xf]
        %v2347 = vld [vmem:[%s2345 + $0x4] sm:$0xf]
        %v2348 = vld [vmem:[%s2345 + $0x8] sm:$0xf]
        %v2349 = vld [vmem:[%s2345 + $0xc] sm:$0xf]
        %v2350 = vld [vmem:[%s2345 + $0x10] sm:$0xf]
        %v2351 = vld [vmem:[%s2345 + $0x14] sm:$0xf]
        %v2352 = vld [vmem:[%s2345 + $0x18] sm:$0xf]
        %v2353 = vld [vmem:[%s2345 + $0x1c] sm:$0xf]
        %v2354 = vld [vmem:[%s2345 + $0x20] sm:$0xf]
        %v2355 = vld [vmem:[%s2345 + $0x24] sm:$0xf]
        %v2356 = vld [vmem:[%s2345 + $0x28] sm:$0xf]
        %v2357 = vld [vmem:[%s2345 + $0x2c] sm:$0xf]
        %v2358 = vld [vmem:[%s2345 + $0x30] sm:$0xf]
        %v2359 = vld [vmem:[%s2345 + $0x34] sm:$0xf]
        %v2360 = vld [vmem:[%s2345 + $0x38] sm:$0xf]
        %v2361 = vld [vmem:[%s2345 + $0x3c] sm:$0xf]
        %v2378 = vunpack.c.l.b16 %v2346
        %v2379 = vunpack.c.l.b16 %v2347
        %v2380 = vunpack.c.l.b16 %v2348
        %v2381 = vunpack.c.l.b16 %v2349
        %v2382 = vunpack.c.l.b16 %v2350
        %v2383 = vunpack.c.l.b16 %v2351
        %v2384 = vunpack.c.l.b16 %v2352
        %v2385 = vunpack.c.l.b16 %v2353
        %v2386 = vunpack.c.l.b16 %v2354
        %v2387 = vunpack.c.l.b16 %v2355
        %v2388 = vunpack.c.l.b16 %v2356
        %v2389 = vunpack.c.l.b16 %v2357
        %v2390 = vunpack.c.l.b16 %v2358
        %v2391 = vunpack.c.l.b16 %v2359
        %v2392 = vunpack.c.l.b16 %v2360
        %v2393 = vunpack.c.l.b16 %v2361
        %v2394 = vpack.c.b16 %v2379, %v2378
        %v2395 = vpack.c.b16 %v2381, %v2380
        %v2396 = vpack.c.b16 %v2383, %v2382
        %v2397 = vpack.c.b16 %v2385, %v2384
        %v2398 = vpack.c.b16 %v2387, %v2386
        %v2399 = vpack.c.b16 %v2389, %v2388
        %v2400 = vpack.c.b16 %v2391, %v2390
        %v2401 = vpack.c.b16 %v2393, %v2392
        %2410 = vmatprep.subr.bf16.mxu0 0
        %2411 = vmatpush1.bf16.msra.mxu0 %v2394
        %2412 = vmatprep.subr.bf16.mxu0 0
        %2413 = vmatpush1.bf16.msra.mxu0 %v2395
        %2414 = vmatprep.subr.bf16.mxu0 0
        %2415 = vmatpush1.bf16.msra.mxu0 %v2396
        %2416 = vmatprep.subr.bf16.mxu0 0
        %2417 = vmatpush1.bf16.msra.mxu0 %v2397
        %2418 = vmatprep.subr.bf16.mxu0 0
        %2419 = vmatpush1.bf16.msra.mxu0 %v2398
        %2420 = vmatprep.subr.bf16.mxu0 0
        %2421 = vmatpush1.bf16.msra.mxu0 %v2399
        %2422 = vmatprep.subr.bf16.mxu0 0
        %2423 = vmatpush1.bf16.msra.mxu0 %v2400
        %2424 = vmatprep.subr.bf16.mxu0 0
        %2425 = vmatpush1.bf16.msra.mxu0 %v2401
        %2426 = vmatprep.subr.bf16.mxu0 0
        %2427 = vmatpush1.bf16.msra.mxu0 0
        %2428 = vmatprep.subr.bf16.mxu0 0
        %2429 = vmatpush1.bf16.msra.mxu0 0
        %2430 = vmatprep.subr.bf16.mxu0 0
        %2431 = vmatpush1.bf16.msra.mxu0 0
        %2432 = vmatprep.subr.bf16.mxu0 0
        %2433 = vmatpush1.bf16.msra.mxu0 0
        %2434 = vmatprep.subr.bf16.mxu0 0
        %2435 = vmatpush1.bf16.msra.mxu0 0
        %2436 = vmatprep.subr.bf16.mxu0 0
        %2437 = vmatpush1.bf16.msra.mxu0 0
        %2438 = vmatprep.subr.bf16.mxu0 0
        %2439 = vmatpush1.bf16.msra.mxu0 0
        %2440 = vmatprep.subr.bf16.mxu0 0
        %2441 = vmatpush1.bf16.msra.mxu0 0
        %2442 = vmatprep.mubr.bf16.mxu0 0
        %2443 = vmatmul.mubr.bf16.gmra.mrb[0].mxu0 %v2329
        %v2444 = vpop.f32.mrb[0].mxu0
        %v2445 = vadd.f32 0.0, %v2444
        %v2446 = vpop.f32.mrb[0].mxu0
        %v2447 = vpop.f32.mrb[0].mxu0
        %v2448 = vadd.f32 0.0, %v2447
        %v2449 = vpop.f32.mrb[0].mxu0
        %2450 = vmatprep.mubr.bf16.mxu0 0
        %2451 = vmatmul.mubr.bf16.gmra.mrb[0].mxu0 %v2330
        %v2452 = vpop.f32.mrb[0].mxu0
        %v2453 = vadd.f32 0.0, %v2452
        %v2454 = vpop.f32.mrb[0].mxu0
        %v2455 = vpop.f32.mrb[0].mxu0
        %v2456 = vadd.f32 0.0, %v2455
        %v2457 = vpop.f32.mrb[0].mxu0
        %2458 = vmatprep.mubr.bf16.mxu0 0
        %2459 = vmatmul.mubr.bf16.gmra.mrb[0].mxu0 %v2331
        %v2460 = vpop.f32.mrb[0].mxu0
        %v2461 = vadd.f32 0.0, %v2460
        %v2462 = vpop.f32.mrb[0].mxu0
        %v2463 = vpop.f32.mrb[0].mxu0
        %v2464 = vadd.f32 0.0, %v2463
        %v2465 = vpop.f32.mrb[0].mxu0
        %2466 = vmatprep.mubr.bf16.mxu0 0
        %2467 = vmatmul.mubr.bf16.gmra.mrb[0].mxu0 %v2332
        %v2468 = vpop.f32.mrb[0].mxu0
        %v2469 = vadd.f32 0.0, %v2468
        %v2470 = vpop.f32.mrb[0].mxu0
        %v2471 = vpop.f32.mrb[0].mxu0
        %v2472 = vadd.f32 0.0, %v2471
        %v2473 = vpop.f32.mrb[0].mxu0
        %2474 = vmatprep.mubr.bf16.mxu0 0
        %2475 = vmatmul.mubr.bf16.gmra.mrb[0].mxu0 %v2333
        %v2476 = vpop.f32.mrb[0].mxu0
        %v2477 = vadd.f32 0.0, %v2476
        %v2478 = vpop.f32.mrb[0].mxu0
        %v2479 = vpop.f32.mrb[0].mxu0
        %v2480 = vadd.f32 0.0, %v2479
        %v2481 = vpop.f32.mrb[0].mxu0
        %2482 = vmatprep.mubr.bf16.mxu0 0
        %2483 = vmatmul.mubr.bf16.gmra.mrb[0].mxu0 %v2334
        %v2484 = vpop.f32.mrb[0].mxu0
        %v2485 = vadd.f32 0.0, %v2484
        %v2486 = vpop.f32.mrb[0].mxu0
        %v2487 = vpop.f32.mrb[0].mxu0
        %v2488 = vadd.f32 0.0, %v2487
        %v2489 = vpop.f32.mrb[0].mxu0
        %2490 = vmatprep.mubr.bf16.mxu0 0
        %2491 = vmatmul.mubr.bf16.gmra.mrb[0].mxu0 %v2335
        %v2492 = vpop.f32.mrb[0].mxu0
        %v2493 = vadd.f32 0.0, %v2492
        %v2494 = vpop.f32.mrb[0].mxu0
        %v2495 = vpop.f32.mrb[0].mxu0
        %v2496 = vadd.f32 0.0, %v2495
        %v2497 = vpop.f32.mrb[0].mxu0
        %2498 = vmatprep.mubr.bf16.mxu0 0
        %2499 = vmatmul.mubr.bf16.gmra.mrb[0].mxu0 %v2336
        %v2500 = vpop.f32.mrb[0].mxu0
        %v2501 = vadd.f32 0.0, %v2500
        %v2502 = vpop.f32.mrb[0].mxu0
        %v2503 = vpop.f32.mrb[0].mxu0
        %v2504 = vadd.f32 0.0, %v2503
        %v2505 = vpop.f32.mrb[0].mxu0
        %2506 = vmatprep.mubr.bf16.mxu0 0
        %2507 = vmatmul.mubr.bf16.gmra.mrb[0].mxu0 %v2337
        %v2508 = vpop.f32.mrb[0].mxu0
        %v2509 = vadd.f32 0.0, %v2508
        %v2510 = vpop.f32.mrb[0].mxu0
        %v2511 = vpop.f32.mrb[0].mxu0
        %v2512 = vadd.f32 0.0, %v2511
        %v2513 = vpop.f32.mrb[0].mxu0
        %2514 = vmatprep.mubr.bf16.mxu0 0
        %2515 = vmatmul.mubr.bf16.gmra.mrb[0].mxu0 %v2338
        %v2516 = vpop.f32.mrb[0].mxu0
        %v2517 = vadd.f32 0.0, %v2516
        %v2518 = vpop.f32.mrb[0].mxu0
        %v2519 = vpop.f32.mrb[0].mxu0
        %v2520 = vadd.f32 0.0, %v2519
        %v2521 = vpop.f32.mrb[0].mxu0
        %2522 = vmatprep.mubr.bf16.mxu0 0
        %2523 = vmatmul.mubr.bf16.gmra.mrb[0].mxu0 %v2339
        %v2524 = vpop.f32.mrb[0].mxu0
        %v2525 = vadd.f32 0.0, %v2524
        %v2526 = vpop.f32.mrb[0].mxu0
        %v2527 = vpop.f32.mrb[0].mxu0
        %v2528 = vadd.f32 0.0, %v2527
        %v2529 = vpop.f32.mrb[0].mxu0
        %2530 = vmatprep.mubr.bf16.mxu0 0
        %2531 = vmatmul.mubr.bf16.gmra.mrb[0].mxu0 %v2340
        %v2532 = vpop.f32.mrb[0].mxu0
        %v2533 = vadd.f32 0.0, %v2532
        %v2534 = vpop.f32.mrb[0].mxu0
        %v2535 = vpop.f32.mrb[0].mxu0
        %v2536 = vadd.f32 0.0, %v2535
        %v2537 = vpop.f32.mrb[0].mxu0
        %2538 = vmatprep.mubr.bf16.mxu0 0
        %2539 = vmatmul.mubr.bf16.gmra.mrb[0].mxu0 %v2341
        %v2540 = vpop.f32.mrb[0].mxu0
        %v2541 = vadd.f32 0.0, %v2540
        %v2542 = vpop.f32.mrb[0].mxu0
        %v2543 = vpop.f32.mrb[0].mxu0
        %v2544 = vadd.f32 0.0, %v2543
        %v2545 = vpop.f32.mrb[0].mxu0
        %2546 = vmatprep.mubr.bf16.mxu0 0
        %2547 = vmatmul.mubr.bf16.gmra.mrb[0].mxu0 %v2342
        %v2548 = vpop.f32.mrb[0].mxu0
        %v2549 = vadd.f32 0.0, %v2548
        %v2550 = vpop.f32.mrb[0].mxu0
        %v2551 = vpop.f32.mrb[0].mxu0
        %v2552 = vadd.f32 0.0, %v2551
        %v2553 = vpop.f32.mrb[0].mxu0
        %2554 = vmatprep.mubr.bf16.mxu0 0
        %2555 = vmatmul.mubr.bf16.gmra.mrb[0].mxu0 %v2343
        %v2556 = vpop.f32.mrb[0].mxu0
        %v2557 = vadd.f32 0.0, %v2556
        %v2558 = vpop.f32.mrb[0].mxu0
        %v2559 = vpop.f32.mrb[0].mxu0
        %v2560 = vadd.f32 0.0, %v2559
        %v2561 = vpop.f32.mrb[0].mxu0
        %2562 = vmatprep.mubr.bf16.mxu0 0
        %2563 = vmatmul.mubr.bf16.gmra.mrb[0].mxu0 %v2344
        %v2564 = vpop.f32.mrb[0].mxu0
        %v2565 = vadd.f32 0.0, %v2564
        %v2566 = vpop.f32.mrb[0].mxu0
        %v2567 = vpop.f32.mrb[0].mxu0
        %v2568 = vadd.f32 0.0, %v2567
        %v2569 = vpop.f32.mrb[0].mxu0
        %2570 = vdwg.mxu0
        %v2571 = vpack.c.bf16 %v2448, %v2445
        %v2572 = vpack.c.bf16 %v2456, %v2453
        %v2573 = vpack.c.bf16 %v2464, %v2461
        %v2574 = vpack.c.bf16 %v2472, %v2469
        %v2575 = vpack.c.bf16 %v2480, %v2477
        %v2576 = vpack.c.bf16 %v2488, %v2485
        %v2577 = vpack.c.bf16 %v2496, %v2493
        %v2578 = vpack.c.bf16 %v2504, %v2501
        %v2579 = vpack.c.bf16 %v2512, %v2509
        %v2580 = vpack.c.bf16 %v2520, %v2517
        %v2581 = vpack.c.bf16 %v2528, %v2525
        %v2582 = vpack.c.bf16 %v2536, %v2533
        %v2583 = vpack.c.bf16 %v2544, %v2541
        %v2584 = vpack.c.bf16 %v2552, %v2549
        %v2585 = vpack.c.bf16 %v2560, %v2557
        %v2586 = vpack.c.bf16 %v2568, %v2565
        %s2587 = scalar_lea.vmem %s3, 4
        %v2588 = vld [vmem:[%s2587] sm:$0x1]
        %v2590 = vlaneseq
        %v2591 = vshrl.u32 %v2590, 7
        %v2592 = vsub.s32 0, %v2591
        %v2593 = vrot.slane %v2588, %v2592
        %2595 = vmatprep.subr.bf16.mxu0 0
        %2596 = vmatpush1.bf16.msra.mxu0 %v2571
        %2597 = vmatprep.subr.bf16.mxu0 0
        %2598 = vmatpush1.bf16.msra.mxu0 %v2572
        %2599 = vmatprep.subr.bf16.mxu0 0
        %2600 = vmatpush1.bf16.msra.mxu0 %v2573
        %2601 = vmatprep.subr.bf16.mxu0 0
        %2602 = vmatpush1.bf16.msra.mxu0 %v2574
        %2603 = vmatprep.subr.bf16.mxu0 0
        %2604 = vmatpush1.bf16.msra.mxu0 %v2575
        %2605 = vmatprep.subr.bf16.mxu0 0
        %2606 = vmatpush1.bf16.msra.mxu0 %v2576
        %2607 = vmatprep.subr.bf16.mxu0 0
        %2608 = vmatpush1.bf16.msra.mxu0 %v2577
        %2609 = vmatprep.subr.bf16.mxu0 0
        %2610 = vmatpush1.bf16.msra.mxu0 %v2578
        %2611 = vmatprep.subr.bf16.mxu0 0
        %2612 = vmatpush1.bf16.msra.mxu0 %v2579
        %2613 = vmatprep.subr.bf16.mxu0 0
        %2614 = vmatpush1.bf16.msra.mxu0 %v2580
        %2615 = vmatprep.subr.bf16.mxu0 0
        %2616 = vmatpush1.bf16.msra.mxu0 %v2581
        %2617 = vmatprep.subr.bf16.mxu0 0
        %2618 = vmatpush1.bf16.msra.mxu0 %v2582
        %2619 = vmatprep.subr.bf16.mxu0 0
        %2620 = vmatpush1.bf16.msra.mxu0 %v2583
        %2621 = vmatprep.subr.bf16.mxu0 0
        %2622 = vmatpush1.bf16.msra.mxu0 %v2584
        %2623 = vmatprep.subr.bf16.mxu0 0
        %2624 = vmatpush1.bf16.msra.mxu0 %v2585
        %2625 = vmatprep.subr.bf16.mxu0 0
        %2626 = vmatpush1.bf16.msra.mxu0 %v2586
        %2627 = vmatprep.mubr.bf16.mxu0 %v696
        %2628 = vmatmul.mubr.bf16.gmra.mrb[0].mxu0 %v695
        %v2629 = vpop.f32.mrb[0].mxu0
        %v2630 = vadd.f32 %v2593, %v2629
        %v2631 = vpop.f32.mrb[0].mxu0
        %v2632 = vpop.f32.mrb[0].mxu0
        %v2633 = vadd.f32 %v2593, %v2632
        %v2634 = vpop.f32.mrb[0].mxu0
        %2635 = vmatprep.mubr.bf16.mxu0 %v698
        %2636 = vmatmul.mubr.bf16.gmra.mrb[0].mxu0 %v697
        %v2637 = vpop.f32.mrb[0].mxu0
        %v2638 = vadd.f32 %v2593, %v2637
        %v2639 = vpop.f32.mrb[0].mxu0
        %v2640 = vpop.f32.mrb[0].mxu0
        %v2641 = vadd.f32 %v2593, %v2640
        %v2642 = vpop.f32.mrb[0].mxu0
        %2643 = vmatprep.mubr.bf16.mxu0 %v700
        %2644 = vmatmul.mubr.bf16.gmra.mrb[0].mxu0 %v699
        %v2645 = vpop.f32.mrb[0].mxu0
        %v2646 = vadd.f32 %v2593, %v2645
        %v2647 = vpop.f32.mrb[0].mxu0
        %v2648 = vpop.f32.mrb[0].mxu0
        %v2649 = vadd.f32 %v2593, %v2648
        %v2650 = vpop.f32.mrb[0].mxu0
        %2651 = vmatprep.mubr.bf16.mxu0 %v702
        %2652 = vmatmul.mubr.bf16.gmra.mrb[0].mxu0 %v701
        %v2653 = vpop.f32.mrb[0].mxu0
        %v2654 = vadd.f32 %v2593, %v2653
        %v2655 = vpop.f32.mrb[0].mxu0
        %v2656 = vpop.f32.mrb[0].mxu0
        %v2657 = vadd.f32 %v2593, %v2656
        %v2658 = vpop.f32.mrb[0].mxu0
        %2659 = vmatprep.mubr.bf16.mxu0 %v704
        %2660 = vmatmul.mubr.bf16.gmra.mrb[0].mxu0 %v703
        %v2661 = vpop.f32.mrb[0].mxu0
        %v2662 = vadd.f32 %v2593, %v2661
        %v2663 = vpop.f32.mrb[0].mxu0
        %v2664 = vpop.f32.mrb[0].mxu0
        %v2665 = vadd.f32 %v2593, %v2664
        %v2666 = vpop.f32.mrb[0].mxu0
        %2667 = vmatprep.mubr.bf16.mxu0 %v706
        %2668 = vmatmul.mubr.bf16.gmra.mrb[0].mxu0 %v705
        %v2669 = vpop.f32.mrb[0].mxu0
        %v2670 = vadd.f32 %v2593, %v2669
        %v2671 = vpop.f32.mrb[0].mxu0
        %v2672 = vpop.f32.mrb[0].mxu0
        %v2673 = vadd.f32 %v2593, %v2672
        %v2674 = vpop.f32.mrb[0].mxu0
        %2675 = vmatprep.mubr.bf16.mxu0 %v708
        %2676 = vmatmul.mubr.bf16.gmra.mrb[0].mxu0 %v707
        %v2677 = vpop.f32.mrb[0].mxu0
        %v2678 = vadd.f32 %v2593, %v2677
        %v2679 = vpop.f32.mrb[0].mxu0
        %v2680 = vpop.f32.mrb[0].mxu0
        %v2681 = vadd.f32 %v2593, %v2680
        %v2682 = vpop.f32.mrb[0].mxu0
        %2683 = vmatprep.mubr.bf16.mxu0 %v710
        %2684 = vmatmul.mubr.bf16.gmra.mrb[0].mxu0 %v709
        %v2685 = vpop.f32.mrb[0].mxu0
        %v2686 = vadd.f32 %v2593, %v2685
        %v2687 = vpop.f32.mrb[0].mxu0
        %v2688 = vpop.f32.mrb[0].mxu0
        %v2689 = vadd.f32 %v2593, %v2688
        %v2690 = vpop.f32.mrb[0].mxu0
        %2691 = vmatprep.mubr.bf16.mxu0 %v712
        %2692 = vmatmul.mubr.bf16.gmra.mrb[0].mxu0 %v711
        %v2693 = vpop.f32.mrb[0].mxu0
        %v2694 = vadd.f32 %v2593, %v2693
        %v2695 = vpop.f32.mrb[0].mxu0
        %v2696 = vpop.f32.mrb[0].mxu0
        %v2697 = vadd.f32 %v2593, %v2696
        %v2698 = vpop.f32.mrb[0].mxu0
        %2699 = vmatprep.mubr.bf16.mxu0 %v714
        %2700 = vmatmul.mubr.bf16.gmra.mrb[0].mxu0 %v713
        %v2701 = vpop.f32.mrb[0].mxu0
        %v2702 = vadd.f32 %v2593, %v2701
        %v2703 = vpop.f32.mrb[0].mxu0
        %v2704 = vpop.f32.mrb[0].mxu0
        %v2705 = vadd.f32 %v2593, %v2704
        %v2706 = vpop.f32.mrb[0].mxu0
        %2707 = vmatprep.mubr.bf16.mxu0 %v716
        %2708 = vmatmul.mubr.bf16.gmra.mrb[0].mxu0 %v715
        %v2709 = vpop.f32.mrb[0].mxu0
        %v2710 = vadd.f32 %v2593, %v2709
        %v2711 = vpop.f32.mrb[0].mxu0
        %v2712 = vpop.f32.mrb[0].mxu0
        %v2713 = vadd.f32 %v2593, %v2712
        %v2714 = vpop.f32.mrb[0].mxu0
        %2715 = vmatprep.mubr.bf16.mxu0 %v718
        %2716 = vmatmul.mubr.bf16.gmra.mrb[0].mxu0 %v717
        %v2717 = vpop.f32.mrb[0].mxu0
        %v2718 = vadd.f32 %v2593, %v2717
        %v2719 = vpop.f32.mrb[0].mxu0
        %v2720 = vpop.f32.mrb[0].mxu0
        %v2721 = vadd.f32 %v2593, %v2720
        %v2722 = vpop.f32.mrb[0].mxu0
        %2723 = vmatprep.mubr.bf16.mxu0 %v720
        %2724 = vmatmul.mubr.bf16.gmra.mrb[0].mxu0 %v719
        %v2725 = vpop.f32.mrb[0].mxu0
        %v2726 = vadd.f32 %v2593, %v2725
        %v2727 = vpop.f32.mrb[0].mxu0
        %v2728 = vpop.f32.mrb[0].mxu0
        %v2729 = vadd.f32 %v2593, %v2728
        %v2730 = vpop.f32.mrb[0].mxu0
        %2731 = vmatprep.mubr.bf16.mxu0 %v722
        %2732 = vmatmul.mubr.bf16.gmra.mrb[0].mxu0 %v721
        %v2733 = vpop.f32.mrb[0].mxu0
        %v2734 = vadd.f32 %v2593, %v2733
        %v2735 = vpop.f32.mrb[0].mxu0
        %v2736 = vpop.f32.mrb[0].mxu0
        %v2737 = vadd.f32 %v2593, %v2736
        %v2738 = vpop.f32.mrb[0].mxu0
        %2739 = vmatprep.mubr.bf16.mxu0 %v724
        %2740 = vmatmul.mubr.bf16.gmra.mrb[0].mxu0 %v723
        %v2741 = vpop.f32.mrb[0].mxu0
        %v2742 = vadd.f32 %v2593, %v2741
        %v2743 = vpop.f32.mrb[0].mxu0
        %v2744 = vpop.f32.mrb[0].mxu0
        %v2745 = vadd.f32 %v2593, %v2744
        %v2746 = vpop.f32.mrb[0].mxu0
        %2747 = vmatprep.mubr.bf16.mxu0 %v726
        %2748 = vmatmul.mubr.bf16.gmra.mrb[0].mxu0 %v725
        %v2749 = vpop.f32.mrb[0].mxu0
        %v2750 = vadd.f32 %v2593, %v2749
        %v2751 = vpop.f32.mrb[0].mxu0
        %v2752 = vpop.f32.mrb[0].mxu0
        %v2753 = vadd.f32 %v2593, %v2752
        %v2754 = vpop.f32.mrb[0].mxu0
        %2755 = vdwg.mxu0
        %v2756 = vmax.f32 %v2630, 0.0
        %v2757 = vmax.f32 %v2633, 0.0
        %v2758 = vmax.f32 %v2638, 0.0
        %v2759 = vmax.f32 %v2641, 0.0
        %v2760 = vmax.f32 %v2646, 0.0
        %v2761 = vmax.f32 %v2649, 0.0
        %v2762 = vmax.f32 %v2654, 0.0
        %v2763 = vmax.f32 %v2657, 0.0
        %v2764 = vmax.f32 %v2662, 0.0
        %v2765 = vmax.f32 %v2665, 0.0
        %v2766 = vmax.f32 %v2670, 0.0
        %v2767 = vmax.f32 %v2673, 0.0
        %v2768 = vmax.f32 %v2678, 0.0
        %v2769 = vmax.f32 %v2681, 0.0
        %v2770 = vmax.f32 %v2686, 0.0
        %v2771 = vmax.f32 %v2689, 0.0
        %v2772 = vmax.f32 %v2694, 0.0
        %v2773 = vmax.f32 %v2697, 0.0
        %v2774 = vmax.f32 %v2702, 0.0
        %v2775 = vmax.f32 %v2705, 0.0
        %v2776 = vmax.f32 %v2710, 0.0
        %v2777 = vmax.f32 %v2713, 0.0
        %v2778 = vmax.f32 %v2718, 0.0
        %v2779 = vmax.f32 %v2721, 0.0
        %v2780 = vmax.f32 %v2726, 0.0
        %v2781 = vmax.f32 %v2729, 0.0
        %v2782 = vmax.f32 %v2734, 0.0
        %v2783 = vmax.f32 %v2737, 0.0
        %v2784 = vmax.f32 %v2742, 0.0
        %v2785 = vmax.f32 %v2745, 0.0
        %v2786 = vmax.f32 %v2750, 0.0
        %v2787 = vmax.f32 %v2753, 0.0
        %v2788 = vpack.c.bf16 %v2757, %v2756
        %v2789 = vpack.c.bf16 %v2759, %v2758
        %v2790 = vpack.c.bf16 %v2761, %v2760
        %v2791 = vpack.c.bf16 %v2763, %v2762
        %v2792 = vpack.c.bf16 %v2765, %v2764
        %v2793 = vpack.c.bf16 %v2767, %v2766
        %v2794 = vpack.c.bf16 %v2769, %v2768
        %v2795 = vpack.c.bf16 %v2771, %v2770
        %v2796 = vpack.c.bf16 %v2773, %v2772
        %v2797 = vpack.c.bf16 %v2775, %v2774
        %v2798 = vpack.c.bf16 %v2777, %v2776
        %v2799 = vpack.c.bf16 %v2779, %v2778
        %v2800 = vpack.c.bf16 %v2781, %v2780
        %v2801 = vpack.c.bf16 %v2783, %v2782
        %v2802 = vpack.c.bf16 %v2785, %v2784
        %v2803 = vpack.c.bf16 %v2787, %v2786
        %s2804 = scalar_lea.vmem [#allocation7], 320
        %v2805 = vld [vmem:[%s2804] sm:$0xf]
        %v2806 = vld [vmem:[%s2804 + $0x4] sm:$0xf]
        %v2807 = vld [vmem:[%s2804 + $0x8] sm:$0xf]
        %v2808 = vld [vmem:[%s2804 + $0xc] sm:$0xf]
        %v2809 = vld [vmem:[%s2804 + $0x10] sm:$0xf]
        %v2810 = vld [vmem:[%s2804 + $0x14] sm:$0xf]
        %v2811 = vld [vmem:[%s2804 + $0x18] sm:$0xf]
        %v2812 = vld [vmem:[%s2804 + $0x1c] sm:$0xf]
        %v2813 = vld [vmem:[%s2804 + $0x20] sm:$0xf]
        %v2814 = vld [vmem:[%s2804 + $0x24] sm:$0xf]
        %v2815 = vld [vmem:[%s2804 + $0x28] sm:$0xf]
        %v2816 = vld [vmem:[%s2804 + $0x2c] sm:$0xf]
        %v2817 = vld [vmem:[%s2804 + $0x30] sm:$0xf]
        %v2818 = vld [vmem:[%s2804 + $0x34] sm:$0xf]
        %v2819 = vld [vmem:[%s2804 + $0x38] sm:$0xf]
        %v2820 = vld [vmem:[%s2804 + $0x3c] sm:$0xf]
        %v2837 = vunpack.c.l.b16 %v2805
        %v2838 = vunpack.c.l.b16 %v2806
        %v2839 = vunpack.c.l.b16 %v2807
        %v2840 = vunpack.c.l.b16 %v2808
        %v2841 = vunpack.c.l.b16 %v2809
        %v2842 = vunpack.c.l.b16 %v2810
        %v2843 = vunpack.c.l.b16 %v2811
        %v2844 = vunpack.c.l.b16 %v2812
        %v2845 = vunpack.c.l.b16 %v2813
        %v2846 = vunpack.c.l.b16 %v2814
        %v2847 = vunpack.c.l.b16 %v2815
        %v2848 = vunpack.c.l.b16 %v2816
        %v2849 = vunpack.c.l.b16 %v2817
        %v2850 = vunpack.c.l.b16 %v2818
        %v2851 = vunpack.c.l.b16 %v2819
        %v2852 = vunpack.c.l.b16 %v2820
        %v2853 = vpack.c.b16 %v2838, %v2837
        %v2854 = vpack.c.b16 %v2840, %v2839
        %v2855 = vpack.c.b16 %v2842, %v2841
        %v2856 = vpack.c.b16 %v2844, %v2843
        %v2857 = vpack.c.b16 %v2846, %v2845
        %v2858 = vpack.c.b16 %v2848, %v2847
        %v2859 = vpack.c.b16 %v2850, %v2849
        %v2860 = vpack.c.b16 %v2852, %v2851
        %2869 = vmatprep.subr.bf16.mxu0 0
        %2870 = vmatpush1.bf16.msra.mxu0 %v2853
        %2871 = vmatprep.subr.bf16.mxu0 0
        %2872 = vmatpush1.bf16.msra.mxu0 %v2854
        %2873 = vmatprep.subr.bf16.mxu0 0
        %2874 = vmatpush1.bf16.msra.mxu0 %v2855
        %2875 = vmatprep.subr.bf16.mxu0 0
        %2876 = vmatpush1.bf16.msra.mxu0 %v2856
        %2877 = vmatprep.subr.bf16.mxu0 0
        %2878 = vmatpush1.bf16.msra.mxu0 %v2857
        %2879 = vmatprep.subr.bf16.mxu0 0
        %2880 = vmatpush1.bf16.msra.mxu0 %v2858
        %2881 = vmatprep.subr.bf16.mxu0 0
        %2882 = vmatpush1.bf16.msra.mxu0 %v2859
        %2883 = vmatprep.subr.bf16.mxu0 0
        %2884 = vmatpush1.bf16.msra.mxu0 %v2860
        %2885 = vmatprep.subr.bf16.mxu0 0
        %2886 = vmatpush1.bf16.msra.mxu0 0
        %2887 = vmatprep.subr.bf16.mxu0 0
        %2888 = vmatpush1.bf16.msra.mxu0 0
        %2889 = vmatprep.subr.bf16.mxu0 0
        %2890 = vmatpush1.bf16.msra.mxu0 0
        %2891 = vmatprep.subr.bf16.mxu0 0
        %2892 = vmatpush1.bf16.msra.mxu0 0
        %2893 = vmatprep.subr.bf16.mxu0 0
        %2894 = vmatpush1.bf16.msra.mxu0 0
        %2895 = vmatprep.subr.bf16.mxu0 0
        %2896 = vmatpush1.bf16.msra.mxu0 0
        %2897 = vmatprep.subr.bf16.mxu0 0
        %2898 = vmatpush1.bf16.msra.mxu0 0
        %2899 = vmatprep.subr.bf16.mxu0 0
        %2900 = vmatpush1.bf16.msra.mxu0 0
        %2901 = vmatprep.mubr.bf16.mxu0 0
        %2902 = vmatmul.mubr.bf16.gmra.mrb[0].mxu0 %v2788
        %v2903 = vpop.f32.mrb[0].mxu0
        %v2904 = vadd.f32 0.0, %v2903
        %v2905 = vpop.f32.mrb[0].mxu0
        %v2906 = vpop.f32.mrb[0].mxu0
        %v2907 = vadd.f32 0.0, %v2906
        %v2908 = vpop.f32.mrb[0].mxu0
        %2909 = vmatprep.mubr.bf16.mxu0 0
        %2910 = vmatmul.mubr.bf16.gmra.mrb[0].mxu0 %v2789
        %v2911 = vpop.f32.mrb[0].mxu0
        %v2912 = vadd.f32 0.0, %v2911
        %v2913 = vpop.f32.mrb[0].mxu0
        %v2914 = vpop.f32.mrb[0].mxu0
        %v2915 = vadd.f32 0.0, %v2914
        %v2916 = vpop.f32.mrb[0].mxu0
        %2917 = vmatprep.mubr.bf16.mxu0 0
        %2918 = vmatmul.mubr.bf16.gmra.mrb[0].mxu0 %v2790
        %v2919 = vpop.f32.mrb[0].mxu0
        %v2920 = vadd.f32 0.0, %v2919
        %v2921 = vpop.f32.mrb[0].mxu0
        %v2922 = vpop.f32.mrb[0].mxu0
        %v2923 = vadd.f32 0.0, %v2922
        %v2924 = vpop.f32.mrb[0].mxu0
        %2925 = vmatprep.mubr.bf16.mxu0 0
        %2926 = vmatmul.mubr.bf16.gmra.mrb[0].mxu0 %v2791
        %v2927 = vpop.f32.mrb[0].mxu0
        %v2928 = vadd.f32 0.0, %v2927
        %v2929 = vpop.f32.mrb[0].mxu0
        %v2930 = vpop.f32.mrb[0].mxu0
        %v2931 = vadd.f32 0.0, %v2930
        %v2932 = vpop.f32.mrb[0].mxu0
        %2933 = vmatprep.mubr.bf16.mxu0 0
        %2934 = vmatmul.mubr.bf16.gmra.mrb[0].mxu0 %v2792
        %v2935 = vpop.f32.mrb[0].mxu0
        %v2936 = vadd.f32 0.0, %v2935
        %v2937 = vpop.f32.mrb[0].mxu0
        %v2938 = vpop.f32.mrb[0].mxu0
        %v2939 = vadd.f32 0.0, %v2938
        %v2940 = vpop.f32.mrb[0].mxu0
        %2941 = vmatprep.mubr.bf16.mxu0 0
        %2942 = vmatmul.mubr.bf16.gmra.mrb[0].mxu0 %v2793
        %v2943 = vpop.f32.mrb[0].mxu0
        %v2944 = vadd.f32 0.0, %v2943
        %v2945 = vpop.f32.mrb[0].mxu0
        %v2946 = vpop.f32.mrb[0].mxu0
        %v2947 = vadd.f32 0.0, %v2946
        %v2948 = vpop.f32.mrb[0].mxu0
        %2949 = vmatprep.mubr.bf16.mxu0 0
        %2950 = vmatmul.mubr.bf16.gmra.mrb[0].mxu0 %v2794
        %v2951 = vpop.f32.mrb[0].mxu0
        %v2952 = vadd.f32 0.0, %v2951
        %v2953 = vpop.f32.mrb[0].mxu0
        %v2954 = vpop.f32.mrb[0].mxu0
        %v2955 = vadd.f32 0.0, %v2954
        %v2956 = vpop.f32.mrb[0].mxu0
        %2957 = vmatprep.mubr.bf16.mxu0 0
        %2958 = vmatmul.mubr.bf16.gmra.mrb[0].mxu0 %v2795
        %v2959 = vpop.f32.mrb[0].mxu0
        %v2960 = vadd.f32 0.0, %v2959
        %v2961 = vpop.f32.mrb[0].mxu0
        %v2962 = vpop.f32.mrb[0].mxu0
        %v2963 = vadd.f32 0.0, %v2962
        %v2964 = vpop.f32.mrb[0].mxu0
        %2965 = vmatprep.mubr.bf16.mxu0 0
        %2966 = vmatmul.mubr.bf16.gmra.mrb[0].mxu0 %v2796
        %v2967 = vpop.f32.mrb[0].mxu0
        %v2968 = vadd.f32 0.0, %v2967
        %v2969 = vpop.f32.mrb[0].mxu0
        %v2970 = vpop.f32.mrb[0].mxu0
        %v2971 = vadd.f32 0.0, %v2970
        %v2972 = vpop.f32.mrb[0].mxu0
        %2973 = vmatprep.mubr.bf16.mxu0 0
        %2974 = vmatmul.mubr.bf16.gmra.mrb[0].mxu0 %v2797
        %v2975 = vpop.f32.mrb[0].mxu0
        %v2976 = vadd.f32 0.0, %v2975
        %v2977 = vpop.f32.mrb[0].mxu0
        %v2978 = vpop.f32.mrb[0].mxu0
        %v2979 = vadd.f32 0.0, %v2978
        %v2980 = vpop.f32.mrb[0].mxu0
        %2981 = vmatprep.mubr.bf16.mxu0 0
        %2982 = vmatmul.mubr.bf16.gmra.mrb[0].mxu0 %v2798
        %v2983 = vpop.f32.mrb[0].mxu0
        %v2984 = vadd.f32 0.0, %v2983
        %v2985 = vpop.f32.mrb[0].mxu0
        %v2986 = vpop.f32.mrb[0].mxu0
        %v2987 = vadd.f32 0.0, %v2986
        %v2988 = vpop.f32.mrb[0].mxu0
        %2989 = vmatprep.mubr.bf16.mxu0 0
        %2990 = vmatmul.mubr.bf16.gmra.mrb[0].mxu0 %v2799
        %v2991 = vpop.f32.mrb[0].mxu0
        %v2992 = vadd.f32 0.0, %v2991
        %v2993 = vpop.f32.mrb[0].mxu0
        %v2994 = vpop.f32.mrb[0].mxu0
        %v2995 = vadd.f32 0.0, %v2994
        %v2996 = vpop.f32.mrb[0].mxu0
        %2997 = vmatprep.mubr.bf16.mxu0 0
        %2998 = vmatmul.mubr.bf16.gmra.mrb[0].mxu0 %v2800
        %v2999 = vpop.f32.mrb[0].mxu0
        %v3000 = vadd.f32 0.0, %v2999
        %v3001 = vpop.f32.mrb[0].mxu0
        %v3002 = vpop.f32.mrb[0].mxu0
        %v3003 = vadd.f32 0.0, %v3002
        %v3004 = vpop.f32.mrb[0].mxu0
        %3005 = vmatprep.mubr.bf16.mxu0 0
        %3006 = vmatmul.mubr.bf16.gmra.mrb[0].mxu0 %v2801
        %v3007 = vpop.f32.mrb[0].mxu0
        %v3008 = vadd.f32 0.0, %v3007
        %v3009 = vpop.f32.mrb[0].mxu0
        %v3010 = vpop.f32.mrb[0].mxu0
        %v3011 = vadd.f32 0.0, %v3010
        %v3012 = vpop.f32.mrb[0].mxu0
        %3013 = vmatprep.mubr.bf16.mxu0 0
        %3014 = vmatmul.mubr.bf16.gmra.mrb[0].mxu0 %v2802
        %v3015 = vpop.f32.mrb[0].mxu0
        %v3016 = vadd.f32 0.0, %v3015
        %v3017 = vpop.f32.mrb[0].mxu0
        %v3018 = vpop.f32.mrb[0].mxu0
        %v3019 = vadd.f32 0.0, %v3018
        %v3020 = vpop.f32.mrb[0].mxu0
        %3021 = vmatprep.mubr.bf16.mxu0 0
        %3022 = vmatmul.mubr.bf16.gmra.mrb[0].mxu0 %v2803
        %v3023 = vpop.f32.mrb[0].mxu0
        %v3024 = vadd.f32 0.0, %v3023
        %v3025 = vpop.f32.mrb[0].mxu0
        %v3026 = vpop.f32.mrb[0].mxu0
        %v3027 = vadd.f32 0.0, %v3026
        %v3028 = vpop.f32.mrb[0].mxu0
        %3029 = vdwg.mxu0
        %v3030 = vpack.c.bf16 %v2907, %v2904
        %v3031 = vpack.c.bf16 %v2915, %v2912
        %v3032 = vpack.c.bf16 %v2923, %v2920
        %v3033 = vpack.c.bf16 %v2931, %v2928
        %v3034 = vpack.c.bf16 %v2939, %v2936
        %v3035 = vpack.c.bf16 %v2947, %v2944
        %v3036 = vpack.c.bf16 %v2955, %v2952
        %v3037 = vpack.c.bf16 %v2963, %v2960
        %v3038 = vpack.c.bf16 %v2971, %v2968
        %v3039 = vpack.c.bf16 %v2979, %v2976
        %v3040 = vpack.c.bf16 %v2987, %v2984
        %v3041 = vpack.c.bf16 %v2995, %v2992
        %v3042 = vpack.c.bf16 %v3003, %v3000
        %v3043 = vpack.c.bf16 %v3011, %v3008
        %v3044 = vpack.c.bf16 %v3019, %v3016
        %v3045 = vpack.c.bf16 %v3027, %v3024
        %s3046 = scalar_lea.vmem %s3, 5
        %v3047 = vld [vmem:[%s3046] sm:$0x1]
        %v3049 = vlaneseq
        %v3050 = vshrl.u32 %v3049, 7
        %v3051 = vsub.s32 0, %v3050
        %v3052 = vrot.slane %v3047, %v3051
        %3054 = vmatprep.subr.bf16.mxu0 0
        %3055 = vmatpush1.bf16.msra.mxu0 %v3030
        %3056 = vmatprep.subr.bf16.mxu0 0
        %3057 = vmatpush1.bf16.msra.mxu0 %v3031
        %3058 = vmatprep.subr.bf16.mxu0 0
        %3059 = vmatpush1.bf16.msra.mxu0 %v3032
        %3060 = vmatprep.subr.bf16.mxu0 0
        %3061 = vmatpush1.bf16.msra.mxu0 %v3033
        %3062 = vmatprep.subr.bf16.mxu0 0
        %3063 = vmatpush1.bf16.msra.mxu0 %v3034
        %3064 = vmatprep.subr.bf16.mxu0 0
        %3065 = vmatpush1.bf16.msra.mxu0 %v3035
        %3066 = vmatprep.subr.bf16.mxu0 0
        %3067 = vmatpush1.bf16.msra.mxu0 %v3036
        %3068 = vmatprep.subr.bf16.mxu0 0
        %3069 = vmatpush1.bf16.msra.mxu0 %v3037
        %3070 = vmatprep.subr.bf16.mxu0 0
        %3071 = vmatpush1.bf16.msra.mxu0 %v3038
        %3072 = vmatprep.subr.bf16.mxu0 0
        %3073 = vmatpush1.bf16.msra.mxu0 %v3039
        %3074 = vmatprep.subr.bf16.mxu0 0
        %3075 = vmatpush1.bf16.msra.mxu0 %v3040
        %3076 = vmatprep.subr.bf16.mxu0 0
        %3077 = vmatpush1.bf16.msra.mxu0 %v3041
        %3078 = vmatprep.subr.bf16.mxu0 0
        %3079 = vmatpush1.bf16.msra.mxu0 %v3042
        %3080 = vmatprep.subr.bf16.mxu0 0
        %3081 = vmatpush1.bf16.msra.mxu0 %v3043
        %3082 = vmatprep.subr.bf16.mxu0 0
        %3083 = vmatpush1.bf16.msra.mxu0 %v3044
        %3084 = vmatprep.subr.bf16.mxu0 0
        %3085 = vmatpush1.bf16.msra.mxu0 %v3045
        %3086 = vmatprep.mubr.bf16.mxu0 %v696
        %3087 = vmatmul.mubr.bf16.gmra.mrb[0].mxu0 %v695
        %v3088 = vpop.f32.mrb[0].mxu0
        %v3089 = vadd.f32 %v3052, %v3088
        %v3090 = vpop.f32.mrb[0].mxu0
        %v3091 = vpop.f32.mrb[0].mxu0
        %v3092 = vadd.f32 %v3052, %v3091
        %v3093 = vpop.f32.mrb[0].mxu0
        %3094 = vmatprep.mubr.bf16.mxu0 %v698
        %3095 = vmatmul.mubr.bf16.gmra.mrb[0].mxu0 %v697
        %v3096 = vpop.f32.mrb[0].mxu0
        %v3097 = vadd.f32 %v3052, %v3096
        %v3098 = vpop.f32.mrb[0].mxu0
        %v3099 = vpop.f32.mrb[0].mxu0
        %v3100 = vadd.f32 %v3052, %v3099
        %v3101 = vpop.f32.mrb[0].mxu0
        %3102 = vmatprep.mubr.bf16.mxu0 %v700
        %3103 = vmatmul.mubr.bf16.gmra.mrb[0].mxu0 %v699
        %v3104 = vpop.f32.mrb[0].mxu0
        %v3105 = vadd.f32 %v3052, %v3104
        %v3106 = vpop.f32.mrb[0].mxu0
        %v3107 = vpop.f32.mrb[0].mxu0
        %v3108 = vadd.f32 %v3052, %v3107
        %v3109 = vpop.f32.mrb[0].mxu0
        %3110 = vmatprep.mubr.bf16.mxu0 %v702
        %3111 = vmatmul.mubr.bf16.gmra.mrb[0].mxu0 %v701
        %v3112 = vpop.f32.mrb[0].mxu0
        %v3113 = vadd.f32 %v3052, %v3112
        %v3114 = vpop.f32.mrb[0].mxu0
        %v3115 = vpop.f32.mrb[0].mxu0
        %v3116 = vadd.f32 %v3052, %v3115
        %v3117 = vpop.f32.mrb[0].mxu0
        %3118 = vmatprep.mubr.bf16.mxu0 %v704
        %3119 = vmatmul.mubr.bf16.gmra.mrb[0].mxu0 %v703
        %v3120 = vpop.f32.mrb[0].mxu0
        %v3121 = vadd.f32 %v3052, %v3120
        %v3122 = vpop.f32.mrb[0].mxu0
        %v3123 = vpop.f32.mrb[0].mxu0
        %v3124 = vadd.f32 %v3052, %v3123
        %v3125 = vpop.f32.mrb[0].mxu0
        %3126 = vmatprep.mubr.bf16.mxu0 %v706
        %3127 = vmatmul.mubr.bf16.gmra.mrb[0].mxu0 %v705
        %v3128 = vpop.f32.mrb[0].mxu0
        %v3129 = vadd.f32 %v3052, %v3128
        %v3130 = vpop.f32.mrb[0].mxu0
        %v3131 = vpop.f32.mrb[0].mxu0
        %v3132 = vadd.f32 %v3052, %v3131
        %v3133 = vpop.f32.mrb[0].mxu0
        %3134 = vmatprep.mubr.bf16.mxu0 %v708
        %3135 = vmatmul.mubr.bf16.gmra.mrb[0].mxu0 %v707
        %v3136 = vpop.f32.mrb[0].mxu0
        %v3137 = vadd.f32 %v3052, %v3136
        %v3138 = vpop.f32.mrb[0].mxu0
        %v3139 = vpop.f32.mrb[0].mxu0
        %v3140 = vadd.f32 %v3052, %v3139
        %v3141 = vpop.f32.mrb[0].mxu0
        %3142 = vmatprep.mubr.bf16.mxu0 %v710
        %3143 = vmatmul.mubr.bf16.gmra.mrb[0].mxu0 %v709
        %v3144 = vpop.f32.mrb[0].mxu0
        %v3145 = vadd.f32 %v3052, %v3144
        %v3146 = vpop.f32.mrb[0].mxu0
        %v3147 = vpop.f32.mrb[0].mxu0
        %v3148 = vadd.f32 %v3052, %v3147
        %v3149 = vpop.f32.mrb[0].mxu0
        %3150 = vmatprep.mubr.bf16.mxu0 %v712
        %3151 = vmatmul.mubr.bf16.gmra.mrb[0].mxu0 %v711
        %v3152 = vpop.f32.mrb[0].mxu0
        %v3153 = vadd.f32 %v3052, %v3152
        %v3154 = vpop.f32.mrb[0].mxu0
        %v3155 = vpop.f32.mrb[0].mxu0
        %v3156 = vadd.f32 %v3052, %v3155
        %v3157 = vpop.f32.mrb[0].mxu0
        %3158 = vmatprep.mubr.bf16.mxu0 %v714
        %3159 = vmatmul.mubr.bf16.gmra.mrb[0].mxu0 %v713
        %v3160 = vpop.f32.mrb[0].mxu0
        %v3161 = vadd.f32 %v3052, %v3160
        %v3162 = vpop.f32.mrb[0].mxu0
        %v3163 = vpop.f32.mrb[0].mxu0
        %v3164 = vadd.f32 %v3052, %v3163
        %v3165 = vpop.f32.mrb[0].mxu0
        %3166 = vmatprep.mubr.bf16.mxu0 %v716
        %3167 = vmatmul.mubr.bf16.gmra.mrb[0].mxu0 %v715
        %v3168 = vpop.f32.mrb[0].mxu0
        %v3169 = vadd.f32 %v3052, %v3168
        %v3170 = vpop.f32.mrb[0].mxu0
        %v3171 = vpop.f32.mrb[0].mxu0
        %v3172 = vadd.f32 %v3052, %v3171
        %v3173 = vpop.f32.mrb[0].mxu0
        %3174 = vmatprep.mubr.bf16.mxu0 %v718
        %3175 = vmatmul.mubr.bf16.gmra.mrb[0].mxu0 %v717
        %v3176 = vpop.f32.mrb[0].mxu0
        %v3177 = vadd.f32 %v3052, %v3176
        %v3178 = vpop.f32.mrb[0].mxu0
        %v3179 = vpop.f32.mrb[0].mxu0
        %v3180 = vadd.f32 %v3052, %v3179
        %v3181 = vpop.f32.mrb[0].mxu0
        %3182 = vmatprep.mubr.bf16.mxu0 %v720
        %3183 = vmatmul.mubr.bf16.gmra.mrb[0].mxu0 %v719
        %v3184 = vpop.f32.mrb[0].mxu0
        %v3185 = vadd.f32 %v3052, %v3184
        %v3186 = vpop.f32.mrb[0].mxu0
        %v3187 = vpop.f32.mrb[0].mxu0
        %v3188 = vadd.f32 %v3052, %v3187
        %v3189 = vpop.f32.mrb[0].mxu0
        %3190 = vmatprep.mubr.bf16.mxu0 %v722
        %3191 = vmatmul.mubr.bf16.gmra.mrb[0].mxu0 %v721
        %v3192 = vpop.f32.mrb[0].mxu0
        %v3193 = vadd.f32 %v3052, %v3192
        %v3194 = vpop.f32.mrb[0].mxu0
        %v3195 = vpop.f32.mrb[0].mxu0
        %v3196 = vadd.f32 %v3052, %v3195
        %v3197 = vpop.f32.mrb[0].mxu0
        %3198 = vmatprep.mubr.bf16.mxu0 %v724
        %3199 = vmatmul.mubr.bf16.gmra.mrb[0].mxu0 %v723
        %v3200 = vpop.f32.mrb[0].mxu0
        %v3201 = vadd.f32 %v3052, %v3200
        %v3202 = vpop.f32.mrb[0].mxu0
        %v3203 = vpop.f32.mrb[0].mxu0
        %v3204 = vadd.f32 %v3052, %v3203
        %v3205 = vpop.f32.mrb[0].mxu0
        %3206 = vmatprep.mubr.bf16.mxu0 %v726
        %3207 = vmatmul.mubr.bf16.gmra.mrb[0].mxu0 %v725
        %v3208 = vpop.f32.mrb[0].mxu0
        %v3209 = vadd.f32 %v3052, %v3208
        %v3210 = vpop.f32.mrb[0].mxu0
        %v3211 = vpop.f32.mrb[0].mxu0
        %v3212 = vadd.f32 %v3052, %v3211
        %v3213 = vpop.f32.mrb[0].mxu0
        %3214 = vdwg.mxu0
        %3215 = vst [vmem:[%s269] sm:$0xff] %v3089
        %3216 = vst [vmem:[%s269 + $0x8] sm:$0xff] %v3092
        %3217 = vst [vmem:[%s269 + $0x10] sm:$0xff] %v3097
        %3218 = vst [vmem:[%s269 + $0x18] sm:$0xff] %v3100
        %3219 = vst [vmem:[%s269 + $0x20] sm:$0xff] %v3105
        %3220 = vst [vmem:[%s269 + $0x28] sm:$0xff] %v3108
        %3221 = vst [vmem:[%s269 + $0x30] sm:$0xff] %v3113
        %3222 = vst [vmem:[%s269 + $0x38] sm:$0xff] %v3116
        %3223 = vst [vmem:[%s269 + $0x40] sm:$0xff] %v3121
        %3224 = vst [vmem:[%s269 + $0x48] sm:$0xff] %v3124
        %3225 = vst [vmem:[%s269 + $0x50] sm:$0xff] %v3129
        %3226 = vst [vmem:[%s269 + $0x58] sm:$0xff] %v3132
        %3227 = vst [vmem:[%s269 + $0x60] sm:$0xff] %v3137
        %3228 = vst [vmem:[%s269 + $0x68] sm:$0xff] %v3140
        %3229 = vst [vmem:[%s269 + $0x70] sm:$0xff] %v3145
        %3230 = vst [vmem:[%s269 + $0x78] sm:$0xff] %v3148
        %3231 = vst [vmem:[%s269 + $0x80] sm:$0xff] %v3153
        %3232 = vst [vmem:[%s269 + $0x88] sm:$0xff] %v3156
        %3233 = vst [vmem:[%s269 + $0x90] sm:$0xff] %v3161
        %3234 = vst [vmem:[%s269 + $0x98] sm:$0xff] %v3164
        %3235 = vst [vmem:[%s269 + $0xa0] sm:$0xff] %v3169
        %3236 = vst [vmem:[%s269 + $0xa8] sm:$0xff] %v3172
        %3237 = vst [vmem:[%s269 + $0xb0] sm:$0xff] %v3177
        %3238 = vst [vmem:[%s269 + $0xb8] sm:$0xff] %v3180
        %3239 = vst [vmem:[%s269 + $0xc0] sm:$0xff] %v3185
        %3240 = vst [vmem:[%s269 + $0xc8] sm:$0xff] %v3188
        %3241 = vst [vmem:[%s269 + $0xd0] sm:$0xff] %v3193
        %3242 = vst [vmem:[%s269 + $0xd8] sm:$0xff] %v3196
        %3243 = vst [vmem:[%s269 + $0xe0] sm:$0xff] %v3201
        %3244 = vst [vmem:[%s269 + $0xe8] sm:$0xff] %v3204
        %3245 = vst [vmem:[%s269 + $0xf0] sm:$0xff] %v3209
        %3246 = vst [vmem:[%s269 + $0xf8] sm:$0xff] %v3212
        %s3247 = sand.u32 %s126, 1
        %s3248 = scalar_lea.sflag [#allocation4], %s3247
        %s3249 = sand.u32 %s126, 1
        %s3250 = smul.addr %s3249, 256
        %s3251 = scalar_lea.vmem [#allocation8], %s3250
        // Predicated region
        $region49: #{tpu_custom_call.1} parent=35 // pred_check
          %p3252 = pneg %p136
        $region50: #{tpu_custom_call.1} parent=35 // pred_check_branch
          %3254 = sbr.rel (%p3252) target = $region52
        $region51: #{tpu_custom_call.1} parent=35 // pred_region
          %s3256 = ssub.s32 4096, 4096
          %3257 = vsyncadd %s3248, %s3256
          %s3258 = smul.addr %s24, 32
          %s3259 = smul.addr %s3258, 128
          %s3260 = scalar_lea.hbm %s4, %s3259
          %s3261 = sshll.u32 %s3251, 4
          %s3262 = int_to_ptr.vmem [resolvable:$true] %s3261
          %3267 = dma.vmem_to_hbm [thread:$0]  %s3262, 4096, %s3260, %s3248, 128, 128, 8
        $region52: #{tpu_custom_call.1} parent=35 // pred_fallthru
          _
      $region36: #{tpu_custom_call.1} parent=5 // pred_fallthru
        _
      %p3268 = scmp.le.s32.totalorder 2, %s19
      // Predicated region
      $region53: #{tpu_custom_call.1} parent=5 // pred_check
        %p3269 = pneg %p3268
      $region54: #{tpu_custom_call.1} parent=5 // pred_check_branch
        %3271 = sbr.rel (%p3269) target = $region56
      $region55: #{tpu_custom_call.1} parent=5 // pred_region
        %s3272 = ssub.s32 %s19, 2
        // Predicated region
        $region57: #{tpu_custom_call.1} parent=55 // pred_check
          %p3273 = pneg %p142
        $region58: #{tpu_custom_call.1} parent=55 // pred_check_branch
          %3275 = sbr.rel (%p3273) target = $region60
        $region59: #{tpu_custom_call.1} parent=55 // pred_region
          %s3276 = sand.u32 %s127, 1
          %s3277 = scalar_lea.sflag [#allocation4], %s3276
          %s3278 = sand.u32 %s127, 1
          %s3279 = smul.addr %s3278, 256
          %s3280 = scalar_lea.vmem [#allocation8], %s3279
          %3281 = dma.done %s3277, 4096
        $region60: #{tpu_custom_call.1} parent=55 // pred_fallthru
          _
      $region56: #{tpu_custom_call.1} parent=5 // pred_fallthru
        _
    $region6: #{tpu_custom_call.1} parent=1 // loop_footer
      %s23 = sadd.s32 1, %s19
    $region7: #{tpu_custom_call.1} parent=1 // loop_footer_branch
      %18 = sbr.rel target = $region3
    $region8: #{tpu_custom_call.1} parent=1 // loop_exit
      _
    %3282 = vsyncpa [#allocation3], 1
    %s3283 = scalar_lea.sflag [#allocation3], 1
    %3284 = vsyncpa %s3283, 1
    %3285 = vsyncpa [#allocation6], 1
    %s3286 = scalar_lea.sflag [#allocation6], 1
    %3287 = vsyncpa %s3286, 1
    %3288 = vsyncpa [#allocation4], 1
    %s3289 = scalar_lea.sflag [#allocation4], 1
    %3290 = vsyncpa %s3289, 1

</llo_original>
